<compile_context>
chip_gen: v7x
topology: tpu7x:2x2x1
jax: 0.10.0
libtpu: 0.0.40
codegen_flags: <defaults>
</compile_context>

<pallas_src>
import functools
import math

import jax
import jax.numpy as jnp
from jax import lax
from jax.experimental import pallas as pl
from jax.experimental.pallas import tpu as pltpu

VMEM_SPEC = pl.BlockSpec(memory_space=pltpu.MemorySpace.VMEM)
D_SHAPE = 32  # hidden width of pre_gravnet (module constant)


def _elu(x):
    # PyTorch nn.ELU(alpha=1.0).
    return jnp.where(x > 0, x, jnp.exp(x) - 1.0)


def _full_spec(shape):
    """BlockSpec for an operand that stays fully resident (same block every grid step)."""
    nd = len(shape)

    def idx(*_):
        return (0,) * nd

    return pl.BlockSpec(shape, idx)
    # TODO(synk): pipeline_mode=pl.Buffered(1) would avoid double-buffering these
    # constant-index blocks; omitted since the operands here are tiny.


def _pick_tile(n, prefs):
    """Largest preferred tile that divides n (n is always a multiple of 128)."""
    for t in prefs:
        if t <= n and n % t == 0:
            return t
    return n


# ---------------------------------------------------------------------------
# Kernel 1: pre_gravnet MLP (Linear-ELU-Linear-ELU) + fused Q|K|V|G projection,
# tiled over node rows.  The fused projection weight is [32, 128] (zero-padded,
# lane-dense matmul); the result is split + cast IN-KERNEL into separate outputs
# so the wrapper never re-slices / re-casts the slab through HBM.
# ---------------------------------------------------------------------------
def preproj_kernel(h_ref, w1_ref, b1_ref, w2_ref, b2_ref, wqkvg_ref,
                   q_ref, k_ref, v_ref, g_ref, *, d):
    h = h_ref[...].astype(jnp.bfloat16)
    h1 = _elu(jnp.dot(h, w1_ref[...], preferred_element_type=jnp.float32) + b1_ref[...])
    h2 = _elu(jnp.dot(h1.astype(jnp.bfloat16), w2_ref[...],
                      preferred_element_type=jnp.float32) + b2_ref[...])
    slab = jnp.dot(h2.astype(jnp.bfloat16), wqkvg_ref[...],
                   preferred_element_type=jnp.float32)              # [tr, 128]
    q_ref[...] = slab[:, 0:d].astype(jnp.bfloat16)
    k_ref[...] = slab[:, d:2 * d].astype(jnp.bfloat16)
    v_ref[...] = slab[:, 2 * d:3 * d].astype(jnp.bfloat16)
    g_ref[...] = slab[:, 3 * d:3 * d + 3]                           # f32 coords


def preproj(h, w1, b1, w2, b2, wqkvg, *, out_dim, block_rows=512):
    n_pad, in_dim = h.shape
    d = out_dim
    tr = _pick_tile(n_pad, (block_rows, 256, 128))
    grid = (n_pad // tr,)
    kern = functools.partial(preproj_kernel, d=d)
    row_spec = pl.BlockSpec((tr, d), lambda i: (i, 0))
    return pl.pallas_call(
        kern,
        out_shape=(
            jax.ShapeDtypeStruct((n_pad, d), jnp.bfloat16),   # Q  (bf16 once, here)
            jax.ShapeDtypeStruct((n_pad, d), jnp.bfloat16),   # K
            jax.ShapeDtypeStruct((n_pad, d), jnp.bfloat16),   # V
            jax.ShapeDtypeStruct((n_pad, 3), jnp.float32),    # G coords (f32)
        ),
        grid=grid,
        in_specs=[
            pl.BlockSpec((tr, in_dim), lambda i: (i, 0)),
            _full_spec(w1.shape), _full_spec(b1.shape),
            _full_spec(w2.shape), _full_spec(b2.shape),
            _full_spec(wqkvg.shape),
        ],
        out_specs=[row_spec, row_spec, row_spec,
                   pl.BlockSpec((tr, 3), lambda i: (i, 0))],
        compiler_params=pltpu.CompilerParams(dimension_semantics=("parallel",)),
    )(h, w1, b1, w2, b2, wqkvg)


# ---------------------------------------------------------------------------
# Kernel 2: relative-position graph attention, 2-D grid (query tiles x kv tiles).
#   score_e[i,j]  = exp(clamp((K_j . Q_i)/sqrt(d), -5, 5))
#   distance[i,j] = exp(max(-sqrt(||G_j - G_i||^2 + 1e-6)/sqrt(d), -5))
#   ms[i,j]       = score_e where d2[i,j] <= thr[i] else 0     (kNN mask, in-kernel)
#   wV[i] = sum_j ms*distance*V_j ;  z[i] = sum_j ms
#   attn[i] = wV[i]/z[i] where z>0 else wV[i] ;  out[i] = attn[i] @ Wo + bo   (fused O)
# wV/z accumulate in VMEM scratch across the kv axis ("arbitrary"); query axis is
# "parallel" (megacore sharding on v7x).
# ---------------------------------------------------------------------------
def attn_kernel(q_ref, kT_ref, v_ref, g_ref, gT_ref, thr_ref, wo_ref, bo_ref,
                out_ref, wv_acc, z_acc, *, inv_scale):
    kv = pl.program_id(1)

    @pl.when(kv == 0)
    def _():
        wv_acc[...] = jnp.zeros_like(wv_acc)
        z_acc[...] = jnp.zeros_like(z_acc)

    # Scores on the MXU: bf16 operands (pre-cast once in preproj), f32 accumulation.
    s = jnp.dot(q_ref[...], kT_ref[...], preferred_element_type=jnp.float32)   # [tq, tk]
    score_e = jnp.exp(jnp.clip(s * inv_scale, -5.0, 5.0))

    # Pairwise squared distances in the learned 3-D coordinate space (f32, same
    # diff^2 form and summation order as knn_threshold()).
    g = g_ref[...]            # [tq, 3] query coords
    gt = gT_ref[...]          # [3, tk] key coords (lane-dense)
    diff = g[:, 0:1] - gt[0:1, :]
    d2 = diff * diff
    for c in range(1, 3):
        diff = g[:, c:c + 1] - gt[c:c + 1, :]
        d2 = d2 + diff * diff
    # clamp upper bound is never active (argument <= 0) -> one-sided maximum.
    distance = jnp.exp(jnp.maximum(jnp.sqrt(d2 + 1e-6) * (-inv_scale), -5.0))

    # kNN mask fused into the select (no separate mask array, no extra multiply).
    ms = jnp.where(d2 <= thr_ref[...], score_e, 0.0)
    w = ms * distance

    wv_acc[...] += jnp.dot(w.astype(jnp.bfloat16), v_ref[...],
                           preferred_element_type=jnp.float32)                 # [tq, d]
    z_acc[...] += jnp.sum(ms, axis=-1, keepdims=True)                          # [tq, 1]

    @pl.when(kv == pl.num_programs(1) - 1)
    def _():
        z = z_acc[...]
        denom = jnp.where(z > 0, z, 1.0)
        attn = jnp.where(z > 0, wv_acc[...] / denom, wv_acc[...])
        # Fused O projection epilogue: saves one [N, d] HBM round trip + a launch.
        out_ref[...] = jnp.dot(attn.astype(jnp.bfloat16), wo_ref[...],
                               preferred_element_type=jnp.float32) + bo_ref[...]


def attention(q, kT, v, g, gT, thr, wo, bo, *, head_dim,
              block_q=128, kv_tile_prefs=(1024, 512, 256, 128)):
    # kv tile guidance: ~1024-2048 on v6e, 512-1024 on v7x, 256-512 on v5e.
    n_pad, d = q.shape
    tq = _pick_tile(n_pad, (block_q, 128))
    tk = _pick_tile(n_pad, kv_tile_prefs)
    inv_scale = 1.0 / math.sqrt(float(head_dim))
    kern = functools.partial(attn_kernel, inv_scale=inv_scale)

    # VMEM budget from the actual block sizes, capped at 48 MiB (v7x physical VMEM is
    # 64 MiB per TensorCore; v5e/v6e have 128 MiB).  Never below the 32 MiB default.
    tmp_bytes = 10 * tq * tk * 4
    io_bytes = 2 * (tq * d * 2 + d * tk * 2 + tk * d * 2 + tq * 3 * 4
                    + 3 * tk * 4 + tq * 4 + tq * d * 4)
    vmem_limit = int(min(48 * 1024 * 1024,
                         max(32 * 1024 * 1024, tmp_bytes + io_bytes + (4 << 20))))

    return pl.pallas_call(
        kern,
        out_shape=jax.ShapeDtypeStruct((n_pad, d), jnp.float32),
        grid=(n_pad // tq, n_pad // tk),                    # kv (reduction) axis last
        in_specs=[
            pl.BlockSpec((tq, d), lambda i, kv: (i, 0)),    # Q tile (bf16)
            pl.BlockSpec((d, tk), lambda i, kv: (0, kv)),   # K^T tile (bf16, lane-dense)
            pl.BlockSpec((tk, d), lambda i, kv: (kv, 0)),   # V tile (bf16)
            pl.BlockSpec((tq, 3), lambda i, kv: (i, 0)),    # query coords (f32)
            pl.BlockSpec((3, tk), lambda i, kv: (0, kv)),   # key coords (f32)
            pl.BlockSpec((tq, 1), lambda i, kv: (i, 0)),    # k-th-distance threshold
            _full_spec(wo.shape),                           # O weight (bf16, resident)
            _full_spec(bo.shape),                           # O bias (f32, resident)
        ],
        out_specs=pl.BlockSpec((tq, d), lambda i, kv: (i, 0)),
        scratch_shapes=[pltpu.VMEM((tq, d), jnp.float32),   # wV accumulator
                        pltpu.VMEM((tq, 1), jnp.float32)],  # z accumulator
        compiler_params=pltpu.CompilerParams(
            dimension_semantics=("parallel", "arbitrary"),
            vmem_limit_bytes=vmem_limit,
        ),
    )(q, kT, v, g, gT, thr, wo, bo)
    # TODO(synk): for very large N / small neigh, switch to a scalar-prefetched per-row
    # neighbour-index gather so the exp work scales with N*k instead of N^2.


# ---------------------------------------------------------------------------
# Kernel 3: BatchNorm1d + FFN (Linear-ReLU-Linear) + BatchNorm1d.
# Single block; padded rows are excluded from the batch statistics via a row mask.
# ---------------------------------------------------------------------------
def post_kernel(h_ref, g1_ref, be1_ref, wf1_ref, bf1_ref, wf2_ref, bf2_ref,
                g2_ref, be2_ref, out_ref, *, n_valid):
    eps = 1e-5
    rows = h_ref.shape[0]
    inv_n = 1.0 / float(n_valid)
    valid = (lax.broadcasted_iota(jnp.int32, (rows, 1), 0) < n_valid
             ).astype(jnp.float32)                                    # [rows, 1]

    h = h_ref[...]
    mu = jnp.sum(h * valid, axis=0, keepdims=True) * inv_n
    xc = h - mu
    var = jnp.sum(xc * xc * valid, axis=0, keepdims=True) * inv_n
    hn = xc * lax.rsqrt(var + eps) * g1_ref[...] + be1_ref[...]

    h2 = jnp.maximum(
        jnp.dot(hn.astype(jnp.bfloat16), wf1_ref[...],
                preferred_element_type=jnp.float32) + bf1_ref[...], 0.0)
    h3 = jnp.dot(h2.astype(jnp.bfloat16), wf2_ref[...],
                 preferred_element_type=jnp.float32) + bf2_ref[...]

    mu2 = jnp.sum(h3 * valid, axis=0, keepdims=True) * inv_n
    xc2 = h3 - mu2
    var2 = jnp.sum(xc2 * xc2 * valid, axis=0, keepdims=True) * inv_n
    out_ref[...] = xc2 * lax.rsqrt(var2 + eps) * g2_ref[...] + be2_ref[...]


def post(h_attn, params, *, n_valid):
    n_pad, d = h_attn.shape
    kern = functools.partial(post_kernel, n_valid=n_valid)
    # TODO(synk): for very large N (v7x), tile over rows with a multi-pass BatchNorm
    # (sum/sumsq accumulation over an "arbitrary" grid axis, then normalize passes).
    return pl.pallas_call(
        kern,
        out_shape=jax.ShapeDtypeStruct((n_pad, d), jnp.float32),
        in_specs=[VMEM_SPEC] * 9,
        out_specs=VMEM_SPEC,
        compiler_params=pltpu.CompilerParams(vmem_limit_bytes=48 * 1024 * 1024),
    )(h_attn, params["bn1_g"], params["bn1_b"],
      params["Wf1"].astype(jnp.bfloat16), params["bf1"],
      params["Wf2"].astype(jnp.bfloat16), params["bf2"],
      params["bn2_g"], params["bn2_b"])


# ---------------------------------------------------------------------------
# Glue: kNN graph construction over the learned 3-D coordinates (valid rows only).
# Uses the exact same diff^2 formulation / summation order as attn_kernel so the
# in-kernel mask (d2 <= thr) reproduces the same neighbour selection; the threshold
# is the midpoint between the k-th and (k+1)-th smallest squared distance.
# ---------------------------------------------------------------------------
def knn_threshold(g_coords, k):
    n = g_coords.shape[0]
    diff = g_coords[:, 0:1] - g_coords[:, 0][None, :]
    d2 = diff * diff
    for c in range(1, 3):
        diff = g_coords[:, c:c + 1] - g_coords[:, c][None, :]
        d2 = d2 + diff * diff
    kk = min(k + 1, n)
    smallest = -lax.top_k(-d2, kk)[0]                     # ascending, [n, kk]
    if k < n:
        # TODO(synk): exact ties at the k-th distance admit all tied neighbours
        # (dgl.knn_graph would pick exactly k).
        thr = 0.5 * (smallest[:, k - 1] + smallest[:, k])
    else:
        thr = smallest[:, -1] + 1e-3                      # k >= n: keep every neighbour
    return thr[:, None]


# ---------------------------------------------------------------------------
# Full forward (num_heads == 1)
# ---------------------------------------------------------------------------
@functools.partial(jax.jit, static_argnames=("neigh", "out_dim"))
def graph_transformer_layer(h, params, *, neigh, out_dim):
    d = out_dim
    n = h.shape[0]
    n_pad = ((n + 127) // 128) * 128
    h_p = jnp.pad(h, ((0, n_pad - n), (0, 0))) if n_pad != n else h

    # Fused lane-dense Q|K|V|G projection weight (zero-padded to 128 lanes), bf16.
    wqkvg = jnp.concatenate(
        [params["Wq"], params["Wk"], params["Wv"], params["Wg"]], axis=1)
    p_cols = ((wqkvg.shape[1] + 127) // 128) * 128
    wqkvg = jnp.pad(wqkvg, ((0, 0), (0, p_cols - wqkvg.shape[1]))).astype(jnp.bfloat16)

    q, k, v, g = preproj(
        h_p,
        params["W1"].astype(jnp.bfloat16), params["b1"],
        params["W2"].astype(jnp.bfloat16), params["b2"],
        wqkvg, out_dim=d)

    # Graph construction glue (kNN over the learned coordinates of the valid rows).
    thr = knn_threshold(g[:n], neigh)
    if n_pad != n:
        # Padded key rows -> huge coordinate (killed by d2 > thr in-kernel);
        # padded query rows -> thr = -1 (everything masked; output row discarded).
        row_valid = (jnp.arange(n_pad) < n)[:, None]
        g = jnp.where(row_valid, g, jnp.float32(1e6))
        thr = jnp.concatenate(
            [thr, jnp.full((n_pad - n, 1), -1.0, jnp.float32)], axis=0)

    # K pre-transposed once (lane-dense [d, N] MXU operand inside the kernel).
    h_attn = attention(q, k.T, v, g, g.T, thr,
                       params["Wo"].astype(jnp.bfloat16), params["bo"],
                       head_dim=d)
    out = post(h_attn, params, n_valid=n)
    return out[:n]


# ---------------------------------------------------------------------------
# Deterministic parameter init (PyTorch-Linear-style uniform(+-1/sqrt(fan_in)))
# ---------------------------------------------------------------------------
def init_params(key, in_dim, out_dim, d_shape=D_SHAPE):
    keys = jax.random.split(key, 16)

    def lin(k, fan_in, fan_out, bias=True):
        bound = 1.0 / math.sqrt(fan_in)
        w = jax.random.uniform(k, (fan_in, fan_out), jnp.float32, -bound, bound)
        b = (jax.random.uniform(jax.random.fold_in(k, 1), (1, fan_out),
                                jnp.float32, -bound, bound) if bias
             else jnp.zeros((1, fan_out), jnp.float32))
        return w, b

    p = {}
    p["W1"], p["b1"] = lin(keys[0], in_dim, d_shape)            # pre_gravnet[0]
    p["W2"], p["b2"] = lin(keys[1], d_shape, d_shape)           # pre_gravnet[2]
    p["Wq"], _ = lin(keys[2], d_shape, out_dim, bias=False)     # attention.Q (no bias)
    p["Wk"], _ = lin(keys[3], d_shape, out_dim, bias=False)     # attention.K
    p["Wv"], _ = lin(keys[4], d_shape, out_dim, bias=False)     # attention.V
    p["Wg"], _ = lin(keys[5], d_shape, 3, bias=False)           # attention.G (heads=1)
    p["Wo"], p["bo"] = lin(keys[6], out_dim, out_dim)           # O
    p["Wf1"], p["bf1"] = lin(keys[7], out_dim, 2 * out_dim)     # FFN_layer1
    p["Wf2"], p["bf2"] = lin(keys[8], 2 * out_dim, out_dim)     # FFN_layer2
    p["bn1_g"] = jnp.ones((1, out_dim), jnp.float32)
    p["bn1_b"] = jnp.zeros((1, out_dim), jnp.float32)
    p["bn2_g"] = jnp.ones((1, out_dim), jnp.float32)
    p["bn2_b"] = jnp.zeros((1, out_dim), jnp.float32)
    return p


if __name__ == "__main__":
    # N=300 is deliberately NOT a multiple of 128: exercises the padding + in-kernel
    # masking path and a multi-tile (query, kv) attention grid.
    N, in_dim, out_dim, neigh = 300, 16, 32, 8
    key = jax.random.PRNGKey(0)
    h = jax.random.normal(key, (N, in_dim), dtype=jnp.float32)
    params = init_params(jax.random.PRNGKey(42), in_dim, out_dim)

    out = graph_transformer_layer(h, params, neigh=neigh, out_dim=out_dim)
    out = jax.block_until_ready(out)
    assert out.shape == (N, out_dim)
    assert bool(jnp.all(jnp.isfinite(out)))
    print("KERNEL_OK")
</pallas_src>

<mosaic_0001>
module attributes {stable_mosaic.version = 11 : i64} {
  func.func @preproj_kernel(%arg0: i32, %arg1: memref<128x16xf32, #tpu.memory_space<vmem>>, %arg2: memref<16x32xbf16, #tpu.memory_space<vmem>>, %arg3: memref<1x32xf32, #tpu.memory_space<vmem>>, %arg4: memref<32x32xbf16, #tpu.memory_space<vmem>>, %arg5: memref<1x32xf32, #tpu.memory_space<vmem>>, %arg6: memref<32x128xbf16, #tpu.memory_space<vmem>>, %arg7: memref<128x32xbf16, #tpu.memory_space<vmem>>, %arg8: memref<128x32xbf16, #tpu.memory_space<vmem>>, %arg9: memref<128x32xbf16, #tpu.memory_space<vmem>>, %arg10: memref<128x3xf32, #tpu.memory_space<vmem>>) attributes {dimension_semantics = [#tpu.dimension_semantics<parallel>], iteration_bounds = array<i64: 3>, scalar_prefetch = 0 : i64, scratch_operands = 0 : i64, tpu.core_type = #tpu.core_type<tc>, window_params = [{transform_indices = @transform_0, window_bounds = array<i64: 128, 16>}, {pipeline_mode = #tpu.pipeline_mode<synchronous>, transform_indices = @transform_1, window_bounds = array<i64: 16, 32>}, {pipeline_mode = #tpu.pipeline_mode<synchronous>, transform_indices = @transform_2, window_bounds = array<i64: 1, 32>}, {pipeline_mode = #tpu.pipeline_mode<synchronous>, transform_indices = @transform_3, window_bounds = array<i64: 32, 32>}, {pipeline_mode = #tpu.pipeline_mode<synchronous>, transform_indices = @transform_4, window_bounds = array<i64: 1, 32>}, {pipeline_mode = #tpu.pipeline_mode<synchronous>, transform_indices = @transform_5, window_bounds = array<i64: 32, 128>}, {transform_indices = @transform_6, window_bounds = array<i64: 128, 32>}, {transform_indices = @transform_7, window_bounds = array<i64: 128, 32>}, {transform_indices = @transform_8, window_bounds = array<i64: 128, 32>}, {transform_indices = @transform_9, window_bounds = array<i64: 128, 3>}]} {
    %c0 = arith.constant 0 : index
    %c0_0 = arith.constant 0 : index
    %0 = vector.load %arg1[%c0, %c0_0] : memref<128x16xf32, #tpu.memory_space<vmem>>, vector<128x16xf32>
    %1 = arith.truncf %0 : vector<128x16xf32> to vector<128x16xbf16>
    %c0_1 = arith.constant 0 : index
    %c0_2 = arith.constant 0 : index
    %2 = vector.load %arg2[%c0_1, %c0_2] : memref<16x32xbf16, #tpu.memory_space<vmem>>, vector<16x32xbf16>
    %cst = arith.constant dense<0.000000e+00> : vector<128x32xf32>
    %3 = tpu.matmul %1, %2, %cst {dimension_numbers = #tpu.dot_dimension_numbers<[1], [0], [0], [1], [0, 0, 1, 1], [], []>} : vector<128x16xbf16>, vector<16x32xbf16>, vector<128x32xf32> -> vector<128x32xf32>
    %c0_3 = arith.constant 0 : index
    %c0_4 = arith.constant 0 : index
    %4 = vector.load %arg3[%c0_3, %c0_4] : memref<1x32xf32, #tpu.memory_space<vmem>>, vector<1x32xf32>
    %5 = vector.broadcast %4 : vector<1x32xf32> to vector<128x32xf32>
    %6 = arith.addf %3, %5 : vector<128x32xf32>
    %cst_5 = arith.constant 0.000000e+00 : f32
    %7 = vector.broadcast %cst_5 : f32 to vector<128x32xf32>
    %8 = arith.cmpf ogt, %6, %7 : vector<128x32xf32>
    %9 = math.exp %6 : vector<128x32xf32>
    %cst_6 = arith.constant 1.000000e+00 : f32
    %10 = vector.broadcast %cst_6 : f32 to vector<128x32xf32>
    %11 = arith.subf %9, %10 : vector<128x32xf32>
    %12 = arith.select %8, %6, %11 : vector<128x32xi1>, vector<128x32xf32>
    %13 = arith.truncf %12 : vector<128x32xf32> to vector<128x32xbf16>
    %c0_7 = arith.constant 0 : index
    %c0_8 = arith.constant 0 : index
    %14 = vector.load %arg4[%c0_7, %c0_8] : memref<32x32xbf16, #tpu.memory_space<vmem>>, vector<32x32xbf16>
    %cst_9 = arith.constant dense<0.000000e+00> : vector<128x32xf32>
    %15 = tpu.matmul %13, %14, %cst_9 {dimension_numbers = #tpu.dot_dimension_numbers<[1], [0], [0], [1], [0, 0, 1, 1], [], []>} : vector<128x32xbf16>, vector<32x32xbf16>, vector<128x32xf32> -> vector<128x32xf32>
    %c0_10 = arith.constant 0 : index
    %c0_11 = arith.constant 0 : index
    %16 = vector.load %arg5[%c0_10, %c0_11] : memref<1x32xf32, #tpu.memory_space<vmem>>, vector<1x32xf32>
    %17 = vector.broadcast %16 : vector<1x32xf32> to vector<128x32xf32>
    %18 = arith.addf %15, %17 : vector<128x32xf32>
    %cst_12 = arith.constant 0.000000e+00 : f32
    %19 = vector.broadcast %cst_12 : f32 to vector<128x32xf32>
    %20 = arith.cmpf ogt, %18, %19 : vector<128x32xf32>
    %21 = math.exp %18 : vector<128x32xf32>
    %cst_13 = arith.constant 1.000000e+00 : f32
    %22 = vector.broadcast %cst_13 : f32 to vector<128x32xf32>
    %23 = arith.subf %21, %22 : vector<128x32xf32>
    %24 = arith.select %20, %18, %23 : vector<128x32xi1>, vector<128x32xf32>
    %25 = arith.truncf %24 : vector<128x32xf32> to vector<128x32xbf16>
    %c0_14 = arith.constant 0 : index
    %c0_15 = arith.constant 0 : index
    %26 = vector.load %arg6[%c0_14, %c0_15] : memref<32x128xbf16, #tpu.memory_space<vmem>>, vector<32x128xbf16>
    %cst_16 = arith.constant dense<0.000000e+00> : vector<128x128xf32>
    %27 = tpu.matmul %25, %26, %cst_16 {dimension_numbers = #tpu.dot_dimension_numbers<[1], [0], [0], [1], [0, 0, 1, 1], [], []>} : vector<128x32xbf16>, vector<32x128xbf16>, vector<128x128xf32> -> vector<128x128xf32>
    %28 = vector.extract_strided_slice %27 {offsets = [0, 0], sizes = [128, 32], strides = [1, 1]} : vector<128x128xf32> to vector<128x32xf32>
    %29 = arith.truncf %28 : vector<128x32xf32> to vector<128x32xbf16>
    %c0_17 = arith.constant 0 : index
    %c0_18 = arith.constant 0 : index
    %30 = vector.load %arg7[%c0_17, %c0_18] : memref<128x32xbf16, #tpu.memory_space<vmem>>, vector<128x32xbf16>
    tpu.vector_store %arg7[%c0_17, %c0_18], %29 {strides = array<i32>} : memref<128x32xbf16, #tpu.memory_space<vmem>>, vector<128x32xbf16>,
    %31 = vector.extract_strided_slice %27 {offsets = [0, 32], sizes = [128, 32], strides = [1, 1]} : vector<128x128xf32> to vector<128x32xf32>
    %32 = arith.truncf %31 : vector<128x32xf32> to vector<128x32xbf16>
    %c0_19 = arith.constant 0 : index
    %c0_20 = arith.constant 0 : index
    %33 = vector.load %arg8[%c0_19, %c0_20] : memref<128x32xbf16, #tpu.memory_space<vmem>>, vector<128x32xbf16>
    tpu.vector_store %arg8[%c0_19, %c0_20], %32 {strides = array<i32>} : memref<128x32xbf16, #tpu.memory_space<vmem>>, vector<128x32xbf16>,
    %34 = vector.extract_strided_slice %27 {offsets = [0, 64], sizes = [128, 32], strides = [1, 1]} : vector<128x128xf32> to vector<128x32xf32>
    %35 = arith.truncf %34 : vector<128x32xf32> to vector<128x32xbf16>
    %c0_21 = arith.constant 0 : index
    %c0_22 = arith.constant 0 : index
    %36 = vector.load %arg9[%c0_21, %c0_22] : memref<128x32xbf16, #tpu.memory_space<vmem>>, vector<128x32xbf16>
    tpu.vector_store %arg9[%c0_21, %c0_22], %35 {strides = array<i32>} : memref<128x32xbf16, #tpu.memory_space<vmem>>, vector<128x32xbf16>,
    %37 = vector.extract_strided_slice %27 {offsets = [0, 96], sizes = [128, 3], strides = [1, 1]} : vector<128x128xf32> to vector<128x3xf32>
    %c0_23 = arith.constant 0 : index
    %c0_24 = arith.constant 0 : index
    %38 = vector.load %arg10[%c0_23, %c0_24] : memref<128x3xf32, #tpu.memory_space<vmem>>, vector<128x3xf32>
    tpu.vector_store %arg10[%c0_23, %c0_24], %37 {strides = array<i32>} : memref<128x3xf32, #tpu.memory_space<vmem>>, vector<128x3xf32>,
    return
  }
  func.func @transform_0(%arg0: i32) -> (i32, i32) {
    %c0_i32 = arith.constant 0 : i32
    %c0_i32_0 = arith.constant 0 : i32
    return %arg0, %c0_i32 : i32, i32
  }
  func.func @transform_1(%arg0: i32) -> (i32, i32) {
    %c0_i32 = arith.constant 0 : i32
    %c0_i32_0 = arith.constant 0 : i32
    %c0_i32_1 = arith.constant 0 : i32
    return %c0_i32, %c0_i32_0 : i32, i32
  }
  func.func @transform_2(%arg0: i32) -> (i32, i32) {
    %c0_i32 = arith.constant 0 : i32
    %c0_i32_0 = arith.constant 0 : i32
    %c0_i32_1 = arith.constant 0 : i32
    return %c0_i32, %c0_i32_0 : i32, i32
  }
  func.func @transform_3(%arg0: i32) -> (i32, i32) {
    %c0_i32 = arith.constant 0 : i32
    %c0_i32_0 = arith.constant 0 : i32
    %c0_i32_1 = arith.constant 0 : i32
    return %c0_i32, %c0_i32_0 : i32, i32
  }
  func.func @transform_4(%arg0: i32) -> (i32, i32) {
    %c0_i32 = arith.constant 0 : i32
    %c0_i32_0 = arith.constant 0 : i32
    %c0_i32_1 = arith.constant 0 : i32
    return %c0_i32, %c0_i32_0 : i32, i32
  }
  func.func @transform_5(%arg0: i32) -> (i32, i32) {
    %c0_i32 = arith.constant 0 : i32
    %c0_i32_0 = arith.constant 0 : i32
    %c0_i32_1 = arith.constant 0 : i32
    return %c0_i32, %c0_i32_0 : i32, i32
  }
  func.func @transform_6(%arg0: i32) -> (i32, i32) {
    %c0_i32 = arith.constant 0 : i32
    %c0_i32_0 = arith.constant 0 : i32
    return %arg0, %c0_i32 : i32, i32
  }
  func.func @transform_7(%arg0: i32) -> (i32, i32) {
    %c0_i32 = arith.constant 0 : i32
    %c0_i32_0 = arith.constant 0 : i32
    return %arg0, %c0_i32 : i32, i32
  }
  func.func @transform_8(%arg0: i32) -> (i32, i32) {
    %c0_i32 = arith.constant 0 : i32
    %c0_i32_0 = arith.constant 0 : i32
    return %arg0, %c0_i32 : i32, i32
  }
  func.func @transform_9(%arg0: i32) -> (i32, i32) {
    %c0_i32 = arith.constant 0 : i32
    %c0_i32_0 = arith.constant 0 : i32
    return %arg0, %c0_i32 : i32, i32
  }
}

module attributes {stable_mosaic.version = 11 : i64} {
  func.func @post_kernel(%arg0: memref<384x32xf32, #tpu.memory_space<vmem>>, %arg1: memref<1x32xf32, #tpu.memory_space<vmem>>, %arg2: memref<1x32xf32, #tpu.memory_space<vmem>>, %arg3: memref<32x64xbf16, #tpu.memory_space<vmem>>, %arg4: memref<1x64xf32, #tpu.memory_space<vmem>>, %arg5: memref<64x32xbf16, #tpu.memory_space<vmem>>, %arg6: memref<1x32xf32, #tpu.memory_space<vmem>>, %arg7: memref<1x32xf32, #tpu.memory_space<vmem>>, %arg8: memref<1x32xf32, #tpu.memory_space<vmem>>, %arg9: memref<384x32xf32, #tpu.memory_space<vmem>>) attributes {dimension_semantics = [], scalar_prefetch = 0 : i64, scratch_operands = 0 : i64, tpu.core_type = #tpu.core_type<tc>} {
    %0 = tpu.iota {dimensions = array<i32: 0>} : vector<384x1xi32>
    %c300_i32 = arith.constant 300 : i32
    %1 = vector.broadcast %c300_i32 : i32 to vector<384x1xi32>
    %2 = arith.cmpi slt, %0, %1 : vector<384x1xi32>
    %3 = arith.extui %2 : vector<384x1xi1> to vector<384x1xi32>
    %4 = arith.sitofp %3 : vector<384x1xi32> to vector<384x1xf32>
    %c0 = arith.constant 0 : index
    %c0_0 = arith.constant 0 : index
    %5 = vector.load %arg0[%c0, %c0_0] : memref<384x32xf32, #tpu.memory_space<vmem>>, vector<384x32xf32>
    %6 = vector.broadcast %4 : vector<384x1xf32> to vector<384x32xf32>
    %7 = arith.mulf %5, %6 : vector<384x32xf32>
    %cst = arith.constant dense<0.000000e+00> : vector<32xf32>
    %8 = vector.multi_reduction <add>, %7, %cst [0] : vector<384x32xf32> to vector<32xf32>
    %9 = vector.shape_cast %8 : vector<32xf32> to vector<1x32xf32>
    %cst_1 = arith.constant 0.00333333341 : f32
    %10 = vector.broadcast %cst_1 : f32 to vector<1x32xf32>
    %11 = arith.mulf %9, %10 : vector<1x32xf32>
    %12 = vector.broadcast %11 : vector<1x32xf32> to vector<384x32xf32>
    %13 = arith.subf %5, %12 : vector<384x32xf32>
    %14 = arith.mulf %13, %13 : vector<384x32xf32>
    %15 = vector.broadcast %4 : vector<384x1xf32> to vector<384x32xf32>
    %16 = arith.mulf %14, %15 : vector<384x32xf32>
    %cst_2 = arith.constant dense<0.000000e+00> : vector<32xf32>
    %17 = vector.multi_reduction <add>, %16, %cst_2 [0] : vector<384x32xf32> to vector<32xf32>
    %18 = vector.shape_cast %17 : vector<32xf32> to vector<1x32xf32>
    %cst_3 = arith.constant 0.00333333341 : f32
    %19 = vector.broadcast %cst_3 : f32 to vector<1x32xf32>
    %20 = arith.mulf %18, %19 : vector<1x32xf32>
    %cst_4 = arith.constant 9.99999974E-6 : f32
    %21 = vector.broadcast %cst_4 : f32 to vector<1x32xf32>
    %22 = arith.addf %20, %21 : vector<1x32xf32>
    %23 = math.rsqrt %22 : vector<1x32xf32>
    %24 = vector.broadcast %23 : vector<1x32xf32> to vector<384x32xf32>
    %25 = arith.mulf %13, %24 : vector<384x32xf32>
    %c0_5 = arith.constant 0 : index
    %c0_6 = arith.constant 0 : index
    %26 = vector.load %arg1[%c0_5, %c0_6] : memref<1x32xf32, #tpu.memory_space<vmem>>, vector<1x32xf32>
    %27 = vector.broadcast %26 : vector<1x32xf32> to vector<384x32xf32>
    %28 = arith.mulf %25, %27 : vector<384x32xf32>
    %c0_7 = arith.constant 0 : index
    %c0_8 = arith.constant 0 : index
    %29 = vector.load %arg2[%c0_7, %c0_8] : memref<1x32xf32, #tpu.memory_space<vmem>>, vector<1x32xf32>
    %30 = vector.broadcast %29 : vector<1x32xf32> to vector<384x32xf32>
    %31 = arith.addf %28, %30 : vector<384x32xf32>
    %32 = arith.truncf %31 : vector<384x32xf32> to vector<384x32xbf16>
    %c0_9 = arith.constant 0 : index
    %c0_10 = arith.constant 0 : index
    %33 = vector.load %arg3[%c0_9, %c0_10] : memref<32x64xbf16, #tpu.memory_space<vmem>>, vector<32x64xbf16>
    %cst_11 = arith.constant dense<0.000000e+00> : vector<384x64xf32>
    %34 = tpu.matmul %32, %33, %cst_11 {dimension_numbers = #tpu.dot_dimension_numbers<[1], [0], [0], [1], [0, 0, 1, 1], [], []>} : vector<384x32xbf16>, vector<32x64xbf16>, vector<384x64xf32> -> vector<384x64xf32>
    %c0_12 = arith.constant 0 : index
    %c0_13 = arith.constant 0 : index
    %35 = vector.load %arg4[%c0_12, %c0_13] : memref<1x64xf32, #tpu.memory_space<vmem>>, vector<1x64xf32>
    %36 = vector.broadcast %35 : vector<1x64xf32> to vector<384x64xf32>
    %37 = arith.addf %34, %36 : vector<384x64xf32>
    %cst_14 = arith.constant 0.000000e+00 : f32
    %38 = vector.broadcast %cst_14 : f32 to vector<384x64xf32>
    %39 = arith.maximumf %37, %38 : vector<384x64xf32>
    %40 = arith.truncf %39 : vector<384x64xf32> to vector<384x64xbf16>
    %c0_15 = arith.constant 0 : index
    %c0_16 = arith.constant 0 : index
    %41 = vector.load %arg5[%c0_15, %c0_16] : memref<64x32xbf16, #tpu.memory_space<vmem>>, vector<64x32xbf16>
    %cst_17 = arith.constant dense<0.000000e+00> : vector<384x32xf32>
    %42 = tpu.matmul %40, %41, %cst_17 {dimension_numbers = #tpu.dot_dimension_numbers<[1], [0], [0], [1], [0, 0, 1, 1], [], []>} : vector<384x64xbf16>, vector<64x32xbf16>, vector<384x32xf32> -> vector<384x32xf32>
    %c0_18 = arith.constant 0 : index
    %c0_19 = arith.constant 0 : index
    %43 = vector.load %arg6[%c0_18, %c0_19] : memref<1x32xf32, #tpu.memory_space<vmem>>, vector<1x32xf32>
    %44 = vector.broadcast %43 : vector<1x32xf32> to vector<384x32xf32>
    %45 = arith.addf %42, %44 : vector<384x32xf32>
    %46 = vector.broadcast %4 : vector<384x1xf32> to vector<384x32xf32>
    %47 = arith.mulf %45, %46 : vector<384x32xf32>
    %cst_20 = arith.constant dense<0.000000e+00> : vector<32xf32>
    %48 = vector.multi_reduction <add>, %47, %cst_20 [0] : vector<384x32xf32> to vector<32xf32>
    %49 = vector.shape_cast %48 : vector<32xf32> to vector<1x32xf32>
    %cst_21 = arith.constant 0.00333333341 : f32
    %50 = vector.broadcast %cst_21 : f32 to vector<1x32xf32>
    %51 = arith.mulf %49, %50 : vector<1x32xf32>
    %52 = vector.broadcast %51 : vector<1x32xf32> to vector<384x32xf32>
    %53 = arith.subf %45, %52 : vector<384x32xf32>
    %54 = arith.mulf %53, %53 : vector<384x32xf32>
    %55 = vector.broadcast %4 : vector<384x1xf32> to vector<384x32xf32>
    %56 = arith.mulf %54, %55 : vector<384x32xf32>
    %cst_22 = arith.constant dense<0.000000e+00> : vector<32xf32>
    %57 = vector.multi_reduction <add>, %56, %cst_22 [0] : vector<384x32xf32> to vector<32xf32>
    %58 = vector.shape_cast %57 : vector<32xf32> to vector<1x32xf32>
    %cst_23 = arith.constant 0.00333333341 : f32
    %59 = vector.broadcast %cst_23 : f32 to vector<1x32xf32>
    %60 = arith.mulf %58, %59 : vector<1x32xf32>
    %cst_24 = arith.constant 9.99999974E-6 : f32
    %61 = vector.broadcast %cst_24 : f32 to vector<1x32xf32>
    %62 = arith.addf %60, %61 : vector<1x32xf32>
    %63 = math.rsqrt %62 : vector<1x32xf32>
    %64 = vector.broadcast %63 : vector<1x32xf32> to vector<384x32xf32>
    %65 = arith.mulf %53, %64 : vector<384x32xf32>
    %c0_25 = arith.constant 0 : index
    %c0_26 = arith.constant 0 : index
    %66 = vector.load %arg7[%c0_25, %c0_26] : memref<1x32xf32, #tpu.memory_space<vmem>>, vector<1x32xf32>
    %67 = vector.broadcast %66 : vector<1x32xf32> to vector<384x32xf32>
    %68 = arith.mulf %65, %67 : vector<384x32xf32>
    %c0_27 = arith.constant 0 : index
    %c0_28 = arith.constant 0 : index
    %69 = vector.load %arg8[%c0_27, %c0_28] : memref<1x32xf32, #tpu.memory_space<vmem>>, vector<1x32xf32>
    %70 = vector.broadcast %69 : vector<1x32xf32> to vector<384x32xf32>
    %71 = arith.addf %68, %70 : vector<384x32xf32>
    %c0_29 = arith.constant 0 : index
    %c0_30 = arith.constant 0 : index
    %72 = vector.load %arg9[%c0_29, %c0_30] : memref<384x32xf32, #tpu.memory_space<vmem>>, vector<384x32xf32>
    tpu.vector_store %arg9[%c0_29, %c0_30], %71 {strides = array<i32>} : memref<384x32xf32, #tpu.memory_space<vmem>>, vector<384x32xf32>,
    return
  }
}

module attributes {stable_mosaic.version = 11 : i64} {
  func.func @attn_kernel(%arg0: i32, %arg1: i32, %arg2: memref<128x32xbf16, #tpu.memory_space<vmem>>, %arg3: memref<32x128xbf16, #tpu.memory_space<vmem>>, %arg4: memref<128x32xbf16, #tpu.memory_space<vmem>>, %arg5: memref<128x3xf32, #tpu.memory_space<vmem>>, %arg6: memref<3x128xf32, #tpu.memory_space<vmem>>, %arg7: memref<128x1xf32, #tpu.memory_space<vmem>>, %arg8: memref<32x32xbf16, #tpu.memory_space<vmem>>, %arg9: memref<1x32xf32, #tpu.memory_space<vmem>>, %arg10: memref<128x32xf32, #tpu.memory_space<vmem>>, %arg11: memref<128x32xf32, #tpu.memory_space<vmem>>, %arg12: memref<128x1xf32, #tpu.memory_space<vmem>>) attributes {dimension_semantics = [#tpu.dimension_semantics<parallel>, #tpu.dimension_semantics<arbitrary>], iteration_bounds = array<i64: 3, 3>, scalar_prefetch = 0 : i64, scratch_operands = 2 : i64, tpu.core_type = #tpu.core_type<tc>, window_params = [{transform_indices = @transform_0, window_bounds = array<i64: 128, 32>}, {transform_indices = @transform_1, window_bounds = array<i64: 32, 128>}, {transform_indices = @transform_2, window_bounds = array<i64: 128, 32>}, {transform_indices = @transform_3, window_bounds = array<i64: 128, 3>}, {transform_indices = @transform_4, window_bounds = array<i64: 3, 128>}, {transform_indices = @transform_5, window_bounds = array<i64: 128, 1>}, {pipeline_mode = #tpu.pipeline_mode<synchronous>, transform_indices = @transform_6, window_bounds = array<i64: 32, 32>}, {pipeline_mode = #tpu.pipeline_mode<synchronous>, transform_indices = @transform_7, window_bounds = array<i64: 1, 32>}, {transform_indices = @transform_8, window_bounds = array<i64: 128, 32>}]} {
    %c0_i32 = arith.constant 0 : i32
    %0 = arith.cmpi eq, %arg1, %c0_i32 : i32
    %1 = arith.extui %0 : i1 to i32
    %c0_i32_0 = arith.constant 0 : i32
    %2 = arith.cmpi ne, %1, %c0_i32_0 : i32
    scf.if %2 {
      %cst_30 = arith.constant 0.000000e+00 : f32
      %63 = vector.broadcast %cst_30 : f32 to vector<128x32xf32>
      %c0_31 = arith.constant 0 : index
      %c0_32 = arith.constant 0 : index
      %64 = vector.load %arg11[%c0_31, %c0_32] : memref<128x32xf32, #tpu.memory_space<vmem>>, vector<128x32xf32>
      tpu.vector_store %arg11[%c0_31, %c0_32], %63 {strides = array<i32>} : memref<128x32xf32, #tpu.memory_space<vmem>>, vector<128x32xf32>,
      %cst_33 = arith.constant 0.000000e+00 : f32
      %65 = vector.broadcast %cst_33 : f32 to vector<128x1xf32>
      %c0_34 = arith.constant 0 : index
      %c0_35 = arith.constant 0 : index
      %66 = vector.load %arg12[%c0_34, %c0_35] : memref<128x1xf32, #tpu.memory_space<vmem>>, vector<128x1xf32>
      tpu.vector_store %arg12[%c0_34, %c0_35], %65 {strides = array<i32>} : memref<128x1xf32, #tpu.memory_space<vmem>>, vector<128x1xf32>,
    } else {
    }
    %c0 = arith.constant 0 : index
    %c0_1 = arith.constant 0 : index
    %3 = vector.load %arg2[%c0, %c0_1] : memref<128x32xbf16, #tpu.memory_space<vmem>>, vector<128x32xbf16>
    %c0_2 = arith.constant 0 : index
    %c0_3 = arith.constant 0 : index
    %4 = vector.load %arg3[%c0_2, %c0_3] : memref<32x128xbf16, #tpu.memory_space<vmem>>, vector<32x128xbf16>
    %cst = arith.constant dense<0.000000e+00> : vector<128x128xf32>
    %5 = tpu.matmul %3, %4, %cst {dimension_numbers = #tpu.dot_dimension_numbers<[1], [0], [0], [1], [0, 0, 1, 1], [], []>} : vector<128x32xbf16>, vector<32x128xbf16>, vector<128x128xf32> -> vector<128x128xf32>
    %cst_4 = arith.constant 0.176776692 : f32
    %6 = vector.broadcast %cst_4 : f32 to vector<128x128xf32>
    %7 = arith.mulf %5, %6 : vector<128x128xf32>
    %cst_5 = arith.constant -5.000000e+00 : f32
    %cst_6 = arith.constant 5.000000e+00 : f32
    %8 = vector.broadcast %cst_5 : f32 to vector<128x128xf32>
    %9 = arith.maximumf %8, %7 : vector<128x128xf32>
    %10 = vector.broadcast %cst_6 : f32 to vector<128x128xf32>
    %11 = arith.minimumf %10, %9 : vector<128x128xf32>
    %12 = math.exp %11 : vector<128x128xf32>
    %c0_7 = arith.constant 0 : index
    %c0_8 = arith.constant 0 : index
    %13 = vector.load %arg5[%c0_7, %c0_8] : memref<128x3xf32, #tpu.memory_space<vmem>>, vector<128x3xf32>
    %c0_9 = arith.constant 0 : index
    %c0_10 = arith.constant 0 : index
    %14 = vector.load %arg6[%c0_9, %c0_10] : memref<3x128xf32, #tpu.memory_space<vmem>>, vector<3x128xf32>
    %15 = vector.extract_strided_slice %13 {offsets = [0, 0], sizes = [128, 1], strides = [1, 1]} : vector<128x3xf32> to vector<128x1xf32>
    %16 = vector.extract_strided_slice %14 {offsets = [0, 0], sizes = [1, 128], strides = [1, 1]} : vector<3x128xf32> to vector<1x128xf32>
    %17 = vector.broadcast %15 : vector<128x1xf32> to vector<128x128xf32>
    %18 = vector.broadcast %16 : vector<1x128xf32> to vector<128x128xf32>
    %19 = arith.subf %17, %18 : vector<128x128xf32>
    %20 = arith.mulf %19, %19 : vector<128x128xf32>
    %21 = vector.extract_strided_slice %13 {offsets = [0, 1], sizes = [128, 1], strides = [1, 1]} : vector<128x3xf32> to vector<128x1xf32>
    %22 = vector.extract_strided_slice %14 {offsets = [1, 0], sizes = [1, 128], strides = [1, 1]} : vector<3x128xf32> to vector<1x128xf32>
    %23 = vector.broadcast %21 : vector<128x1xf32> to vector<128x128xf32>
    %24 = vector.broadcast %22 : vector<1x128xf32> to vector<128x128xf32>
    %25 = arith.subf %23, %24 : vector<128x128xf32>
    %26 = arith.mulf %25, %25 : vector<128x128xf32>
    %27 = arith.addf %20, %26 : vector<128x128xf32>
    %28 = vector.extract_strided_slice %13 {offsets = [0, 2], sizes = [128, 1], strides = [1, 1]} : vector<128x3xf32> to vector<128x1xf32>
    %29 = vector.extract_strided_slice %14 {offsets = [2, 0], sizes = [1, 128], strides = [1, 1]} : vector<3x128xf32> to vector<1x128xf32>
    %30 = vector.broadcast %28 : vector<128x1xf32> to vector<128x128xf32>
    %31 = vector.broadcast %29 : vector<1x128xf32> to vector<128x128xf32>
    %32 = arith.subf %30, %31 : vector<128x128xf32>
    %33 = arith.mulf %32, %32 : vector<128x128xf32>
    %34 = arith.addf %27, %33 : vector<128x128xf32>
    %cst_11 = arith.constant 9.99999997E-7 : f32
    %35 = vector.broadcast %cst_11 : f32 to vector<128x128xf32>
    %36 = arith.addf %34, %35 : vector<128x128xf32>
    %37 = math.sqrt %36 : vector<128x128xf32>
    %cst_12 = arith.constant -0.176776692 : f32
    %38 = vector.broadcast %cst_12 : f32 to vector<128x128xf32>
    %39 = arith.mulf %37, %38 : vector<128x128xf32>
    %cst_13 = arith.constant -5.000000e+00 : f32
    %40 = vector.broadcast %cst_13 : f32 to vector<128x128xf32>
    %41 = arith.maximumf %39, %40 : vector<128x128xf32>
    %42 = math.exp %41 : vector<128x128xf32>
    %c0_14 = arith.constant 0 : index
    %c0_15 = arith.constant 0 : index
    %43 = vector.load %arg7[%c0_14, %c0_15] : memref<128x1xf32, #tpu.memory_space<vmem>>, vector<128x1xf32>
    %44 = vector.broadcast %43 : vector<128x1xf32> to vector<128x128xf32>
    %45 = arith.cmpf ole, %34, %44 : vector<128x128xf32>
    %cst_16 = arith.constant 0.000000e+00 : f32
    %46 = vector.broadcast %cst_16 : f32 to vector<128x128xf32>
    %47 = arith.select %45, %12, %46 : vector<128x128xi1>, vector<128x128xf32>
    %48 = arith.mulf %47, %42 : vector<128x128xf32>
    %c0_17 = arith.constant 0 : index
    %c0_18 = arith.constant 0 : index
    %49 = vector.load %arg11[%c0_17, %c0_18] : memref<128x32xf32, #tpu.memory_space<vmem>>, vector<128x32xf32>
    %50 = arith.truncf %48 : vector<128x128xf32> to vector<128x128xbf16>
    %c0_19 = arith.constant 0 : index
    %c0_20 = arith.constant 0 : index
    %51 = vector.load %arg4[%c0_19, %c0_20] : memref<128x32xbf16, #tpu.memory_space<vmem>>, vector<128x32xbf16>
    %cst_21 = arith.constant dense<0.000000e+00> : vector<128x32xf32>
    %52 = tpu.matmul %50, %51, %cst_21 {dimension_numbers = #tpu.dot_dimension_numbers<[1], [0], [0], [1], [0, 0, 1, 1], [], []>} : vector<128x128xbf16>, vector<128x32xbf16>, vector<128x32xf32> -> vector<128x32xf32>
    %53 = arith.addf %49, %52 : vector<128x32xf32>
    %c0_22 = arith.constant 0 : index
    %c0_23 = arith.constant 0 : index
    %54 = vector.load %arg11[%c0_22, %c0_23] : memref<128x32xf32, #tpu.memory_space<vmem>>, vector<128x32xf32>
    tpu.vector_store %arg11[%c0_22, %c0_23], %53 {strides = array<i32>} : memref<128x32xf32, #tpu.memory_space<vmem>>, vector<128x32xf32>,
    %c0_24 = arith.constant 0 : index
    %c0_25 = arith.constant 0 : index
    %55 = vector.load %arg12[%c0_24, %c0_25] : memref<128x1xf32, #tpu.memory_space<vmem>>, vector<128x1xf32>
    %cst_26 = arith.constant dense<0.000000e+00> : vector<128xf32>
    %56 = vector.multi_reduction <add>, %47, %cst_26 [1] : vector<128x128xf32> to vector<128xf32>
    %57 = vector.shape_cast %56 : vector<128xf32> to vector<128x1xf32>
    %58 = arith.addf %55, %57 : vector<128x1xf32>
    %c0_27 = arith.constant 0 : index
    %c0_28 = arith.constant 0 : index
    %59 = vector.load %arg12[%c0_27, %c0_28] : memref<128x1xf32, #tpu.memory_space<vmem>>, vector<128x1xf32>
    tpu.vector_store %arg12[%c0_27, %c0_28], %58 {strides = array<i32>} : memref<128x1xf32, #tpu.memory_space<vmem>>, vector<128x1xf32>,
    %c2_i32 = arith.constant 2 : i32
    %60 = arith.cmpi eq, %arg1, %c2_i32 : i32
    %61 = arith.extui %60 : i1 to i32
    %c0_i32_29 = arith.constant 0 : i32
    %62 = arith.cmpi ne, %61, %c0_i32_29 : i32
    scf.if %62 {
      %c0_30 = arith.constant 0 : index
      %c0_31 = arith.constant 0 : index
      %63 = vector.load %arg12[%c0_30, %c0_31] : memref<128x1xf32, #tpu.memory_space<vmem>>, vector<128x1xf32>
      %cst_32 = arith.constant 0.000000e+00 : f32
      %64 = vector.broadcast %cst_32 : f32 to vector<128x1xf32>
      %65 = arith.cmpf ogt, %63, %64 : vector<128x1xf32>
      %cst_33 = arith.constant 1.000000e+00 : f32
      %66 = vector.broadcast %cst_33 : f32 to vector<128x1xf32>
      %67 = arith.select %65, %63, %66 : vector<128x1xi1>, vector<128x1xf32>
      %cst_34 = arith.constant 0.000000e+00 : f32
      %68 = vector.broadcast %cst_34 : f32 to vector<128x1xf32>
      %69 = arith.cmpf ogt, %63, %68 : vector<128x1xf32>
      %c0_35 = arith.constant 0 : index
      %c0_36 = arith.constant 0 : index
      %70 = vector.load %arg11[%c0_35, %c0_36] : memref<128x32xf32, #tpu.memory_space<vmem>>, vector<128x32xf32>
      %71 = vector.broadcast %67 : vector<128x1xf32> to vector<128x32xf32>
      %72 = arith.divf %70, %71 : vector<128x32xf32>
      %c0_37 = arith.constant 0 : index
      %c0_38 = arith.constant 0 : index
      %73 = vector.load %arg11[%c0_37, %c0_38] : memref<128x32xf32, #tpu.memory_space<vmem>>, vector<128x32xf32>
      %74 = vector.shape_cast %69 : vector<128x1xi1> to vector<128x1xi1>
      %75 = vector.broadcast %74 : vector<128x1xi1> to vector<128x32xi1>
      %76 = arith.select %75, %72, %73 : vector<128x32xi1>, vector<128x32xf32>
      %77 = arith.truncf %76 : vector<128x32xf32> to vector<128x32xbf16>
      %c0_39 = arith.constant 0 : index
      %c0_40 = arith.constant 0 : index
      %78 = vector.load %arg8[%c0_39, %c0_40] : memref<32x32xbf16, #tpu.memory_space<vmem>>, vector<32x32xbf16>
      %cst_41 = arith.constant dense<0.000000e+00> : vector<128x32xf32>
      %79 = tpu.matmul %77, %78, %cst_41 {dimension_numbers = #tpu.dot_dimension_numbers<[1], [0], [0], [1], [0, 0, 1, 1], [], []>} : vector<128x32xbf16>, vector<32x32xbf16>, vector<128x32xf32> -> vector<128x32xf32>
      %c0_42 = arith.constant 0 : index
      %c0_43 = arith.constant 0 : index
      %80 = vector.load %arg9[%c0_42, %c0_43] : memref<1x32xf32, #tpu.memory_space<vmem>>, vector<1x32xf32>
      %81 = vector.broadcast %80 : vector<1x32xf32> to vector<128x32xf32>
      %82 = arith.addf %79, %81 : vector<128x32xf32>
      %c0_44 = arith.constant 0 : index
      %c0_45 = arith.constant 0 : index
      %83 = vector.load %arg10[%c0_44, %c0_45] : memref<128x32xf32, #tpu.memory_space<vmem>>, vector<128x32xf32>
      tpu.vector_store %arg10[%c0_44, %c0_45], %82 {strides = array<i32>} : memref<128x32xf32, #tpu.memory_space<vmem>>, vector<128x32xf32>,
    } else {
    }
    return
  }
  func.func @transform_0(%arg0: i32, %arg1: i32) -> (i32, i32) {
    %c0_i32 = arith.constant 0 : i32
    %c0_i32_0 = arith.constant 0 : i32
    return %arg0, %c0_i32 : i32, i32
  }
  func.func @transform_1(%arg0: i32, %arg1: i32) -> (i32, i32) {
    %c0_i32 = arith.constant 0 : i32
    %c0_i32_0 = arith.constant 0 : i32
    return %c0_i32, %arg1 : i32, i32
  }
  func.func @transform_2(%arg0: i32, %arg1: i32) -> (i32, i32) {
    %c0_i32 = arith.constant 0 : i32
    %c0_i32_0 = arith.constant 0 : i32
    return %arg1, %c0_i32 : i32, i32
  }
  func.func @transform_3(%arg0: i32, %arg1: i32) -> (i32, i32) {
    %c0_i32 = arith.constant 0 : i32
    %c0_i32_0 = arith.constant 0 : i32
    return %arg0, %c0_i32 : i32, i32
  }
  func.func @transform_4(%arg0: i32, %arg1: i32) -> (i32, i32) {
    %c0_i32 = arith.constant 0 : i32
    %c0_i32_0 = arith.constant 0 : i32
    return %c0_i32, %arg1 : i32, i32
  }
  func.func @transform_5(%arg0: i32, %arg1: i32) -> (i32, i32) {
    %c0_i32 = arith.constant 0 : i32
    %c0_i32_0 = arith.constant 0 : i32
    return %arg0, %c0_i32 : i32, i32
  }
  func.func @transform_6(%arg0: i32, %arg1: i32) -> (i32, i32) {
    %c0_i32 = arith.constant 0 : i32
    %c0_i32_0 = arith.constant 0 : i32
    %c0_i32_1 = arith.constant 0 : i32
    return %c0_i32, %c0_i32_0 : i32, i32
  }
  func.func @transform_7(%arg0: i32, %arg1: i32) -> (i32, i32) {
    %c0_i32 = arith.constant 0 : i32
    %c0_i32_0 = arith.constant 0 : i32
    %c0_i32_1 = arith.constant 0 : i32
    return %c0_i32, %c0_i32_0 : i32, i32
  }
  func.func @transform_8(%arg0: i32, %arg1: i32) -> (i32, i32) {
    %c0_i32 = arith.constant 0 : i32
    %c0_i32_0 = arith.constant 0 : i32
    return %arg0, %c0_i32 : i32, i32
  }
}

</mosaic_0001>

<llo_original>
// kernel: graph_transformer_layer.3
$region0: #{graph_transformer_layer.3}
  #allocation0 [shape = 'u32[]', space=smem, size = 0x4, offset = 0x4, fixed_abs, tag = 'smem constant byte address 0x4 - core index']
  #allocation1 [shape = 'u32[144,128]{1,0:T(1,128)}', space=vmem, size = 0x12000, scoped, tag = 'internal scratch']
  %s0 = inlined_call_operand.vmem [shape: f32[384,16], index: 0, kind: input, shape index: {}]
  %s1 = inlined_call_operand.vmem [shape: bf16[16,32], index: 1, kind: input, shape index: {}]
  %s2 = inlined_call_operand.vmem [shape: f32[1,32], index: 2, kind: input, shape index: {}]
  %s3 = inlined_call_operand.vmem [shape: bf16[32,32], index: 3, kind: input, shape index: {}]
  %s4 = inlined_call_operand.vmem [shape: f32[1,32], index: 4, kind: input, shape index: {}]
  %s5 = inlined_call_operand.vmem [shape: bf16[32,128], index: 5, kind: input, shape index: {}]
  %s6 = inlined_call_operand.vmem [shape: bf16[384,32], index: 6, kind: output, shape index: {0}]
  %s7 = inlined_call_operand.vmem [shape: bf16[384,32], index: 7, kind: output, shape index: {1}]
  %s8 = inlined_call_operand.vmem [shape: bf16[384,32], index: 8, kind: output, shape index: {2}]
  %s9 = inlined_call_operand.vmem [shape: f32[384,3], index: 9, kind: output, shape index: {3}]
  %10 = xla_tuple %s6, %s7, %s8, %s9
  %s11 = sld [smem:[#allocation0]]
  $region81: #{graph_transformer_layer.3} parent=0
    _
  %s13 = ssub.s32 1, %s11
  %s14 = scalar_select 0, %s13, %s11
  loop: start=0, step=1, limit=5
  $region2: #{graph_transformer_layer.3} parent=0 // loop_pre_header
    _
  $region3: #{graph_transformer_layer.3} parent=0 // loop_header
    %s16 = sphi 0, %s20
    %p17 = scmp.ge.s32.totalorder %s16, 5
    %s26 = sphi 0, %s28
    %s29 = sphi 0, %s26
    %s30 = sphi 0, %s29
    %s46 = sphi 0, %s30
    %s50 = sphi 0, %s50
    %s52 = sphi 0, %s50
    %s53 = sphi 0, %s52
    %s67 = sphi 0, %s53
    %s71 = sphi 0, %s71
    %s73 = sphi 0, %s71
    %s74 = sphi 0, %s73
    %s88 = sphi 0, %s74
    %s92 = sphi 0, %s92
    %s94 = sphi 0, %s92
    %s95 = sphi 0, %s94
    %s109 = sphi 0, %s95
    %s113 = sphi 0, %s113
    %s115 = sphi 0, %s113
    %s116 = sphi 0, %s115
    %s130 = sphi 0, %s116
    %s134 = sphi 0, %s134
    %s136 = sphi 0, %s134
    %s137 = sphi 0, %s136
    %s151 = sphi 0, %s137
    %s157 = sphi 0, %s159
    %s160 = sphi 0, %s157
    %s161 = sphi 0, %s160
    %s177 = sphi 0, %s161
    %s183 = sphi 0, %s185
    %s186 = sphi 0, %s183
    %s187 = sphi 0, %s186
    %s203 = sphi 0, %s187
    %s209 = sphi 0, %s211
    %s212 = sphi 0, %s209
    %s213 = sphi 0, %s212
    %s229 = sphi 0, %s213
    %s235 = sphi 0, %s237
    %s238 = sphi 0, %s235
    %s239 = sphi 0, %s238
    %s255 = sphi 0, %s239
  $region4: #{graph_transformer_layer.3} parent=0 // loop_header_branch
    %19 = sbr.rel (%p17) target = $region8
  $region5: #{graph_transformer_layer.3} parent=0 // loop_body
    %s21 = ssub.s32 %s16, 1
    %s22 = ssub.s32 %s16, 2
    %s23 = sadd.s32 %s16, 1
    %s24 = ssub.s32 %s16, %s23
    %p25 = scmp.eq.s32.totalorder %s24, 0
    %s27 = sadd.s32 %s26, 1
    %s28 = scalar_select %p25, %s26, %s27
    %p31 = pneg %p25
    %p32 = scmp.eq.s32.totalorder %s16, 2
    %p33 = por %p31, %p32
    %p34 = scmp.ne.s32.totalorder %s26, %s29
    %p35 = scmp.eq.s32.totalorder %s16, 0
    %p36 = por %p34, %p35
    %p37 = scmp.ne.s32.totalorder %s26, %s29
    %p38 = scmp.eq.s32.totalorder %s21, 2
    %p39 = por %p37, %p38
    %p40 = scmp.ne.s32.totalorder %s29, %s30
    %p41 = scmp.eq.s32.totalorder %s21, 0
    %p42 = por %p40, %p41
    %p43 = scmp.ne.s32.totalorder %s29, %s30
    %p44 = scmp.eq.s32.totalorder %s22, 2
    %p45 = por %p43, %p44
    %p47 = scmp.ne.s32.totalorder %s30, %s46
    %p48 = scmp.eq.s32.totalorder %s22, 0
    %p49 = por %p47, %p48
    %s51 = sadd.s32 %s50, 1
    %p54 = scmp.eq.s32.totalorder %s16, 2
    %p55 = scmp.ne.s32.totalorder %s50, %s52
    %p56 = scmp.eq.s32.totalorder %s16, 0
    %p57 = por %p55, %p56
    %p58 = scmp.ne.s32.totalorder %s50, %s52
    %p59 = scmp.eq.s32.totalorder %s21, 2
    %p60 = por %p58, %p59
    %p61 = scmp.ne.s32.totalorder %s52, %s53
    %p62 = scmp.eq.s32.totalorder %s21, 0
    %p63 = por %p61, %p62
    %p64 = scmp.ne.s32.totalorder %s52, %s53
    %p65 = scmp.eq.s32.totalorder %s22, 2
    %p66 = por %p64, %p65
    %p68 = scmp.ne.s32.totalorder %s53, %s67
    %p69 = scmp.eq.s32.totalorder %s22, 0
    %p70 = por %p68, %p69
    %s72 = sadd.s32 %s71, 1
    %p75 = scmp.eq.s32.totalorder %s16, 2
    %p76 = scmp.ne.s32.totalorder %s71, %s73
    %p77 = scmp.eq.s32.totalorder %s16, 0
    %p78 = por %p76, %p77
    %p79 = scmp.ne.s32.totalorder %s71, %s73
    %p80 = scmp.eq.s32.totalorder %s21, 2
    %p81 = por %p79, %p80
    %p82 = scmp.ne.s32.totalorder %s73, %s74
    %p83 = scmp.eq.s32.totalorder %s21, 0
    %p84 = por %p82, %p83
    %p85 = scmp.ne.s32.totalorder %s73, %s74
    %p86 = scmp.eq.s32.totalorder %s22, 2
    %p87 = por %p85, %p86
    %p89 = scmp.ne.s32.totalorder %s74, %s88
    %p90 = scmp.eq.s32.totalorder %s22, 0
    %p91 = por %p89, %p90
    %s93 = sadd.s32 %s92, 1
    %p96 = scmp.eq.s32.totalorder %s16, 2
    %p97 = scmp.ne.s32.totalorder %s92, %s94
    %p98 = scmp.eq.s32.totalorder %s16, 0
    %p99 = por %p97, %p98
    %p100 = scmp.ne.s32.totalorder %s92, %s94
    %p101 = scmp.eq.s32.totalorder %s21, 2
    %p102 = por %p100, %p101
    %p103 = scmp.ne.s32.totalorder %s94, %s95
    %p104 = scmp.eq.s32.totalorder %s21, 0
    %p105 = por %p103, %p104
    %p106 = scmp.ne.s32.totalorder %s94, %s95
    %p107 = scmp.eq.s32.totalorder %s22, 2
    %p108 = por %p106, %p107
    %p110 = scmp.ne.s32.totalorder %s95, %s109
    %p111 = scmp.eq.s32.totalorder %s22, 0
    %p112 = por %p110, %p111
    %s114 = sadd.s32 %s113, 1
    %p117 = scmp.eq.s32.totalorder %s16, 2
    %p118 = scmp.ne.s32.totalorder %s113, %s115
    %p119 = scmp.eq.s32.totalorder %s16, 0
    %p120 = por %p118, %p119
    %p121 = scmp.ne.s32.totalorder %s113, %s115
    %p122 = scmp.eq.s32.totalorder %s21, 2
    %p123 = por %p121, %p122
    %p124 = scmp.ne.s32.totalorder %s115, %s116
    %p125 = scmp.eq.s32.totalorder %s21, 0
    %p126 = por %p124, %p125
    %p127 = scmp.ne.s32.totalorder %s115, %s116
    %p128 = scmp.eq.s32.totalorder %s22, 2
    %p129 = por %p127, %p128
    %p131 = scmp.ne.s32.totalorder %s116, %s130
    %p132 = scmp.eq.s32.totalorder %s22, 0
    %p133 = por %p131, %p132
    %s135 = sadd.s32 %s134, 1
    %p138 = scmp.eq.s32.totalorder %s16, 2
    %p139 = scmp.ne.s32.totalorder %s134, %s136
    %p140 = scmp.eq.s32.totalorder %s16, 0
    %p141 = por %p139, %p140
    %p142 = scmp.ne.s32.totalorder %s134, %s136
    %p143 = scmp.eq.s32.totalorder %s21, 2
    %p144 = por %p142, %p143
    %p145 = scmp.ne.s32.totalorder %s136, %s137
    %p146 = scmp.eq.s32.totalorder %s21, 0
    %p147 = por %p145, %p146
    %p148 = scmp.ne.s32.totalorder %s136, %s137
    %p149 = scmp.eq.s32.totalorder %s22, 2
    %p150 = por %p148, %p149
    %p152 = scmp.ne.s32.totalorder %s137, %s151
    %p153 = scmp.eq.s32.totalorder %s22, 0
    %p154 = por %p152, %p153
    %s155 = ssub.s32 %s16, %s23
    %p156 = scmp.eq.s32.totalorder %s155, 0
    %s158 = sadd.s32 %s157, 1
    %s159 = scalar_select %p156, %s157, %s158
    %p162 = pneg %p156
    %p163 = scmp.eq.s32.totalorder %s16, 2
    %p164 = por %p162, %p163
    %p165 = scmp.ne.s32.totalorder %s157, %s160
    %p166 = scmp.eq.s32.totalorder %s16, 0
    %p167 = por %p165, %p166
    %p168 = scmp.ne.s32.totalorder %s157, %s160
    %p169 = scmp.eq.s32.totalorder %s21, 2
    %p170 = por %p168, %p169
    %p171 = scmp.ne.s32.totalorder %s160, %s161
    %p172 = scmp.eq.s32.totalorder %s21, 0
    %p173 = por %p171, %p172
    %p174 = scmp.ne.s32.totalorder %s160, %s161
    %p175 = scmp.eq.s32.totalorder %s22, 2
    %p176 = por %p174, %p175
    %p178 = scmp.ne.s32.totalorder %s161, %s177
    %p179 = scmp.eq.s32.totalorder %s22, 0
    %p180 = por %p178, %p179
    %s181 = ssub.s32 %s16, %s23
    %p182 = scmp.eq.s32.totalorder %s181, 0
    %s184 = sadd.s32 %s183, 1
    %s185 = scalar_select %p182, %s183, %s184
    %p188 = pneg %p182
    %p189 = scmp.eq.s32.totalorder %s16, 2
    %p190 = por %p188, %p189
    %p191 = scmp.ne.s32.totalorder %s183, %s186
    %p192 = scmp.eq.s32.totalorder %s16, 0
    %p193 = por %p191, %p192
    %p194 = scmp.ne.s32.totalorder %s183, %s186
    %p195 = scmp.eq.s32.totalorder %s21, 2
    %p196 = por %p194, %p195
    %p197 = scmp.ne.s32.totalorder %s186, %s187
    %p198 = scmp.eq.s32.totalorder %s21, 0
    %p199 = por %p197, %p198
    %p200 = scmp.ne.s32.totalorder %s186, %s187
    %p201 = scmp.eq.s32.totalorder %s22, 2
    %p202 = por %p200, %p201
    %p204 = scmp.ne.s32.totalorder %s187, %s203
    %p205 = scmp.eq.s32.totalorder %s22, 0
    %p206 = por %p204, %p205
    %s207 = ssub.s32 %s16, %s23
    %p208 = scmp.eq.s32.totalorder %s207, 0
    %s210 = sadd.s32 %s209, 1
    %s211 = scalar_select %p208, %s209, %s210
    %p214 = pneg %p208
    %p215 = scmp.eq.s32.totalorder %s16, 2
    %p216 = por %p214, %p215
    %p217 = scmp.ne.s32.totalorder %s209, %s212
    %p218 = scmp.eq.s32.totalorder %s16, 0
    %p219 = por %p217, %p218
    %p220 = scmp.ne.s32.totalorder %s209, %s212
    %p221 = scmp.eq.s32.totalorder %s21, 2
    %p222 = por %p220, %p221
    %p223 = scmp.ne.s32.totalorder %s212, %s213
    %p224 = scmp.eq.s32.totalorder %s21, 0
    %p225 = por %p223, %p224
    %p226 = scmp.ne.s32.totalorder %s212, %s213
    %p227 = scmp.eq.s32.totalorder %s22, 2
    %p228 = por %p226, %p227
    %p230 = scmp.ne.s32.totalorder %s213, %s229
    %p231 = scmp.eq.s32.totalorder %s22, 0
    %p232 = por %p230, %p231
    %s233 = ssub.s32 %s16, %s23
    %p234 = scmp.eq.s32.totalorder %s233, 0
    %s236 = sadd.s32 %s235, 1
    %s237 = scalar_select %p234, %s235, %s236
    %p240 = pneg %p234
    %p241 = scmp.eq.s32.totalorder %s16, 2
    %p242 = por %p240, %p241
    %p243 = scmp.ne.s32.totalorder %s235, %s238
    %p244 = scmp.eq.s32.totalorder %s16, 0
    %p245 = por %p243, %p244
    %p246 = scmp.ne.s32.totalorder %s235, %s238
    %p247 = scmp.eq.s32.totalorder %s21, 2
    %p248 = por %p246, %p247
    %p249 = scmp.ne.s32.totalorder %s238, %s239
    %p250 = scmp.eq.s32.totalorder %s21, 0
    %p251 = por %p249, %p250
    %p252 = scmp.ne.s32.totalorder %s238, %s239
    %p253 = scmp.eq.s32.totalorder %s22, 2
    %p254 = por %p252, %p253
    %p256 = scmp.ne.s32.totalorder %s239, %s255
    %p257 = scmp.eq.s32.totalorder %s22, 0
    %p258 = por %p256, %p257
    %p259 = scmp.le.s32.totalorder 1, %s16
    %p260 = scmp.lt.s32.totalorder %s16, 4
    %p261 = pnand %p259, %p260
    %p262 = pneg %p261
    // Predicated region
    $region9: #{graph_transformer_layer.3} parent=5 // pred_check
      _
    $region10: #{graph_transformer_layer.3} parent=5 // pred_check_branch
      %264 = sbr.rel (%p261) target = $region12
    $region11: #{graph_transformer_layer.3} parent=5 // pred_region
      %s265 = ssub.s32 %s16, 1
      // Predicated region
      $region13: #{graph_transformer_layer.3} parent=11 // pred_check
        %p266 = pneg %p63
      $region14: #{graph_transformer_layer.3} parent=11 // pred_check_branch
        %268 = sbr.rel (%p266) target = $region16
      $region15: #{graph_transformer_layer.3} parent=11 // pred_region
        _
      $region16: #{graph_transformer_layer.3} parent=11 // pred_fallthru
        _
      // Predicated region
      $region17: #{graph_transformer_layer.3} parent=11 // pred_check
        %p269 = pneg %p84
      $region18: #{graph_transformer_layer.3} parent=11 // pred_check_branch
        %271 = sbr.rel (%p269) target = $region20
      $region19: #{graph_transformer_layer.3} parent=11 // pred_region
        _
      $region20: #{graph_transformer_layer.3} parent=11 // pred_fallthru
        _
      // Predicated region
      $region21: #{graph_transformer_layer.3} parent=11 // pred_check
        %p272 = pneg %p105
      $region22: #{graph_transformer_layer.3} parent=11 // pred_check_branch
        %274 = sbr.rel (%p272) target = $region24
      $region23: #{graph_transformer_layer.3} parent=11 // pred_region
        _
      $region24: #{graph_transformer_layer.3} parent=11 // pred_fallthru
        _
      // Predicated region
      $region25: #{graph_transformer_layer.3} parent=11 // pred_check
        %p275 = pneg %p126
      $region26: #{graph_transformer_layer.3} parent=11 // pred_check_branch
        %277 = sbr.rel (%p275) target = $region28
      $region27: #{graph_transformer_layer.3} parent=11 // pred_region
        _
      $region28: #{graph_transformer_layer.3} parent=11 // pred_fallthru
        _
      // Predicated region
      $region29: #{graph_transformer_layer.3} parent=11 // pred_check
        %p278 = pneg %p147
      $region30: #{graph_transformer_layer.3} parent=11 // pred_check_branch
        %280 = sbr.rel (%p278) target = $region32
      $region31: #{graph_transformer_layer.3} parent=11 // pred_region
        _
      $region32: #{graph_transformer_layer.3} parent=11 // pred_fallthru
        _
    $region12: #{graph_transformer_layer.3} parent=5 // pred_fallthru
      _
    %p281 = scmp.lt.s32.totalorder %s16, 3
    // Predicated region
    $region33: #{graph_transformer_layer.3} parent=5 // pred_check
      %p282 = pneg %p281
    $region34: #{graph_transformer_layer.3} parent=5 // pred_check_branch
      %284 = sbr.rel (%p282) target = $region36
    $region35: #{graph_transformer_layer.3} parent=5 // pred_region
      // Predicated region
      $region37: #{graph_transformer_layer.3} parent=35 // pred_check
        %p285 = pneg %p36
      $region38: #{graph_transformer_layer.3} parent=35 // pred_check_branch
        %287 = sbr.rel (%p285) target = $region40
      $region39: #{graph_transformer_layer.3} parent=35 // pred_region
        %s288 = smul.u32 16, %s16
        %p289 = scmp.lt.s32.totalorder %s288, 47
        %s290 = scalar_select %p289, %s288, 47
        %s291 = smul.addr %s290, 8
        %s292 = scalar_lea.vmem %s0, %s291
        %s293 = smul.u32 16, %s16
      $region40: #{graph_transformer_layer.3} parent=35 // pred_fallthru
        _
    $region36: #{graph_transformer_layer.3} parent=5 // pred_fallthru
      _
    %p294 = scmp.le.s32.totalorder 1, %s16
    %p295 = scmp.lt.s32.totalorder %s16, 4
    %p296 = pnand %p294, %p295
    %p297 = pneg %p296
    // Predicated region
    $region41: #{graph_transformer_layer.3} parent=5 // pred_check
      _
    $region42: #{graph_transformer_layer.3} parent=5 // pred_check_branch
      %299 = sbr.rel (%p296) target = $region44
    $region43: #{graph_transformer_layer.3} parent=5 // pred_region
      %s300 = ssub.s32 %s16, 1
      %s301 = smul.u32 16, %s21
      %p302 = scmp.lt.s32.totalorder %s301, 47
      %s303 = scalar_select %p302, %s301, 47
      %s304 = smul.addr %s303, 8
      %s305 = scalar_lea.vmem %s0, %s304
      %p306 = pneg %p42
      %p307 = pneg %p39
      %p308 = pneg %p63
      %p309 = pneg %p60
      %p310 = pneg %p84
      %p311 = pneg %p81
      %p312 = pneg %p105
      %p313 = pneg %p102
      %p314 = pneg %p126
      %p315 = pneg %p123
      %p316 = pneg %p147
      %p317 = pneg %p144
      %p318 = pneg %p173
      %p319 = pneg %p170
      %s320 = smul.u32 16, %s21
      %p321 = scmp.lt.s32.totalorder %s320, 47
      %s322 = scalar_select %p321, %s320, 47
      %s323 = smul.addr %s322, 4
      %s324 = scalar_lea.vmem %s6, %s323
      %p325 = pneg %p199
      %p326 = pneg %p196
      %s327 = smul.u32 16, %s21
      %p328 = scmp.lt.s32.totalorder %s327, 47
      %s329 = scalar_select %p328, %s327, 47
      %s330 = smul.addr %s329, 4
      %s331 = scalar_lea.vmem %s7, %s330
      %p332 = pneg %p225
      %p333 = pneg %p222
      %s334 = smul.u32 16, %s21
      %p335 = scmp.lt.s32.totalorder %s334, 47
      %s336 = scalar_select %p335, %s334, 47
      %s337 = smul.addr %s336, 4
      %s338 = scalar_lea.vmem %s8, %s337
      %p339 = pneg %p251
      %p340 = pneg %p248
      %s341 = smul.u32 16, %s21
      %p342 = scmp.lt.s32.totalorder %s341, 47
      %s343 = scalar_select %p342, %s341, 47
      %s344 = smul.addr %s343, 8
      %s345 = scalar_lea.vmem %s9, %s344
      %s346 = smul.u32 16, %s21
      %p347 = scmp.lt.s32.totalorder %s346, 47
      %s348 = scalar_select %p347, %s346, 47
      %s349 = smul.addr %s348, 8
      %s350 = scalar_lea.vmem %s0, %s349
      %s351 = smul.u32 16, %s21
      %s352 = smul.u32 16, %s21
      %p353 = scmp.lt.s32.totalorder %s352, 47
      %s354 = scalar_select %p353, %s352, 47
      %s355 = smul.addr %s354, 4
      %s356 = scalar_lea.vmem %s6, %s355
      %s357 = smul.u32 16, %s21
      %s358 = smul.u32 16, %s21
      %p359 = scmp.lt.s32.totalorder %s358, 47
      %s360 = scalar_select %p359, %s358, 47
      %s361 = smul.addr %s360, 4
      %s362 = scalar_lea.vmem %s7, %s361
      %s363 = smul.u32 16, %s21
      %s364 = smul.u32 16, %s21
      %p365 = scmp.lt.s32.totalorder %s364, 47
      %s366 = scalar_select %p365, %s364, 47
      %s367 = smul.addr %s366, 4
      %s368 = scalar_lea.vmem %s8, %s367
      %s369 = smul.u32 16, %s21
      %s370 = smul.u32 16, %s21
      %p371 = scmp.lt.s32.totalorder %s370, 47
      %s372 = scalar_select %p371, %s370, 47
      %s373 = smul.addr %s372, 8
      %s374 = scalar_lea.vmem %s9, %s373
      %s375 = smul.u32 16, %s21
      %v377 = vld [vmem:[%s350] sm:$0xff]
      %v378 = vld [vmem:[%s350 + $0x8] sm:$0xff]
      %v379 = vld [vmem:[%s350 + $0x10] sm:$0xff]
      %v380 = vld [vmem:[%s350 + $0x18] sm:$0xff]
      %v381 = vld [vmem:[%s350 + $0x20] sm:$0xff]
      %v382 = vld [vmem:[%s350 + $0x28] sm:$0xff]
      %v383 = vld [vmem:[%s350 + $0x30] sm:$0xff]
      %v384 = vld [vmem:[%s350 + $0x38] sm:$0xff]
      %v385 = vld [vmem:[%s350 + $0x40] sm:$0xff]
      %v386 = vld [vmem:[%s350 + $0x48] sm:$0xff]
      %v387 = vld [vmem:[%s350 + $0x50] sm:$0xff]
      %v388 = vld [vmem:[%s350 + $0x58] sm:$0xff]
      %v389 = vld [vmem:[%s350 + $0x60] sm:$0xff]
      %v390 = vld [vmem:[%s350 + $0x68] sm:$0xff]
      %v391 = vld [vmem:[%s350 + $0x70] sm:$0xff]
      %v392 = vld [vmem:[%s350 + $0x78] sm:$0xff]
      %v393 = vpack.c.bf16 %v378, %v377
      %v394 = vpack.c.bf16 %v380, %v379
      %v395 = vpack.c.bf16 %v382, %v381
      %v396 = vpack.c.bf16 %v384, %v383
      %v397 = vpack.c.bf16 %v386, %v385
      %v398 = vpack.c.bf16 %v388, %v387
      %v399 = vpack.c.bf16 %v390, %v389
      %v400 = vpack.c.bf16 %v392, %v391
      %v401 = vld [vmem:[%s1] sm:$0xf]
      %v402 = vld [vmem:[%s1 + $0x4] sm:$0xf]
      %v403 = vld [vmem:[%s2] sm:$0x1]
      %v405 = vlaneseq
      %v406 = vshrl.u32 %v405, 7
      %v407 = vsub.s32 0, %v406
      %v408 = vrot.slane %v403, %v407
      %v412 = vunpack.c.l.b16 %v401
      %v413 = vunpack.c.l.b16 %v402
      %v414 = vpack.c.b16 %v413, %v412
      %vm416 = vcmask 130048
      %v418 = vsel %vm416, %v393, 0
      %v421 = vsel %vm416, %v394, 0
      %v424 = vsel %vm416, %v395, 0
      %v427 = vsel %vm416, %v396, 0
      %v430 = vsel %vm416, %v397, 0
      %v433 = vsel %vm416, %v398, 0
      %v436 = vsel %vm416, %v399, 0
      %v439 = vsel %vm416, %v400, 0
      %441 = vmatprep.subr.bf16.mxu0 0
      %442 = vmatpush1.bf16.msra.mxu0 %v414
      %443 = vmatprep.subr.bf16.mxu0 0
      %444 = vmatpush1.bf16.msra.mxu0 0
      %445 = vmatprep.subr.bf16.mxu0 0
      %446 = vmatpush1.bf16.msra.mxu0 0
      %447 = vmatprep.subr.bf16.mxu0 0
      %448 = vmatpush1.bf16.msra.mxu0 0
      %449 = vmatprep.subr.bf16.mxu0 0
      %450 = vmatpush1.bf16.msra.mxu0 0
      %451 = vmatprep.subr.bf16.mxu0 0
      %452 = vmatpush1.bf16.msra.mxu0 0
      %453 = vmatprep.subr.bf16.mxu0 0
      %454 = vmatpush1.bf16.msra.mxu0 0
      %455 = vmatprep.subr.bf16.mxu0 0
      %456 = vmatpush1.bf16.msra.mxu0 0
      %457 = vmatprep.subr.bf16.mxu0 0
      %458 = vmatpush1.bf16.msra.mxu0 0
      %459 = vmatprep.subr.bf16.mxu0 0
      %460 = vmatpush1.bf16.msra.mxu0 0
      %461 = vmatprep.subr.bf16.mxu0 0
      %462 = vmatpush1.bf16.msra.mxu0 0
      %463 = vmatprep.subr.bf16.mxu0 0
      %464 = vmatpush1.bf16.msra.mxu0 0
      %465 = vmatprep.subr.bf16.mxu0 0
      %466 = vmatpush1.bf16.msra.mxu0 0
      %467 = vmatprep.subr.bf16.mxu0 0
      %468 = vmatpush1.bf16.msra.mxu0 0
      %469 = vmatprep.subr.bf16.mxu0 0
      %470 = vmatpush1.bf16.msra.mxu0 0
      %471 = vmatprep.subr.bf16.mxu0 0
      %472 = vmatpush1.bf16.msra.mxu0 0
      %473 = vmatprep.mubr.bf16.mxu0 0
      %474 = vmatmul.mubr.bf16.gmra.mrb[0].mxu0 %v418
      %v475 = vpop.f32.mrb[0].mxu0
      %v476 = vadd.f32 %v408, %v475
      %v477 = vpop.f32.mrb[0].mxu0
      %v478 = vpop.f32.mrb[0].mxu0
      %v479 = vadd.f32 %v408, %v478
      %v480 = vpop.f32.mrb[0].mxu0
      %481 = vmatprep.mubr.bf16.mxu0 0
      %482 = vmatmul.mubr.bf16.gmra.mrb[0].mxu0 %v421
      %v483 = vpop.f32.mrb[0].mxu0
      %v484 = vadd.f32 %v408, %v483
      %v485 = vpop.f32.mrb[0].mxu0
      %v486 = vpop.f32.mrb[0].mxu0
      %v487 = vadd.f32 %v408, %v486
      %v488 = vpop.f32.mrb[0].mxu0
      %489 = vmatprep.mubr.bf16.mxu0 0
      %490 = vmatmul.mubr.bf16.gmra.mrb[0].mxu0 %v424
      %v491 = vpop.f32.mrb[0].mxu0
      %v492 = vadd.f32 %v408, %v491
      %v493 = vpop.f32.mrb[0].mxu0
      %v494 = vpop.f32.mrb[0].mxu0
      %v495 = vadd.f32 %v408, %v494
      %v496 = vpop.f32.mrb[0].mxu0
      %497 = vmatprep.mubr.bf16.mxu0 0
      %498 = vmatmul.mubr.bf16.gmra.mrb[0].mxu0 %v427
      %v499 = vpop.f32.mrb[0].mxu0
      %v500 = vadd.f32 %v408, %v499
      %v501 = vpop.f32.mrb[0].mxu0
      %v502 = vpop.f32.mrb[0].mxu0
      %v503 = vadd.f32 %v408, %v502
      %v504 = vpop.f32.mrb[0].mxu0
      %505 = vmatprep.mubr.bf16.mxu0 0
      %506 = vmatmul.mubr.bf16.gmra.mrb[0].mxu0 %v430
      %v507 = vpop.f32.mrb[0].mxu0
      %v508 = vadd.f32 %v408, %v507
      %v509 = vpop.f32.mrb[0].mxu0
      %v510 = vpop.f32.mrb[0].mxu0
      %v511 = vadd.f32 %v408, %v510
      %v512 = vpop.f32.mrb[0].mxu0
      %513 = vmatprep.mubr.bf16.mxu0 0
      %514 = vmatmul.mubr.bf16.gmra.mrb[0].mxu0 %v433
      %v515 = vpop.f32.mrb[0].mxu0
      %v516 = vadd.f32 %v408, %v515
      %v517 = vpop.f32.mrb[0].mxu0
      %v518 = vpop.f32.mrb[0].mxu0
      %v519 = vadd.f32 %v408, %v518
      %v520 = vpop.f32.mrb[0].mxu0
      %521 = vmatprep.mubr.bf16.mxu0 0
      %522 = vmatmul.mubr.bf16.gmra.mrb[0].mxu0 %v436
      %v523 = vpop.f32.mrb[0].mxu0
      %v524 = vadd.f32 %v408, %v523
      %v525 = vpop.f32.mrb[0].mxu0
      %v526 = vpop.f32.mrb[0].mxu0
      %v527 = vadd.f32 %v408, %v526
      %v528 = vpop.f32.mrb[0].mxu0
      %529 = vmatprep.mubr.bf16.mxu0 0
      %530 = vmatmul.mubr.bf16.gmra.mrb[0].mxu0 %v439
      %v531 = vpop.f32.mrb[0].mxu0
      %v532 = vadd.f32 %v408, %v531
      %v533 = vpop.f32.mrb[0].mxu0
      %v534 = vpop.f32.mrb[0].mxu0
      %v535 = vadd.f32 %v408, %v534
      %v536 = vpop.f32.mrb[0].mxu0
      %537 = vdwg.mxu0
      %vm538 = vcmp.gt.f32.partialorder %v476, 0.0
      %vm539 = vcmp.gt.f32.partialorder %v479, 0.0
      %vm540 = vcmp.gt.f32.partialorder %v484, 0.0
      %vm541 = vcmp.gt.f32.partialorder %v487, 0.0
      %vm542 = vcmp.gt.f32.partialorder %v492, 0.0
      %vm543 = vcmp.gt.f32.partialorder %v495, 0.0
      %vm544 = vcmp.gt.f32.partialorder %v500, 0.0
      %vm545 = vcmp.gt.f32.partialorder %v503, 0.0
      %vm546 = vcmp.gt.f32.partialorder %v508, 0.0
      %vm547 = vcmp.gt.f32.partialorder %v511, 0.0
      %vm548 = vcmp.gt.f32.partialorder %v516, 0.0
      %vm549 = vcmp.gt.f32.partialorder %v519, 0.0
      %vm550 = vcmp.gt.f32.partialorder %v524, 0.0
      %vm551 = vcmp.gt.f32.partialorder %v527, 0.0
      %vm552 = vcmp.gt.f32.partialorder %v532, 0.0
      %vm553 = vcmp.gt.f32.partialorder %v535, 0.0
      %v554 = vmul.f32 %v476, 1.442695
      %v555 = vpow.pop %v554
      %v556 = vmul.f32 %v479, 1.442695
      %v557 = vpow.pop %v556
      %v558 = vmul.f32 %v484, 1.442695
      %v559 = vpow.pop %v558
      %v560 = vmul.f32 %v487, 1.442695
      %v561 = vpow.pop %v560
      %v562 = vmul.f32 %v492, 1.442695
      %v563 = vpow.pop %v562
      %v564 = vmul.f32 %v495, 1.442695
      %v565 = vpow.pop %v564
      %v566 = vmul.f32 %v500, 1.442695
      %v567 = vpow.pop %v566
      %v568 = vmul.f32 %v503, 1.442695
      %v569 = vpow.pop %v568
      %v570 = vmul.f32 %v508, 1.442695
      %v571 = vpow.pop %v570
      %v572 = vmul.f32 %v511, 1.442695
      %v573 = vpow.pop %v572
      %v574 = vmul.f32 %v516, 1.442695
      %v575 = vpow.pop %v574
      %v576 = vmul.f32 %v519, 1.442695
      %v577 = vpow.pop %v576
      %v578 = vmul.f32 %v524, 1.442695
      %v579 = vpow.pop %v578
      %v580 = vmul.f32 %v527, 1.442695
      %v581 = vpow.pop %v580
      %v582 = vmul.f32 %v532, 1.442695
      %v583 = vpow.pop %v582
      %v584 = vmul.f32 %v535, 1.442695
      %v585 = vpow.pop %v584
      %v586 = vsub.f32 %v555, 1.0
      %v587 = vsub.f32 %v557, 1.0
      %v588 = vsub.f32 %v559, 1.0
      %v589 = vsub.f32 %v561, 1.0
      %v590 = vsub.f32 %v563, 1.0
      %v591 = vsub.f32 %v565, 1.0
      %v592 = vsub.f32 %v567, 1.0
      %v593 = vsub.f32 %v569, 1.0
      %v594 = vsub.f32 %v571, 1.0
      %v595 = vsub.f32 %v573, 1.0
      %v596 = vsub.f32 %v575, 1.0
      %v597 = vsub.f32 %v577, 1.0
      %v598 = vsub.f32 %v579, 1.0
      %v599 = vsub.f32 %v581, 1.0
      %v600 = vsub.f32 %v583, 1.0
      %v601 = vsub.f32 %v585, 1.0
      %v602 = vsel %vm538, %v476, %v586
      %v603 = vsel %vm539, %v479, %v587
      %v604 = vsel %vm540, %v484, %v588
      %v605 = vsel %vm541, %v487, %v589
      %v606 = vsel %vm542, %v492, %v590
      %v607 = vsel %vm543, %v495, %v591
      %v608 = vsel %vm544, %v500, %v592
      %v609 = vsel %vm545, %v503, %v593
      %v610 = vsel %vm546, %v508, %v594
      %v611 = vsel %vm547, %v511, %v595
      %v612 = vsel %vm548, %v516, %v596
      %v613 = vsel %vm549, %v519, %v597
      %v614 = vsel %vm550, %v524, %v598
      %v615 = vsel %vm551, %v527, %v599
      %v616 = vsel %vm552, %v532, %v600
      %v617 = vsel %vm553, %v535, %v601
      %v618 = vpack.c.bf16 %v603, %v602
      %v619 = vpack.c.bf16 %v605, %v604
      %v620 = vpack.c.bf16 %v607, %v606
      %v621 = vpack.c.bf16 %v609, %v608
      %v622 = vpack.c.bf16 %v611, %v610
      %v623 = vpack.c.bf16 %v613, %v612
      %v624 = vpack.c.bf16 %v615, %v614
      %v625 = vpack.c.bf16 %v617, %v616
      %v626 = vld [vmem:[%s3] sm:$0xf]
      %v627 = vld [vmem:[%s3 + $0x4] sm:$0xf]
      %v628 = vld [vmem:[%s3 + $0x8] sm:$0xf]
      %v629 = vld [vmem:[%s3 + $0xc] sm:$0xf]
      %v630 = vld [vmem:[%s4] sm:$0x1]
      %v632 = vlaneseq
      %v633 = vshrl.u32 %v632, 7
      %v634 = vsub.s32 0, %v633
      %v635 = vrot.slane %v630, %v634
      %v641 = vunpack.c.l.b16 %v626
      %v642 = vunpack.c.l.b16 %v627
      %v643 = vunpack.c.l.b16 %v628
      %v644 = vunpack.c.l.b16 %v629
      %v645 = vpack.c.b16 %v642, %v641
      %v646 = vpack.c.b16 %v644, %v643
      %vm649 = vcmask 261120
      %v651 = vsel %vm649, %v618, 0
      %v654 = vsel %vm649, %v619, 0
      %v657 = vsel %vm649, %v620, 0
      %v660 = vsel %vm649, %v621, 0
      %v663 = vsel %vm649, %v622, 0
      %v666 = vsel %vm649, %v623, 0
      %v669 = vsel %vm649, %v624, 0
      %v672 = vsel %vm649, %v625, 0
      %674 = vmatprep.subr.bf16.mxu0 0
      %675 = vmatpush1.bf16.msra.mxu0 %v645
      %676 = vmatprep.subr.bf16.mxu0 0
      %677 = vmatpush1.bf16.msra.mxu0 %v646
      %678 = vmatprep.subr.bf16.mxu0 0
      %679 = vmatpush1.bf16.msra.mxu0 0
      %680 = vmatprep.subr.bf16.mxu0 0
      %681 = vmatpush1.bf16.msra.mxu0 0
      %682 = vmatprep.subr.bf16.mxu0 0
      %683 = vmatpush1.bf16.msra.mxu0 0
      %684 = vmatprep.subr.bf16.mxu0 0
      %685 = vmatpush1.bf16.msra.mxu0 0
      %686 = vmatprep.subr.bf16.mxu0 0
      %687 = vmatpush1.bf16.msra.mxu0 0
      %688 = vmatprep.subr.bf16.mxu0 0
      %689 = vmatpush1.bf16.msra.mxu0 0
      %690 = vmatprep.subr.bf16.mxu0 0
      %691 = vmatpush1.bf16.msra.mxu0 0
      %692 = vmatprep.subr.bf16.mxu0 0
      %693 = vmatpush1.bf16.msra.mxu0 0
      %694 = vmatprep.subr.bf16.mxu0 0
      %695 = vmatpush1.bf16.msra.mxu0 0
      %696 = vmatprep.subr.bf16.mxu0 0
      %697 = vmatpush1.bf16.msra.mxu0 0
      %698 = vmatprep.subr.bf16.mxu0 0
      %699 = vmatpush1.bf16.msra.mxu0 0
      %700 = vmatprep.subr.bf16.mxu0 0
      %701 = vmatpush1.bf16.msra.mxu0 0
      %702 = vmatprep.subr.bf16.mxu0 0
      %703 = vmatpush1.bf16.msra.mxu0 0
      %704 = vmatprep.subr.bf16.mxu0 0
      %705 = vmatpush1.bf16.msra.mxu0 0
      %706 = vmatprep.mubr.bf16.mxu0 0
      %707 = vmatmul.mubr.bf16.gmra.mrb[0].mxu0 %v651
      %v708 = vpop.f32.mrb[0].mxu0
      %v709 = vadd.f32 %v635, %v708
      %v710 = vpop.f32.mrb[0].mxu0
      %v711 = vpop.f32.mrb[0].mxu0
      %v712 = vadd.f32 %v635, %v711
      %v713 = vpop.f32.mrb[0].mxu0
      %714 = vmatprep.mubr.bf16.mxu0 0
      %715 = vmatmul.mubr.bf16.gmra.mrb[0].mxu0 %v654
      %v716 = vpop.f32.mrb[0].mxu0
      %v717 = vadd.f32 %v635, %v716
      %v718 = vpop.f32.mrb[0].mxu0
      %v719 = vpop.f32.mrb[0].mxu0
      %v720 = vadd.f32 %v635, %v719
      %v721 = vpop.f32.mrb[0].mxu0
      %722 = vmatprep.mubr.bf16.mxu0 0
      %723 = vmatmul.mubr.bf16.gmra.mrb[0].mxu0 %v657
      %v724 = vpop.f32.mrb[0].mxu0
      %v725 = vadd.f32 %v635, %v724
      %v726 = vpop.f32.mrb[0].mxu0
      %v727 = vpop.f32.mrb[0].mxu0
      %v728 = vadd.f32 %v635, %v727
      %v729 = vpop.f32.mrb[0].mxu0
      %730 = vmatprep.mubr.bf16.mxu0 0
      %731 = vmatmul.mubr.bf16.gmra.mrb[0].mxu0 %v660
      %v732 = vpop.f32.mrb[0].mxu0
      %v733 = vadd.f32 %v635, %v732
      %v734 = vpop.f32.mrb[0].mxu0
      %v735 = vpop.f32.mrb[0].mxu0
      %v736 = vadd.f32 %v635, %v735
      %v737 = vpop.f32.mrb[0].mxu0
      %738 = vmatprep.mubr.bf16.mxu0 0
      %739 = vmatmul.mubr.bf16.gmra.mrb[0].mxu0 %v663
      %v740 = vpop.f32.mrb[0].mxu0
      %v741 = vadd.f32 %v635, %v740
      %v742 = vpop.f32.mrb[0].mxu0
      %v743 = vpop.f32.mrb[0].mxu0
      %v744 = vadd.f32 %v635, %v743
      %v745 = vpop.f32.mrb[0].mxu0
      %746 = vmatprep.mubr.bf16.mxu0 0
      %747 = vmatmul.mubr.bf16.gmra.mrb[0].mxu0 %v666
      %v748 = vpop.f32.mrb[0].mxu0
      %v749 = vadd.f32 %v635, %v748
      %v750 = vpop.f32.mrb[0].mxu0
      %v751 = vpop.f32.mrb[0].mxu0
      %v752 = vadd.f32 %v635, %v751
      %v753 = vpop.f32.mrb[0].mxu0
      %754 = vmatprep.mubr.bf16.mxu0 0
      %755 = vmatmul.mubr.bf16.gmra.mrb[0].mxu0 %v669
      %v756 = vpop.f32.mrb[0].mxu0
      %v757 = vadd.f32 %v635, %v756
      %v758 = vpop.f32.mrb[0].mxu0
      %v759 = vpop.f32.mrb[0].mxu0
      %v760 = vadd.f32 %v635, %v759
      %v761 = vpop.f32.mrb[0].mxu0
      %762 = vmatprep.mubr.bf16.mxu0 0
      %763 = vmatmul.mubr.bf16.gmra.mrb[0].mxu0 %v672
      %v764 = vpop.f32.mrb[0].mxu0
      %v765 = vadd.f32 %v635, %v764
      %v766 = vpop.f32.mrb[0].mxu0
      %v767 = vpop.f32.mrb[0].mxu0
      %v768 = vadd.f32 %v635, %v767
      %v769 = vpop.f32.mrb[0].mxu0
      %770 = vdwg.mxu0
      %vm771 = vcmp.gt.f32.partialorder %v709, 0.0
      %vm772 = vcmp.gt.f32.partialorder %v712, 0.0
      %vm773 = vcmp.gt.f32.partialorder %v717, 0.0
      %vm774 = vcmp.gt.f32.partialorder %v720, 0.0
      %vm775 = vcmp.gt.f32.partialorder %v725, 0.0
      %vm776 = vcmp.gt.f32.partialorder %v728, 0.0
      %vm777 = vcmp.gt.f32.partialorder %v733, 0.0
      %vm778 = vcmp.gt.f32.partialorder %v736, 0.0
      %vm779 = vcmp.gt.f32.partialorder %v741, 0.0
      %vm780 = vcmp.gt.f32.partialorder %v744, 0.0
      %vm781 = vcmp.gt.f32.partialorder %v749, 0.0
      %vm782 = vcmp.gt.f32.partialorder %v752, 0.0
      %vm783 = vcmp.gt.f32.partialorder %v757, 0.0
      %vm784 = vcmp.gt.f32.partialorder %v760, 0.0
      %vm785 = vcmp.gt.f32.partialorder %v765, 0.0
      %vm786 = vcmp.gt.f32.partialorder %v768, 0.0
      %v787 = vmul.f32 %v709, 1.442695
      %v788 = vpow.pop %v787
      %v789 = vmul.f32 %v712, 1.442695
      %v790 = vpow.pop %v789
      %v791 = vmul.f32 %v717, 1.442695
      %v792 = vpow.pop %v791
      %v793 = vmul.f32 %v720, 1.442695
      %v794 = vpow.pop %v793
      %v795 = vmul.f32 %v725, 1.442695
      %v796 = vpow.pop %v795
      %v797 = vmul.f32 %v728, 1.442695
      %v798 = vpow.pop %v797
      %v799 = vmul.f32 %v733, 1.442695
      %v800 = vpow.pop %v799
      %v801 = vmul.f32 %v736, 1.442695
      %v802 = vpow.pop %v801
      %v803 = vmul.f32 %v741, 1.442695
      %v804 = vpow.pop %v803
      %v805 = vmul.f32 %v744, 1.442695
      %v806 = vpow.pop %v805
      %v807 = vmul.f32 %v749, 1.442695
      %v808 = vpow.pop %v807
      %v809 = vmul.f32 %v752, 1.442695
      %v810 = vpow.pop %v809
      %v811 = vmul.f32 %v757, 1.442695
      %v812 = vpow.pop %v811
      %v813 = vmul.f32 %v760, 1.442695
      %v814 = vpow.pop %v813
      %v815 = vmul.f32 %v765, 1.442695
      %v816 = vpow.pop %v815
      %v817 = vmul.f32 %v768, 1.442695
      %v818 = vpow.pop %v817
      %v819 = vsub.f32 %v788, 1.0
      %v820 = vsub.f32 %v790, 1.0
      %v821 = vsub.f32 %v792, 1.0
      %v822 = vsub.f32 %v794, 1.0
      %v823 = vsub.f32 %v796, 1.0
      %v824 = vsub.f32 %v798, 1.0
      %v825 = vsub.f32 %v800, 1.0
      %v826 = vsub.f32 %v802, 1.0
      %v827 = vsub.f32 %v804, 1.0
      %v828 = vsub.f32 %v806, 1.0
      %v829 = vsub.f32 %v808, 1.0
      %v830 = vsub.f32 %v810, 1.0
      %v831 = vsub.f32 %v812, 1.0
      %v832 = vsub.f32 %v814, 1.0
      %v833 = vsub.f32 %v816, 1.0
      %v834 = vsub.f32 %v818, 1.0
      %v835 = vsel %vm771, %v709, %v819
      %v836 = vsel %vm772, %v712, %v820
      %v837 = vsel %vm773, %v717, %v821
      %v838 = vsel %vm774, %v720, %v822
      %v839 = vsel %vm775, %v725, %v823
      %v840 = vsel %vm776, %v728, %v824
      %v841 = vsel %vm777, %v733, %v825
      %v842 = vsel %vm778, %v736, %v826
      %v843 = vsel %vm779, %v741, %v827
      %v844 = vsel %vm780, %v744, %v828
      %v845 = vsel %vm781, %v749, %v829
      %v846 = vsel %vm782, %v752, %v830
      %v847 = vsel %vm783, %v757, %v831
      %v848 = vsel %vm784, %v760, %v832
      %v849 = vsel %vm785, %v765, %v833
      %v850 = vsel %vm786, %v768, %v834
      %v851 = vpack.c.bf16 %v836, %v835
      %v852 = vpack.c.bf16 %v838, %v837
      %v853 = vpack.c.bf16 %v840, %v839
      %v854 = vpack.c.bf16 %v842, %v841
      %v855 = vpack.c.bf16 %v844, %v843
      %v856 = vpack.c.bf16 %v846, %v845
      %v857 = vpack.c.bf16 %v848, %v847
      %v858 = vpack.c.bf16 %v850, %v849
      %v859 = vld [vmem:[%s5] sm:$0xf]
      %v860 = vld [vmem:[%s5 + $0x4] sm:$0xf]
      %v861 = vld [vmem:[%s5 + $0x8] sm:$0xf]
      %v862 = vld [vmem:[%s5 + $0xc] sm:$0xf]
      %v867 = vunpack.c.l.b16 %v859
      %v868 = vunpack.c.l.b16 %v860
      %v869 = vunpack.c.l.b16 %v861
      %v870 = vunpack.c.l.b16 %v862
      %v871 = vpack.c.b16 %v868, %v867
      %v872 = vpack.c.b16 %v870, %v869
      %v876 = vsel %vm649, %v851, 0
      %v879 = vsel %vm649, %v852, 0
      %v882 = vsel %vm649, %v853, 0
      %v885 = vsel %vm649, %v854, 0
      %v888 = vsel %vm649, %v855, 0
      %v891 = vsel %vm649, %v856, 0
      %v894 = vsel %vm649, %v857, 0
      %v897 = vsel %vm649, %v858, 0
      %899 = vmatprep.subr.bf16.mxu0 0
      %900 = vmatpush1.bf16.msra.mxu0 %v871
      %901 = vmatprep.subr.bf16.mxu0 0
      %902 = vmatpush1.bf16.msra.mxu0 %v872
      %903 = vmatprep.subr.bf16.mxu0 0
      %904 = vmatpush1.bf16.msra.mxu0 0
      %905 = vmatprep.subr.bf16.mxu0 0
      %906 = vmatpush1.bf16.msra.mxu0 0
      %907 = vmatprep.subr.bf16.mxu0 0
      %908 = vmatpush1.bf16.msra.mxu0 0
      %909 = vmatprep.subr.bf16.mxu0 0
      %910 = vmatpush1.bf16.msra.mxu0 0
      %911 = vmatprep.subr.bf16.mxu0 0
      %912 = vmatpush1.bf16.msra.mxu0 0
      %913 = vmatprep.subr.bf16.mxu0 0
      %914 = vmatpush1.bf16.msra.mxu0 0
      %915 = vmatprep.subr.bf16.mxu0 0
      %916 = vmatpush1.bf16.msra.mxu0 0
      %917 = vmatprep.subr.bf16.mxu0 0
      %918 = vmatpush1.bf16.msra.mxu0 0
      %919 = vmatprep.subr.bf16.mxu0 0
      %920 = vmatpush1.bf16.msra.mxu0 0
      %921 = vmatprep.subr.bf16.mxu0 0
      %922 = vmatpush1.bf16.msra.mxu0 0
      %923 = vmatprep.subr.bf16.mxu0 0
      %924 = vmatpush1.bf16.msra.mxu0 0
      %925 = vmatprep.subr.bf16.mxu0 0
      %926 = vmatpush1.bf16.msra.mxu0 0
      %927 = vmatprep.subr.bf16.mxu0 0
      %928 = vmatpush1.bf16.msra.mxu0 0
      %929 = vmatprep.subr.bf16.mxu0 0
      %930 = vmatpush1.bf16.msra.mxu0 0
      %931 = vmatprep.mubr.bf16.mxu0 0
      %932 = vmatmul.mubr.bf16.gmra.mrb[0].mxu0 %v876
      %v933 = vpop.f32.mrb[0].mxu0
      %v934 = vadd.f32 0.0, %v933
      %v935 = vpop.f32.mrb[0].mxu0
      %v936 = vpop.f32.mrb[0].mxu0
      %v937 = vadd.f32 0.0, %v936
      %v938 = vpop.f32.mrb[0].mxu0
      %939 = vmatprep.mubr.bf16.mxu0 0
      %940 = vmatmul.mubr.bf16.gmra.mrb[0].mxu0 %v879
      %v941 = vpop.f32.mrb[0].mxu0
      %v942 = vadd.f32 0.0, %v941
      %v943 = vpop.f32.mrb[0].mxu0
      %v944 = vpop.f32.mrb[0].mxu0
      %v945 = vadd.f32 0.0, %v944
      %v946 = vpop.f32.mrb[0].mxu0
      %947 = vmatprep.mubr.bf16.mxu0 0
      %948 = vmatmul.mubr.bf16.gmra.mrb[0].mxu0 %v882
      %v949 = vpop.f32.mrb[0].mxu0
      %v950 = vadd.f32 0.0, %v949
      %v951 = vpop.f32.mrb[0].mxu0
      %v952 = vpop.f32.mrb[0].mxu0
      %v953 = vadd.f32 0.0, %v952
      %v954 = vpop.f32.mrb[0].mxu0
      %955 = vmatprep.mubr.bf16.mxu0 0
      %956 = vmatmul.mubr.bf16.gmra.mrb[0].mxu0 %v885
      %v957 = vpop.f32.mrb[0].mxu0
      %v958 = vadd.f32 0.0, %v957
      %v959 = vpop.f32.mrb[0].mxu0
      %v960 = vpop.f32.mrb[0].mxu0
      %v961 = vadd.f32 0.0, %v960
      %v962 = vpop.f32.mrb[0].mxu0
      %963 = vmatprep.mubr.bf16.mxu0 0
      %964 = vmatmul.mubr.bf16.gmra.mrb[0].mxu0 %v888
      %v965 = vpop.f32.mrb[0].mxu0
      %v966 = vadd.f32 0.0, %v965
      %v967 = vpop.f32.mrb[0].mxu0
      %v968 = vpop.f32.mrb[0].mxu0
      %v969 = vadd.f32 0.0, %v968
      %v970 = vpop.f32.mrb[0].mxu0
      %971 = vmatprep.mubr.bf16.mxu0 0
      %972 = vmatmul.mubr.bf16.gmra.mrb[0].mxu0 %v891
      %v973 = vpop.f32.mrb[0].mxu0
      %v974 = vadd.f32 0.0, %v973
      %v975 = vpop.f32.mrb[0].mxu0
      %v976 = vpop.f32.mrb[0].mxu0
      %v977 = vadd.f32 0.0, %v976
      %v978 = vpop.f32.mrb[0].mxu0
      %979 = vmatprep.mubr.bf16.mxu0 0
      %980 = vmatmul.mubr.bf16.gmra.mrb[0].mxu0 %v894
      %v981 = vpop.f32.mrb[0].mxu0
      %v982 = vadd.f32 0.0, %v981
      %v983 = vpop.f32.mrb[0].mxu0
      %v984 = vpop.f32.mrb[0].mxu0
      %v985 = vadd.f32 0.0, %v984
      %v986 = vpop.f32.mrb[0].mxu0
      %987 = vmatprep.mubr.bf16.mxu0 0
      %988 = vmatmul.mubr.bf16.gmra.mrb[0].mxu0 %v897
      %v989 = vpop.f32.mrb[0].mxu0
      %v990 = vadd.f32 0.0, %v989
      %v991 = vpop.f32.mrb[0].mxu0
      %v992 = vpop.f32.mrb[0].mxu0
      %v993 = vadd.f32 0.0, %v992
      %v994 = vpop.f32.mrb[0].mxu0
      %995 = vdwg.mxu0
      %v996 = vpack.c.bf16 %v937, %v934
      %v997 = vpack.c.bf16 %v945, %v942
      %v998 = vpack.c.bf16 %v953, %v950
      %v999 = vpack.c.bf16 %v961, %v958
      %v1000 = vpack.c.bf16 %v969, %v966
      %v1001 = vpack.c.bf16 %v977, %v974
      %v1002 = vpack.c.bf16 %v985, %v982
      %v1003 = vpack.c.bf16 %v993, %v990
      %v1012 = vunpack.c.l.b16 %v996
      %v1013 = vunpack.c.h.b16 %v996
      %v1014 = vunpack.c.l.b16 %v997
      %v1015 = vunpack.c.h.b16 %v997
      %v1016 = vunpack.c.l.b16 %v998
      %v1017 = vunpack.c.h.b16 %v998
      %v1018 = vunpack.c.l.b16 %v999
      %v1019 = vunpack.c.h.b16 %v999
      %v1020 = vunpack.c.l.b16 %v1000
      %v1021 = vunpack.c.h.b16 %v1000
      %v1022 = vunpack.c.l.b16 %v1001
      %v1023 = vunpack.c.h.b16 %v1001
      %v1024 = vunpack.c.l.b16 %v1002
      %v1025 = vunpack.c.h.b16 %v1002
      %v1026 = vunpack.c.l.b16 %v1003
      %v1027 = vunpack.c.h.b16 %v1003
      %v1028 = vpack.c.b16 %v1012, %v1012
      %v1029 = vpack.c.b16 %v1013, %v1013
      %v1030 = vpack.c.b16 %v1014, %v1014
      %v1031 = vpack.c.b16 %v1015, %v1015
      %v1032 = vpack.c.b16 %v1016, %v1016
      %v1033 = vpack.c.b16 %v1017, %v1017
      %v1034 = vpack.c.b16 %v1018, %v1018
      %v1035 = vpack.c.b16 %v1019, %v1019
      %v1036 = vpack.c.b16 %v1020, %v1020
      %v1037 = vpack.c.b16 %v1021, %v1021
      %v1038 = vpack.c.b16 %v1022, %v1022
      %v1039 = vpack.c.b16 %v1023, %v1023
      %v1040 = vpack.c.b16 %v1024, %v1024
      %v1041 = vpack.c.b16 %v1025, %v1025
      %v1042 = vpack.c.b16 %v1026, %v1026
      %v1043 = vpack.c.b16 %v1027, %v1027
      %vm1060 = vcmask 257024
      %1061 = vst.msk [vmem:[%s356] sm:$0xf] %vm1060, %v1028
      %1062 = vst.msk [vmem:[%s356 + $0x4] sm:$0xf] %vm1060, %v1029
      %1063 = vst.msk [vmem:[%s356 + $0x8] sm:$0xf] %vm1060, %v1030
      %1064 = vst.msk [vmem:[%s356 + $0xc] sm:$0xf] %vm1060, %v1031
      %1065 = vst.msk [vmem:[%s356 + $0x10] sm:$0xf] %vm1060, %v1032
      %1066 = vst.msk [vmem:[%s356 + $0x14] sm:$0xf] %vm1060, %v1033
      %1067 = vst.msk [vmem:[%s356 + $0x18] sm:$0xf] %vm1060, %v1034
      %1068 = vst.msk [vmem:[%s356 + $0x1c] sm:$0xf] %vm1060, %v1035
      %1069 = vst.msk [vmem:[%s356 + $0x20] sm:$0xf] %vm1060, %v1036
      %1070 = vst.msk [vmem:[%s356 + $0x24] sm:$0xf] %vm1060, %v1037
      %1071 = vst.msk [vmem:[%s356 + $0x28] sm:$0xf] %vm1060, %v1038
      %1072 = vst.msk [vmem:[%s356 + $0x2c] sm:$0xf] %vm1060, %v1039
      %1073 = vst.msk [vmem:[%s356 + $0x30] sm:$0xf] %vm1060, %v1040
      %1074 = vst.msk [vmem:[%s356 + $0x34] sm:$0xf] %vm1060, %v1041
      %1075 = vst.msk [vmem:[%s356 + $0x38] sm:$0xf] %vm1060, %v1042
      %1076 = vst.msk [vmem:[%s356 + $0x3c] sm:$0xf] %vm1060, %v1043
      %1077 = vrot.lane.b32.xlu0 %v1028, 96
      %v1078 = vpop.permute.xlu0 %1077
      %1079 = vrot.lane.b32.xlu0 %v1029, 96
      %v1080 = vpop.permute.xlu0 %1079
      %1081 = vrot.lane.b32.xlu0 %v1030, 96
      %v1082 = vpop.permute.xlu0 %1081
      %1083 = vrot.lane.b32.xlu0 %v1031, 96
      %v1084 = vpop.permute.xlu0 %1083
      %1085 = vrot.lane.b32.xlu0 %v1032, 96
      %v1086 = vpop.permute.xlu0 %1085
      %1087 = vrot.lane.b32.xlu0 %v1033, 96
      %v1088 = vpop.permute.xlu0 %1087
      %1089 = vrot.lane.b32.xlu0 %v1034, 96
      %v1090 = vpop.permute.xlu0 %1089
      %1091 = vrot.lane.b32.xlu0 %v1035, 96
      %v1092 = vpop.permute.xlu0 %1091
      %1093 = vrot.lane.b32.xlu0 %v1036, 96
      %v1094 = vpop.permute.xlu0 %1093
      %1095 = vrot.lane.b32.xlu0 %v1037, 96
      %v1096 = vpop.permute.xlu0 %1095
      %1097 = vrot.lane.b32.xlu0 %v1038, 96
      %v1098 = vpop.permute.xlu0 %1097
      %1099 = vrot.lane.b32.xlu0 %v1039, 96
      %v1100 = vpop.permute.xlu0 %1099
      %1101 = vrot.lane.b32.xlu0 %v1040, 96
      %v1102 = vpop.permute.xlu0 %1101
      %1103 = vrot.lane.b32.xlu0 %v1041, 96
      %v1104 = vpop.permute.xlu0 %1103
      %1105 = vrot.lane.b32.xlu0 %v1042, 96
      %v1106 = vpop.permute.xlu0 %1105
      %1107 = vrot.lane.b32.xlu0 %v1043, 96
      %v1108 = vpop.permute.xlu0 %1107
      %1125 = vst.msk [vmem:[%s362] sm:$0xf] %vm1060, %v1078
      %1126 = vst.msk [vmem:[%s362 + $0x4] sm:$0xf] %vm1060, %v1080
      %1127 = vst.msk [vmem:[%s362 + $0x8] sm:$0xf] %vm1060, %v1082
      %1128 = vst.msk [vmem:[%s362 + $0xc] sm:$0xf] %vm1060, %v1084
      %1129 = vst.msk [vmem:[%s362 + $0x10] sm:$0xf] %vm1060, %v1086
      %1130 = vst.msk [vmem:[%s362 + $0x14] sm:$0xf] %vm1060, %v1088
      %1131 = vst.msk [vmem:[%s362 + $0x18] sm:$0xf] %vm1060, %v1090
      %1132 = vst.msk [vmem:[%s362 + $0x1c] sm:$0xf] %vm1060, %v1092
      %1133 = vst.msk [vmem:[%s362 + $0x20] sm:$0xf] %vm1060, %v1094
      %1134 = vst.msk [vmem:[%s362 + $0x24] sm:$0xf] %vm1060, %v1096
      %1135 = vst.msk [vmem:[%s362 + $0x28] sm:$0xf] %vm1060, %v1098
      %1136 = vst.msk [vmem:[%s362 + $0x2c] sm:$0xf] %vm1060, %v1100
      %1137 = vst.msk [vmem:[%s362 + $0x30] sm:$0xf] %vm1060, %v1102
      %1138 = vst.msk [vmem:[%s362 + $0x34] sm:$0xf] %vm1060, %v1104
      %1139 = vst.msk [vmem:[%s362 + $0x38] sm:$0xf] %vm1060, %v1106
      %1140 = vst.msk [vmem:[%s362 + $0x3c] sm:$0xf] %vm1060, %v1108
      %1141 = vrot.lane.b32.xlu0 %v1028, 64
      %v1142 = vpop.permute.xlu0 %1141
      %1143 = vrot.lane.b32.xlu0 %v1029, 64
      %v1144 = vpop.permute.xlu0 %1143
      %1145 = vrot.lane.b32.xlu0 %v1030, 64
      %v1146 = vpop.permute.xlu0 %1145
      %1147 = vrot.lane.b32.xlu0 %v1031, 64
      %v1148 = vpop.permute.xlu0 %1147
      %1149 = vrot.lane.b32.xlu0 %v1032, 64
      %v1150 = vpop.permute.xlu0 %1149
      %1151 = vrot.lane.b32.xlu0 %v1033, 64
      %v1152 = vpop.permute.xlu0 %1151
      %1153 = vrot.lane.b32.xlu0 %v1034, 64
      %v1154 = vpop.permute.xlu0 %1153
      %1155 = vrot.lane.b32.xlu0 %v1035, 64
      %v1156 = vpop.permute.xlu0 %1155
      %1157 = vrot.lane.b32.xlu0 %v1036, 64
      %v1158 = vpop.permute.xlu0 %1157
      %1159 = vrot.lane.b32.xlu0 %v1037, 64
      %v1160 = vpop.permute.xlu0 %1159
      %1161 = vrot.lane.b32.xlu0 %v1038, 64
      %v1162 = vpop.permute.xlu0 %1161
      %1163 = vrot.lane.b32.xlu0 %v1039, 64
      %v1164 = vpop.permute.xlu0 %1163
      %1165 = vrot.lane.b32.xlu0 %v1040, 64
      %v1166 = vpop.permute.xlu0 %1165
      %1167 = vrot.lane.b32.xlu0 %v1041, 64
      %v1168 = vpop.permute.xlu0 %1167
      %1169 = vrot.lane.b32.xlu0 %v1042, 64
      %v1170 = vpop.permute.xlu0 %1169
      %1171 = vrot.lane.b32.xlu0 %v1043, 64
      %v1172 = vpop.permute.xlu0 %1171
      %1189 = vst.msk [vmem:[%s368] sm:$0xf] %vm1060, %v1142
      %1190 = vst.msk [vmem:[%s368 + $0x4] sm:$0xf] %vm1060, %v1144
      %1191 = vst.msk [vmem:[%s368 + $0x8] sm:$0xf] %vm1060, %v1146
      %1192 = vst.msk [vmem:[%s368 + $0xc] sm:$0xf] %vm1060, %v1148
      %1193 = vst.msk [vmem:[%s368 + $0x10] sm:$0xf] %vm1060, %v1150
      %1194 = vst.msk [vmem:[%s368 + $0x14] sm:$0xf] %vm1060, %v1152
      %1195 = vst.msk [vmem:[%s368 + $0x18] sm:$0xf] %vm1060, %v1154
      %1196 = vst.msk [vmem:[%s368 + $0x1c] sm:$0xf] %vm1060, %v1156
      %1197 = vst.msk [vmem:[%s368 + $0x20] sm:$0xf] %vm1060, %v1158
      %1198 = vst.msk [vmem:[%s368 + $0x24] sm:$0xf] %vm1060, %v1160
      %1199 = vst.msk [vmem:[%s368 + $0x28] sm:$0xf] %vm1060, %v1162
      %1200 = vst.msk [vmem:[%s368 + $0x2c] sm:$0xf] %vm1060, %v1164
      %1201 = vst.msk [vmem:[%s368 + $0x30] sm:$0xf] %vm1060, %v1166
      %1202 = vst.msk [vmem:[%s368 + $0x34] sm:$0xf] %vm1060, %v1168
      %1203 = vst.msk [vmem:[%s368 + $0x38] sm:$0xf] %vm1060, %v1170
      %1204 = vst.msk [vmem:[%s368 + $0x3c] sm:$0xf] %vm1060, %v1172
      %1221 = vrot.lane.b32.xlu0 %v934, 32
      %v1222 = vpop.permute.xlu0 %1221
      %1223 = vrot.lane.b32.xlu0 %v937, 32
      %v1224 = vpop.permute.xlu0 %1223
      %1225 = vrot.lane.b32.xlu0 %v942, 32
      %v1226 = vpop.permute.xlu0 %1225
      %1227 = vrot.lane.b32.xlu0 %v945, 32
      %v1228 = vpop.permute.xlu0 %1227
      %1229 = vrot.lane.b32.xlu0 %v950, 32
      %v1230 = vpop.permute.xlu0 %1229
      %1231 = vrot.lane.b32.xlu0 %v953, 32
      %v1232 = vpop.permute.xlu0 %1231
      %1233 = vrot.lane.b32.xlu0 %v958, 32
      %v1234 = vpop.permute.xlu0 %1233
      %1235 = vrot.lane.b32.xlu0 %v961, 32
      %v1236 = vpop.permute.xlu0 %1235
      %1237 = vrot.lane.b32.xlu0 %v966, 32
      %v1238 = vpop.permute.xlu0 %1237
      %1239 = vrot.lane.b32.xlu0 %v969, 32
      %v1240 = vpop.permute.xlu0 %1239
      %1241 = vrot.lane.b32.xlu0 %v974, 32
      %v1242 = vpop.permute.xlu0 %1241
      %1243 = vrot.lane.b32.xlu0 %v977, 32
      %v1244 = vpop.permute.xlu0 %1243
      %1245 = vrot.lane.b32.xlu0 %v982, 32
      %v1246 = vpop.permute.xlu0 %1245
      %1247 = vrot.lane.b32.xlu0 %v985, 32
      %v1248 = vpop.permute.xlu0 %1247
      %1249 = vrot.lane.b32.xlu0 %v990, 32
      %v1250 = vpop.permute.xlu0 %1249
      %1251 = vrot.lane.b32.xlu0 %v993, 32
      %v1252 = vpop.permute.xlu0 %1251
      %vm1269 = vcmask 23552
      %1270 = vst.msk [vmem:[%s374] sm:$0xff] %vm1269, %v1222
      %1271 = vst.msk [vmem:[%s374 + $0x8] sm:$0xff] %vm1269, %v1224
      %1272 = vst.msk [vmem:[%s374 + $0x10] sm:$0xff] %vm1269, %v1226
      %1273 = vst.msk [vmem:[%s374 + $0x18] sm:$0xff] %vm1269, %v1228
      %1274 = vst.msk [vmem:[%s374 + $0x20] sm:$0xff] %vm1269, %v1230
      %1275 = vst.msk [vmem:[%s374 + $0x28] sm:$0xff] %vm1269, %v1232
      %1276 = vst.msk [vmem:[%s374 + $0x30] sm:$0xff] %vm1269, %v1234
      %1277 = vst.msk [vmem:[%s374 + $0x38] sm:$0xff] %vm1269, %v1236
      %1278 = vst.msk [vmem:[%s374 + $0x40] sm:$0xff] %vm1269, %v1238
      %1279 = vst.msk [vmem:[%s374 + $0x48] sm:$0xff] %vm1269, %v1240
      %1280 = vst.msk [vmem:[%s374 + $0x50] sm:$0xff] %vm1269, %v1242
      %1281 = vst.msk [vmem:[%s374 + $0x58] sm:$0xff] %vm1269, %v1244
      %1282 = vst.msk [vmem:[%s374 + $0x60] sm:$0xff] %vm1269, %v1246
      %1283 = vst.msk [vmem:[%s374 + $0x68] sm:$0xff] %vm1269, %v1248
      %1284 = vst.msk [vmem:[%s374 + $0x70] sm:$0xff] %vm1269, %v1250
      %1285 = vst.msk [vmem:[%s374 + $0x78] sm:$0xff] %vm1269, %v1252
      %s1286 = smul.u32 16, %s21
      %p1287 = scmp.lt.s32.totalorder %s1286, 47
      %s1288 = scalar_select %p1287, %s1286, 47
      %s1289 = smul.addr %s1288, 4
      %s1290 = scalar_lea.vmem %s6, %s1289
      %s1291 = smul.u32 16, %s21
      %p1292 = scmp.lt.s32.totalorder %s1291, 47
      %s1293 = scalar_select %p1292, %s1291, 47
      %s1294 = smul.addr %s1293, 4
      %s1295 = scalar_lea.vmem %s7, %s1294
      %s1296 = smul.u32 16, %s21
      %p1297 = scmp.lt.s32.totalorder %s1296, 47
      %s1298 = scalar_select %p1297, %s1296, 47
      %s1299 = smul.addr %s1298, 4
      %s1300 = scalar_lea.vmem %s8, %s1299
      %s1301 = smul.u32 16, %s21
      %p1302 = scmp.lt.s32.totalorder %s1301, 47
      %s1303 = scalar_select %p1302, %s1301, 47
      %s1304 = smul.addr %s1303, 8
      %s1305 = scalar_lea.vmem %s9, %s1304
      // Predicated region
      $region45: #{graph_transformer_layer.3} parent=43 // pred_check
        %p1306 = pneg %p170
      $region46: #{graph_transformer_layer.3} parent=43 // pred_check_branch
        %1308 = sbr.rel (%p1306) target = $region48
      $region47: #{graph_transformer_layer.3} parent=43 // pred_region
        %s1309 = smul.u32 16, %s21
      $region48: #{graph_transformer_layer.3} parent=43 // pred_fallthru
        _
      // Predicated region
      $region49: #{graph_transformer_layer.3} parent=43 // pred_check
        %p1310 = pneg %p196
      $region50: #{graph_transformer_layer.3} parent=43 // pred_check_branch
        %1312 = sbr.rel (%p1310) target = $region52
      $region51: #{graph_transformer_layer.3} parent=43 // pred_region
        %s1313 = smul.u32 16, %s21
      $region52: #{graph_transformer_layer.3} parent=43 // pred_fallthru
        _
      // Predicated region
      $region53: #{graph_transformer_layer.3} parent=43 // pred_check
        %p1314 = pneg %p222
      $region54: #{graph_transformer_layer.3} parent=43 // pred_check_branch
        %1316 = sbr.rel (%p1314) target = $region56
      $region55: #{graph_transformer_layer.3} parent=43 // pred_region
        %s1317 = smul.u32 16, %s21
      $region56: #{graph_transformer_layer.3} parent=43 // pred_fallthru
        _
      // Predicated region
      $region57: #{graph_transformer_layer.3} parent=43 // pred_check
        %p1318 = pneg %p248
      $region58: #{graph_transformer_layer.3} parent=43 // pred_check_branch
        %1320 = sbr.rel (%p1318) target = $region60
      $region59: #{graph_transformer_layer.3} parent=43 // pred_region
        %s1321 = smul.u32 16, %s21
      $region60: #{graph_transformer_layer.3} parent=43 // pred_fallthru
        _
    $region44: #{graph_transformer_layer.3} parent=5 // pred_fallthru
      _
    %p1322 = scmp.le.s32.totalorder 2, %s16
    // Predicated region
    $region61: #{graph_transformer_layer.3} parent=5 // pred_check
      %p1323 = pneg %p1322
    $region62: #{graph_transformer_layer.3} parent=5 // pred_check_branch
      %1325 = sbr.rel (%p1323) target = $region64
    $region63: #{graph_transformer_layer.3} parent=5 // pred_region
      %s1326 = ssub.s32 %s16, 2
      // Predicated region
      $region65: #{graph_transformer_layer.3} parent=63 // pred_check
        %p1327 = pneg %p176
      $region66: #{graph_transformer_layer.3} parent=63 // pred_check_branch
        %1329 = sbr.rel (%p1327) target = $region68
      $region67: #{graph_transformer_layer.3} parent=63 // pred_region
        %s1330 = smul.u32 16, %s22
        %p1331 = scmp.lt.s32.totalorder %s1330, 47
        %s1332 = scalar_select %p1331, %s1330, 47
        %s1333 = smul.addr %s1332, 4
        %s1334 = scalar_lea.vmem %s6, %s1333
      $region68: #{graph_transformer_layer.3} parent=63 // pred_fallthru
        _
      // Predicated region
      $region69: #{graph_transformer_layer.3} parent=63 // pred_check
        %p1335 = pneg %p202
      $region70: #{graph_transformer_layer.3} parent=63 // pred_check_branch
        %1337 = sbr.rel (%p1335) target = $region72
      $region71: #{graph_transformer_layer.3} parent=63 // pred_region
        %s1338 = smul.u32 16, %s22
        %p1339 = scmp.lt.s32.totalorder %s1338, 47
        %s1340 = scalar_select %p1339, %s1338, 47
        %s1341 = smul.addr %s1340, 4
        %s1342 = scalar_lea.vmem %s7, %s1341
      $region72: #{graph_transformer_layer.3} parent=63 // pred_fallthru
        _
      // Predicated region
      $region73: #{graph_transformer_layer.3} parent=63 // pred_check
        %p1343 = pneg %p228
      $region74: #{graph_transformer_layer.3} parent=63 // pred_check_branch
        %1345 = sbr.rel (%p1343) target = $region76
      $region75: #{graph_transformer_layer.3} parent=63 // pred_region
        %s1346 = smul.u32 16, %s22
        %p1347 = scmp.lt.s32.totalorder %s1346, 47
        %s1348 = scalar_select %p1347, %s1346, 47
        %s1349 = smul.addr %s1348, 4
        %s1350 = scalar_lea.vmem %s8, %s1349
      $region76: #{graph_transformer_layer.3} parent=63 // pred_fallthru
        _
      // Predicated region
      $region77: #{graph_transformer_layer.3} parent=63 // pred_check
        %p1351 = pneg %p254
      $region78: #{graph_transformer_layer.3} parent=63 // pred_check_branch
        %1353 = sbr.rel (%p1351) target = $region80
      $region79: #{graph_transformer_layer.3} parent=63 // pred_region
        %s1354 = smul.u32 16, %s22
        %p1355 = scmp.lt.s32.totalorder %s1354, 47
        %s1356 = scalar_select %p1355, %s1354, 47
        %s1357 = smul.addr %s1356, 8
        %s1358 = scalar_lea.vmem %s9, %s1357
      $region80: #{graph_transformer_layer.3} parent=63 // pred_fallthru
        _
    $region64: #{graph_transformer_layer.3} parent=5 // pred_fallthru
      _
  $region6: #{graph_transformer_layer.3} parent=0 // loop_footer
    %s20 = sadd.s32 1, %s16
  $region7: #{graph_transformer_layer.3} parent=0 // loop_footer_branch
    %15 = sbr.rel target = $region3
  $region8: #{graph_transformer_layer.3} parent=0 // loop_exit
    _

// kernel: graph_transformer_layer.5
$region0: #{graph_transformer_layer.5}
  #allocation0 [shape = 'u32[]', space=smem, size = 0x4, offset = 0x4, fixed_abs, tag = 'smem constant byte address 0x4 - core index']
  #allocation1 [shape = 'u32[144,128]{1,0:T(1,128)}', space=vmem, size = 0x12000, scoped, tag = 'internal scratch']
  %s0 = inlined_call_operand.vmem [shape: f32[384,32], index: 0, kind: input, shape index: {}]
  %s1 = inlined_call_operand.vmem [shape: f32[1,32], index: 1, kind: input, shape index: {}]
  %s2 = inlined_call_operand.vmem [shape: f32[1,32], index: 2, kind: input, shape index: {}]
  %s3 = inlined_call_operand.vmem [shape: bf16[32,64], index: 3, kind: input, shape index: {}]
  %s4 = inlined_call_operand.vmem [shape: f32[1,64], index: 4, kind: input, shape index: {}]
  %s5 = inlined_call_operand.vmem [shape: bf16[64,32], index: 5, kind: input, shape index: {}]
  %s6 = inlined_call_operand.vmem [shape: f32[1,32], index: 6, kind: input, shape index: {}]
  %s7 = inlined_call_operand.vmem [shape: f32[1,32], index: 7, kind: input, shape index: {}]
  %s8 = inlined_call_operand.vmem [shape: f32[1,32], index: 8, kind: input, shape index: {}]
  %s9 = inlined_call_operand.vmem [shape: f32[384,32], index: 9, kind: output, shape index: {}]
  %s10 = sld [smem:[#allocation0]]
  $region46: #{graph_transformer_layer.5} parent=0
    _
  %s12 = ssub.s32 1, %s10
  %s13 = scalar_select 0, %s12, %s10
  // Predicated region
  $region2: #{graph_transformer_layer.5} parent=0 // pred_check
    _
  $region3: #{graph_transformer_layer.5} parent=0 // pred_check_branch
    %15 = sbr.rel (0) target = $region5
  $region4: #{graph_transformer_layer.5} parent=0 // pred_region
    _
  $region5: #{graph_transformer_layer.5} parent=0 // pred_fallthru
    _
  // Predicated region
  $region6: #{graph_transformer_layer.5} parent=0 // pred_check
    _
  $region7: #{graph_transformer_layer.5} parent=0 // pred_check_branch
    %17 = sbr.rel (0) target = $region9
  $region8: #{graph_transformer_layer.5} parent=0 // pred_region
    _
  $region9: #{graph_transformer_layer.5} parent=0 // pred_fallthru
    _
  // Predicated region
  $region10: #{graph_transformer_layer.5} parent=0 // pred_check
    _
  $region11: #{graph_transformer_layer.5} parent=0 // pred_check_branch
    %19 = sbr.rel (0) target = $region13
  $region12: #{graph_transformer_layer.5} parent=0 // pred_region
    _
  $region13: #{graph_transformer_layer.5} parent=0 // pred_fallthru
    _
  // Predicated region
  $region14: #{graph_transformer_layer.5} parent=0 // pred_check
    _
  $region15: #{graph_transformer_layer.5} parent=0 // pred_check_branch
    %21 = sbr.rel (0) target = $region17
  $region16: #{graph_transformer_layer.5} parent=0 // pred_region
    _
  $region17: #{graph_transformer_layer.5} parent=0 // pred_fallthru
    _
  // Predicated region
  $region18: #{graph_transformer_layer.5} parent=0 // pred_check
    _
  $region19: #{graph_transformer_layer.5} parent=0 // pred_check_branch
    %23 = sbr.rel (0) target = $region21
  $region20: #{graph_transformer_layer.5} parent=0 // pred_region
    _
  $region21: #{graph_transformer_layer.5} parent=0 // pred_fallthru
    _
  // Predicated region
  $region22: #{graph_transformer_layer.5} parent=0 // pred_check
    _
  $region23: #{graph_transformer_layer.5} parent=0 // pred_check_branch
    %25 = sbr.rel (0) target = $region25
  $region24: #{graph_transformer_layer.5} parent=0 // pred_region
    _
  $region25: #{graph_transformer_layer.5} parent=0 // pred_fallthru
    _
  // Predicated region
  $region26: #{graph_transformer_layer.5} parent=0 // pred_check
    _
  $region27: #{graph_transformer_layer.5} parent=0 // pred_check_branch
    %27 = sbr.rel (0) target = $region29
  $region28: #{graph_transformer_layer.5} parent=0 // pred_region
    _
  $region29: #{graph_transformer_layer.5} parent=0 // pred_fallthru
    _
  // Predicated region
  $region30: #{graph_transformer_layer.5} parent=0 // pred_check
    _
  $region31: #{graph_transformer_layer.5} parent=0 // pred_check_branch
    %29 = sbr.rel (0) target = $region33
  $region32: #{graph_transformer_layer.5} parent=0 // pred_region
    _
  $region33: #{graph_transformer_layer.5} parent=0 // pred_fallthru
    _
  // Predicated region
  $region34: #{graph_transformer_layer.5} parent=0 // pred_check
    _
  $region35: #{graph_transformer_layer.5} parent=0 // pred_check_branch
    %31 = sbr.rel (0) target = $region37
  $region36: #{graph_transformer_layer.5} parent=0 // pred_region
    _
  $region37: #{graph_transformer_layer.5} parent=0 // pred_fallthru
    _
  %v33 = vlaneseq
  %v34 = vshrl.u32 %v33, 7
  %v35 = vadd.s32 %v34, 8
  %v36 = vadd.s32 %v34, 16
  %v37 = vadd.s32 %v34, 24
  %v38 = vadd.s32 %v34, 32
  %v39 = vadd.s32 %v34, 40
  %v40 = vadd.s32 %v34, 48
  %v41 = vadd.s32 %v34, 56
  %v42 = vadd.s32 %v34, 64
  %v43 = vadd.s32 %v34, 72
  %v44 = vadd.s32 %v34, 80
  %v45 = vadd.s32 %v34, 88
  %v46 = vadd.s32 %v34, 96
  %v47 = vadd.s32 %v34, 104
  %v48 = vadd.s32 %v34, 112
  %v49 = vadd.s32 %v34, 120
  %v50 = vadd.s32 %v34, 128
  %v51 = vadd.s32 %v34, 136
  %v52 = vadd.s32 %v34, 144
  %v53 = vadd.s32 %v34, 152
  %v54 = vadd.s32 %v34, 160
  %v55 = vadd.s32 %v34, 168
  %v56 = vadd.s32 %v34, 176
  %v57 = vadd.s32 %v34, 184
  %v58 = vadd.s32 %v34, 192
  %v59 = vadd.s32 %v34, 200
  %v60 = vadd.s32 %v34, 208
  %v61 = vadd.s32 %v34, 216
  %v62 = vadd.s32 %v34, 224
  %v63 = vadd.s32 %v34, 232
  %v64 = vadd.s32 %v34, 240
  %v65 = vadd.s32 %v34, 248
  %v66 = vadd.s32 %v34, 256
  %v67 = vadd.s32 %v34, 264
  %v68 = vadd.s32 %v34, 272
  %v69 = vadd.s32 %v34, 280
  %v70 = vadd.s32 %v34, 288
  %v71 = vadd.s32 %v34, 296
  %v72 = vadd.s32 %v34, 304
  %v73 = vadd.s32 %v34, 312
  %v74 = vadd.s32 %v34, 320
  %v75 = vadd.s32 %v34, 328
  %v76 = vadd.s32 %v34, 336
  %v77 = vadd.s32 %v34, 344
  %v78 = vadd.s32 %v34, 352
  %v79 = vadd.s32 %v34, 360
  %v80 = vadd.s32 %v34, 368
  %v81 = vadd.s32 %v34, 376
  %vm82 = vcmp.lt.s32.totalorder %v34, 300
  %vm83 = vcmp.lt.s32.totalorder %v35, 300
  %vm84 = vcmp.lt.s32.totalorder %v36, 300
  %vm85 = vcmp.lt.s32.totalorder %v37, 300
  %vm86 = vcmp.lt.s32.totalorder %v38, 300
  %vm87 = vcmp.lt.s32.totalorder %v39, 300
  %vm88 = vcmp.lt.s32.totalorder %v40, 300
  %vm89 = vcmp.lt.s32.totalorder %v41, 300
  %vm90 = vcmp.lt.s32.totalorder %v42, 300
  %vm91 = vcmp.lt.s32.totalorder %v43, 300
  %vm92 = vcmp.lt.s32.totalorder %v44, 300
  %vm93 = vcmp.lt.s32.totalorder %v45, 300
  %vm94 = vcmp.lt.s32.totalorder %v46, 300
  %vm95 = vcmp.lt.s32.totalorder %v47, 300
  %vm96 = vcmp.lt.s32.totalorder %v48, 300
  %vm97 = vcmp.lt.s32.totalorder %v49, 300
  %vm98 = vcmp.lt.s32.totalorder %v50, 300
  %vm99 = vcmp.lt.s32.totalorder %v51, 300
  %vm100 = vcmp.lt.s32.totalorder %v52, 300
  %vm101 = vcmp.lt.s32.totalorder %v53, 300
  %vm102 = vcmp.lt.s32.totalorder %v54, 300
  %vm103 = vcmp.lt.s32.totalorder %v55, 300
  %vm104 = vcmp.lt.s32.totalorder %v56, 300
  %vm105 = vcmp.lt.s32.totalorder %v57, 300
  %vm106 = vcmp.lt.s32.totalorder %v58, 300
  %vm107 = vcmp.lt.s32.totalorder %v59, 300
  %vm108 = vcmp.lt.s32.totalorder %v60, 300
  %vm109 = vcmp.lt.s32.totalorder %v61, 300
  %vm110 = vcmp.lt.s32.totalorder %v62, 300
  %vm111 = vcmp.lt.s32.totalorder %v63, 300
  %vm112 = vcmp.lt.s32.totalorder %v64, 300
  %vm113 = vcmp.lt.s32.totalorder %v65, 300
  %vm114 = vcmp.lt.s32.totalorder %v66, 300
  %vm115 = vcmp.lt.s32.totalorder %v67, 300
  %vm116 = vcmp.lt.s32.totalorder %v68, 300
  %vm117 = vcmp.lt.s32.totalorder %v69, 300
  %vm118 = vcmp.lt.s32.totalorder %v70, 300
  %vm119 = vcmp.lt.s32.totalorder %v71, 300
  %vm120 = vcmp.lt.s32.totalorder %v72, 300
  %vm121 = vcmp.lt.s32.totalorder %v73, 300
  %vm122 = vcmp.lt.s32.totalorder %v74, 300
  %vm123 = vcmp.lt.s32.totalorder %v75, 300
  %vm124 = vcmp.lt.s32.totalorder %v76, 300
  %vm125 = vcmp.lt.s32.totalorder %v77, 300
  %vm126 = vcmp.lt.s32.totalorder %v78, 300
  %vm127 = vcmp.lt.s32.totalorder %v79, 300
  %vm128 = vcmp.lt.s32.totalorder %v80, 300
  %vm129 = vcmp.lt.s32.totalorder %v81, 300
  %v130 = vsel %vm82, 1, 0
  %v131 = vsel %vm83, 1, 0
  %v132 = vsel %vm84, 1, 0
  %v133 = vsel %vm85, 1, 0
  %v134 = vsel %vm86, 1, 0
  %v135 = vsel %vm87, 1, 0
  %v136 = vsel %vm88, 1, 0
  %v137 = vsel %vm89, 1, 0
  %v138 = vsel %vm90, 1, 0
  %v139 = vsel %vm91, 1, 0
  %v140 = vsel %vm92, 1, 0
  %v141 = vsel %vm93, 1, 0
  %v142 = vsel %vm94, 1, 0
  %v143 = vsel %vm95, 1, 0
  %v144 = vsel %vm96, 1, 0
  %v145 = vsel %vm97, 1, 0
  %v146 = vsel %vm98, 1, 0
  %v147 = vsel %vm99, 1, 0
  %v148 = vsel %vm100, 1, 0
  %v149 = vsel %vm101, 1, 0
  %v150 = vsel %vm102, 1, 0
  %v151 = vsel %vm103, 1, 0
  %v152 = vsel %vm104, 1, 0
  %v153 = vsel %vm105, 1, 0
  %v154 = vsel %vm106, 1, 0
  %v155 = vsel %vm107, 1, 0
  %v156 = vsel %vm108, 1, 0
  %v157 = vsel %vm109, 1, 0
  %v158 = vsel %vm110, 1, 0
  %v159 = vsel %vm111, 1, 0
  %v160 = vsel %vm112, 1, 0
  %v161 = vsel %vm113, 1, 0
  %v162 = vsel %vm114, 1, 0
  %v163 = vsel %vm115, 1, 0
  %v164 = vsel %vm116, 1, 0
  %v165 = vsel %vm117, 1, 0
  %v166 = vsel %vm118, 1, 0
  %v167 = vsel %vm119, 1, 0
  %v168 = vsel %vm120, 1, 0
  %v169 = vsel %vm121, 1, 0
  %v170 = vsel %vm122, 1, 0
  %v171 = vsel %vm123, 1, 0
  %v172 = vsel %vm124, 1, 0
  %v173 = vsel %vm125, 1, 0
  %v174 = vsel %vm126, 1, 0
  %v175 = vsel %vm127, 1, 0
  %v176 = vsel %vm128, 1, 0
  %v177 = vsel %vm129, 1, 0
  %v178 = vcvt.s32.f32 %v130
  %v179 = vcvt.s32.f32 %v131
  %v180 = vcvt.s32.f32 %v132
  %v181 = vcvt.s32.f32 %v133
  %v182 = vcvt.s32.f32 %v134
  %v183 = vcvt.s32.f32 %v135
  %v184 = vcvt.s32.f32 %v136
  %v185 = vcvt.s32.f32 %v137
  %v186 = vcvt.s32.f32 %v138
  %v187 = vcvt.s32.f32 %v139
  %v188 = vcvt.s32.f32 %v140
  %v189 = vcvt.s32.f32 %v141
  %v190 = vcvt.s32.f32 %v142
  %v191 = vcvt.s32.f32 %v143
  %v192 = vcvt.s32.f32 %v144
  %v193 = vcvt.s32.f32 %v145
  %v194 = vcvt.s32.f32 %v146
  %v195 = vcvt.s32.f32 %v147
  %v196 = vcvt.s32.f32 %v148
  %v197 = vcvt.s32.f32 %v149
  %v198 = vcvt.s32.f32 %v150
  %v199 = vcvt.s32.f32 %v151
  %v200 = vcvt.s32.f32 %v152
  %v201 = vcvt.s32.f32 %v153
  %v202 = vcvt.s32.f32 %v154
  %v203 = vcvt.s32.f32 %v155
  %v204 = vcvt.s32.f32 %v156
  %v205 = vcvt.s32.f32 %v157
  %v206 = vcvt.s32.f32 %v158
  %v207 = vcvt.s32.f32 %v159
  %v208 = vcvt.s32.f32 %v160
  %v209 = vcvt.s32.f32 %v161
  %v210 = vcvt.s32.f32 %v162
  %v211 = vcvt.s32.f32 %v163
  %v212 = vcvt.s32.f32 %v164
  %v213 = vcvt.s32.f32 %v165
  %v214 = vcvt.s32.f32 %v166
  %v215 = vcvt.s32.f32 %v167
  %v216 = vcvt.s32.f32 %v168
  %v217 = vcvt.s32.f32 %v169
  %v218 = vcvt.s32.f32 %v170
  %v219 = vcvt.s32.f32 %v171
  %v220 = vcvt.s32.f32 %v172
  %v221 = vcvt.s32.f32 %v173
  %v222 = vcvt.s32.f32 %v174
  %v223 = vcvt.s32.f32 %v175
  %v224 = vcvt.s32.f32 %v176
  %v225 = vcvt.s32.f32 %v177
  %v226 = vld [vmem:[%s0] sm:$0xff]
  %v227 = vld [vmem:[%s0 + $0x8] sm:$0xff]
  %v228 = vld [vmem:[%s0 + $0x10] sm:$0xff]
  %v229 = vld [vmem:[%s0 + $0x18] sm:$0xff]
  %v230 = vld [vmem:[%s0 + $0x20] sm:$0xff]
  %v231 = vld [vmem:[%s0 + $0x28] sm:$0xff]
  %v232 = vld [vmem:[%s0 + $0x30] sm:$0xff]
  %v233 = vld [vmem:[%s0 + $0x38] sm:$0xff]
  %v234 = vld [vmem:[%s0 + $0x40] sm:$0xff]
  %v235 = vld [vmem:[%s0 + $0x48] sm:$0xff]
  %v236 = vld [vmem:[%s0 + $0x50] sm:$0xff]
  %v237 = vld [vmem:[%s0 + $0x58] sm:$0xff]
  %v238 = vld [vmem:[%s0 + $0x60] sm:$0xff]
  %v239 = vld [vmem:[%s0 + $0x68] sm:$0xff]
  %v240 = vld [vmem:[%s0 + $0x70] sm:$0xff]
  %v241 = vld [vmem:[%s0 + $0x78] sm:$0xff]
  %v242 = vld [vmem:[%s0 + $0x80] sm:$0xff]
  %v243 = vld [vmem:[%s0 + $0x88] sm:$0xff]
  %v244 = vld [vmem:[%s0 + $0x90] sm:$0xff]
  %v245 = vld [vmem:[%s0 + $0x98] sm:$0xff]
  %v246 = vld [vmem:[%s0 + $0xa0] sm:$0xff]
  %v247 = vld [vmem:[%s0 + $0xa8] sm:$0xff]
  %v248 = vld [vmem:[%s0 + $0xb0] sm:$0xff]
  %v249 = vld [vmem:[%s0 + $0xb8] sm:$0xff]
  %v250 = vld [vmem:[%s0 + $0xc0] sm:$0xff]
  %v251 = vld [vmem:[%s0 + $0xc8] sm:$0xff]
  %v252 = vld [vmem:[%s0 + $0xd0] sm:$0xff]
  %v253 = vld [vmem:[%s0 + $0xd8] sm:$0xff]
  %v254 = vld [vmem:[%s0 + $0xe0] sm:$0xff]
  %v255 = vld [vmem:[%s0 + $0xe8] sm:$0xff]
  %v256 = vld [vmem:[%s0 + $0xf0] sm:$0xff]
  %v257 = vld [vmem:[%s0 + $0xf8] sm:$0xff]
  %v258 = vld [vmem:[%s0 + $0x100] sm:$0xff]
  %v259 = vld [vmem:[%s0 + $0x108] sm:$0xff]
  %v260 = vld [vmem:[%s0 + $0x110] sm:$0xff]
  %v261 = vld [vmem:[%s0 + $0x118] sm:$0xff]
  %v262 = vld [vmem:[%s0 + $0x120] sm:$0xff]
  %v263 = vld [vmem:[%s0 + $0x128] sm:$0xff]
  %v264 = vld [vmem:[%s0 + $0x130] sm:$0xff]
  %v265 = vld [vmem:[%s0 + $0x138] sm:$0xff]
  %v266 = vld [vmem:[%s0 + $0x140] sm:$0xff]
  %v267 = vld [vmem:[%s0 + $0x148] sm:$0xff]
  %v268 = vld [vmem:[%s0 + $0x150] sm:$0xff]
  %v269 = vld [vmem:[%s0 + $0x158] sm:$0xff]
  %v270 = vld [vmem:[%s0 + $0x160] sm:$0xff]
  %v271 = vld [vmem:[%s0 + $0x168] sm:$0xff]
  %v272 = vld [vmem:[%s0 + $0x170] sm:$0xff]
  %v273 = vld [vmem:[%s0 + $0x178] sm:$0xff]
  %v274 = vmul.f32 %v226, %v178
  %v275 = vmul.f32 %v227, %v179
  %v276 = vmul.f32 %v228, %v180
  %v277 = vmul.f32 %v229, %v181
  %v278 = vmul.f32 %v230, %v182
  %v279 = vmul.f32 %v231, %v183
  %v280 = vmul.f32 %v232, %v184
  %v281 = vmul.f32 %v233, %v185
  %v282 = vmul.f32 %v234, %v186
  %v283 = vmul.f32 %v235, %v187
  %v284 = vmul.f32 %v236, %v188
  %v285 = vmul.f32 %v237, %v189
  %v286 = vmul.f32 %v238, %v190
  %v287 = vmul.f32 %v239, %v191
  %v288 = vmul.f32 %v240, %v192
  %v289 = vmul.f32 %v241, %v193
  %v290 = vmul.f32 %v242, %v194
  %v291 = vmul.f32 %v243, %v195
  %v292 = vmul.f32 %v244, %v196
  %v293 = vmul.f32 %v245, %v197
  %v294 = vmul.f32 %v246, %v198
  %v295 = vmul.f32 %v247, %v199
  %v296 = vmul.f32 %v248, %v200
  %v297 = vmul.f32 %v249, %v201
  %v298 = vmul.f32 %v250, %v202
  %v299 = vmul.f32 %v251, %v203
  %v300 = vmul.f32 %v252, %v204
  %v301 = vmul.f32 %v253, %v205
  %v302 = vmul.f32 %v254, %v206
  %v303 = vmul.f32 %v255, %v207
  %v304 = vmul.f32 %v256, %v208
  %v305 = vmul.f32 %v257, %v209
  %v306 = vmul.f32 %v258, %v210
  %v307 = vmul.f32 %v259, %v211
  %v308 = vmul.f32 %v260, %v212
  %v309 = vmul.f32 %v261, %v213
  %v310 = vmul.f32 %v262, %v214
  %v311 = vmul.f32 %v263, %v215
  %v312 = vmul.f32 %v264, %v216
  %v313 = vmul.f32 %v265, %v217
  %v314 = vmul.f32 %v266, %v218
  %v315 = vmul.f32 %v267, %v219
  %v316 = vmul.f32 %v268, %v220
  %v317 = vmul.f32 %v269, %v221
  %v318 = vmul.f32 %v270, %v222
  %v319 = vmul.f32 %v271, %v223
  %v320 = vmul.f32 %v272, %v224
  %v321 = vmul.f32 %v273, %v225
  %vm322 = vcmask 261120
  %v323 = vsel %vm322, %v274, 0.0
  %v324 = vsel %vm322, %v275, 0.0
  %v325 = vadd.f32 %v323, %v324
  %v326 = vsel %vm322, %v276, 0.0
  %v327 = vadd.f32 %v325, %v326
  %v328 = vsel %vm322, %v277, 0.0
  %v329 = vadd.f32 %v327, %v328
  %v330 = vsel %vm322, %v278, 0.0
  %v331 = vadd.f32 %v329, %v330
  %v332 = vsel %vm322, %v279, 0.0
  %v333 = vadd.f32 %v331, %v332
  %v334 = vsel %vm322, %v280, 0.0
  %v335 = vadd.f32 %v333, %v334
  %v336 = vsel %vm322, %v281, 0.0
  %v337 = vadd.f32 %v335, %v336
  %v338 = vsel %vm322, %v282, 0.0
  %v339 = vadd.f32 %v337, %v338
  %v340 = vsel %vm322, %v283, 0.0
  %v341 = vadd.f32 %v339, %v340
  %v342 = vsel %vm322, %v284, 0.0
  %v343 = vadd.f32 %v341, %v342
  %v344 = vsel %vm322, %v285, 0.0
  %v345 = vadd.f32 %v343, %v344
  %v346 = vsel %vm322, %v286, 0.0
  %v347 = vadd.f32 %v345, %v346
  %v348 = vsel %vm322, %v287, 0.0
  %v349 = vadd.f32 %v347, %v348
  %v350 = vsel %vm322, %v288, 0.0
  %v351 = vadd.f32 %v349, %v350
  %v352 = vsel %vm322, %v289, 0.0
  %v353 = vadd.f32 %v351, %v352
  %v354 = vsel %vm322, %v290, 0.0
  %v355 = vadd.f32 %v353, %v354
  %v356 = vsel %vm322, %v291, 0.0
  %v357 = vadd.f32 %v355, %v356
  %v358 = vsel %vm322, %v292, 0.0
  %v359 = vadd.f32 %v357, %v358
  %v360 = vsel %vm322, %v293, 0.0
  %v361 = vadd.f32 %v359, %v360
  %v362 = vsel %vm322, %v294, 0.0
  %v363 = vadd.f32 %v361, %v362
  %v364 = vsel %vm322, %v295, 0.0
  %v365 = vadd.f32 %v363, %v364
  %v366 = vsel %vm322, %v296, 0.0
  %v367 = vadd.f32 %v365, %v366
  %v368 = vsel %vm322, %v297, 0.0
  %v369 = vadd.f32 %v367, %v368
  %v370 = vsel %vm322, %v298, 0.0
  %v371 = vadd.f32 %v369, %v370
  %v372 = vsel %vm322, %v299, 0.0
  %v373 = vadd.f32 %v371, %v372
  %v374 = vsel %vm322, %v300, 0.0
  %v375 = vadd.f32 %v373, %v374
  %v376 = vsel %vm322, %v301, 0.0
  %v377 = vadd.f32 %v375, %v376
  %v378 = vsel %vm322, %v302, 0.0
  %v379 = vadd.f32 %v377, %v378
  %v380 = vsel %vm322, %v303, 0.0
  %v381 = vadd.f32 %v379, %v380
  %v382 = vsel %vm322, %v304, 0.0
  %v383 = vadd.f32 %v381, %v382
  %v384 = vsel %vm322, %v305, 0.0
  %v385 = vadd.f32 %v383, %v384
  %v386 = vsel %vm322, %v306, 0.0
  %v387 = vadd.f32 %v385, %v386
  %v388 = vsel %vm322, %v307, 0.0
  %v389 = vadd.f32 %v387, %v388
  %v390 = vsel %vm322, %v308, 0.0
  %v391 = vadd.f32 %v389, %v390
  %v392 = vsel %vm322, %v309, 0.0
  %v393 = vadd.f32 %v391, %v392
  %v394 = vsel %vm322, %v310, 0.0
  %v395 = vadd.f32 %v393, %v394
  %v396 = vsel %vm322, %v311, 0.0
  %v397 = vadd.f32 %v395, %v396
  %v398 = vsel %vm322, %v312, 0.0
  %v399 = vadd.f32 %v397, %v398
  %v400 = vsel %vm322, %v313, 0.0
  %v401 = vadd.f32 %v399, %v400
  %v402 = vsel %vm322, %v314, 0.0
  %v403 = vadd.f32 %v401, %v402
  %v404 = vsel %vm322, %v315, 0.0
  %v405 = vadd.f32 %v403, %v404
  %v406 = vsel %vm322, %v316, 0.0
  %v407 = vadd.f32 %v405, %v406
  %v408 = vsel %vm322, %v317, 0.0
  %v409 = vadd.f32 %v407, %v408
  %v410 = vsel %vm322, %v318, 0.0
  %v411 = vadd.f32 %v409, %v410
  %v412 = vsel %vm322, %v319, 0.0
  %v413 = vadd.f32 %v411, %v412
  %v414 = vsel %vm322, %v320, 0.0
  %v415 = vadd.f32 %v413, %v414
  %v416 = vsel %vm322, %v321, 0.0
  %v417 = vadd.f32 %v415, %v416
  %v418 = vrot.slane %v417, 4
  %v419 = vadd.f32 %v417, %v418
  %v420 = vrot.slane %v419, 2
  %v421 = vadd.f32 %v419, %v420
  %v422 = vrot.slane %v421, 1
  %v423 = vadd.f32 %v421, %v422
  %v424 = vmul.f32 %v423, 0.0033333334
  %v425 = vsub.f32 %v226, %v424
  %v426 = vsub.f32 %v227, %v424
  %v427 = vsub.f32 %v228, %v424
  %v428 = vsub.f32 %v229, %v424
  %v429 = vsub.f32 %v230, %v424
  %v430 = vsub.f32 %v231, %v424
  %v431 = vsub.f32 %v232, %v424
  %v432 = vsub.f32 %v233, %v424
  %v433 = vsub.f32 %v234, %v424
  %v434 = vsub.f32 %v235, %v424
  %v435 = vsub.f32 %v236, %v424
  %v436 = vsub.f32 %v237, %v424
  %v437 = vsub.f32 %v238, %v424
  %v438 = vsub.f32 %v239, %v424
  %v439 = vsub.f32 %v240, %v424
  %v440 = vsub.f32 %v241, %v424
  %v441 = vsub.f32 %v242, %v424
  %v442 = vsub.f32 %v243, %v424
  %v443 = vsub.f32 %v244, %v424
  %v444 = vsub.f32 %v245, %v424
  %v445 = vsub.f32 %v246, %v424
  %v446 = vsub.f32 %v247, %v424
  %v447 = vsub.f32 %v248, %v424
  %v448 = vsub.f32 %v249, %v424
  %v449 = vsub.f32 %v250, %v424
  %v450 = vsub.f32 %v251, %v424
  %v451 = vsub.f32 %v252, %v424
  %v452 = vsub.f32 %v253, %v424
  %v453 = vsub.f32 %v254, %v424
  %v454 = vsub.f32 %v255, %v424
  %v455 = vsub.f32 %v256, %v424
  %v456 = vsub.f32 %v257, %v424
  %v457 = vsub.f32 %v258, %v424
  %v458 = vsub.f32 %v259, %v424
  %v459 = vsub.f32 %v260, %v424
  %v460 = vsub.f32 %v261, %v424
  %v461 = vsub.f32 %v262, %v424
  %v462 = vsub.f32 %v263, %v424
  %v463 = vsub.f32 %v264, %v424
  %v464 = vsub.f32 %v265, %v424
  %v465 = vsub.f32 %v266, %v424
  %v466 = vsub.f32 %v267, %v424
  %v467 = vsub.f32 %v268, %v424
  %v468 = vsub.f32 %v269, %v424
  %v469 = vsub.f32 %v270, %v424
  %v470 = vsub.f32 %v271, %v424
  %v471 = vsub.f32 %v272, %v424
  %v472 = vsub.f32 %v273, %v424
  %v473 = vmul.f32 %v425, %v425
  %v474 = vmul.f32 %v426, %v426
  %v475 = vmul.f32 %v427, %v427
  %v476 = vmul.f32 %v428, %v428
  %v477 = vmul.f32 %v429, %v429
  %v478 = vmul.f32 %v430, %v430
  %v479 = vmul.f32 %v431, %v431
  %v480 = vmul.f32 %v432, %v432
  %v481 = vmul.f32 %v433, %v433
  %v482 = vmul.f32 %v434, %v434
  %v483 = vmul.f32 %v435, %v435
  %v484 = vmul.f32 %v436, %v436
  %v485 = vmul.f32 %v437, %v437
  %v486 = vmul.f32 %v438, %v438
  %v487 = vmul.f32 %v439, %v439
  %v488 = vmul.f32 %v440, %v440
  %v489 = vmul.f32 %v441, %v441
  %v490 = vmul.f32 %v442, %v442
  %v491 = vmul.f32 %v443, %v443
  %v492 = vmul.f32 %v444, %v444
  %v493 = vmul.f32 %v445, %v445
  %v494 = vmul.f32 %v446, %v446
  %v495 = vmul.f32 %v447, %v447
  %v496 = vmul.f32 %v448, %v448
  %v497 = vmul.f32 %v449, %v449
  %v498 = vmul.f32 %v450, %v450
  %v499 = vmul.f32 %v451, %v451
  %v500 = vmul.f32 %v452, %v452
  %v501 = vmul.f32 %v453, %v453
  %v502 = vmul.f32 %v454, %v454
  %v503 = vmul.f32 %v455, %v455
  %v504 = vmul.f32 %v456, %v456
  %v505 = vmul.f32 %v457, %v457
  %v506 = vmul.f32 %v458, %v458
  %v507 = vmul.f32 %v459, %v459
  %v508 = vmul.f32 %v460, %v460
  %v509 = vmul.f32 %v461, %v461
  %v510 = vmul.f32 %v462, %v462
  %v511 = vmul.f32 %v463, %v463
  %v512 = vmul.f32 %v464, %v464
  %v513 = vmul.f32 %v465, %v465
  %v514 = vmul.f32 %v466, %v466
  %v515 = vmul.f32 %v467, %v467
  %v516 = vmul.f32 %v468, %v468
  %v517 = vmul.f32 %v469, %v469
  %v518 = vmul.f32 %v470, %v470
  %v519 = vmul.f32 %v471, %v471
  %v520 = vmul.f32 %v472, %v472
  %v521 = vmul.f32 %v473, %v178
  %v522 = vmul.f32 %v474, %v179
  %v523 = vmul.f32 %v475, %v180
  %v524 = vmul.f32 %v476, %v181
  %v525 = vmul.f32 %v477, %v182
  %v526 = vmul.f32 %v478, %v183
  %v527 = vmul.f32 %v479, %v184
  %v528 = vmul.f32 %v480, %v185
  %v529 = vmul.f32 %v481, %v186
  %v530 = vmul.f32 %v482, %v187
  %v531 = vmul.f32 %v483, %v188
  %v532 = vmul.f32 %v484, %v189
  %v533 = vmul.f32 %v485, %v190
  %v534 = vmul.f32 %v486, %v191
  %v535 = vmul.f32 %v487, %v192
  %v536 = vmul.f32 %v488, %v193
  %v537 = vmul.f32 %v489, %v194
  %v538 = vmul.f32 %v490, %v195
  %v539 = vmul.f32 %v491, %v196
  %v540 = vmul.f32 %v492, %v197
  %v541 = vmul.f32 %v493, %v198
  %v542 = vmul.f32 %v494, %v199
  %v543 = vmul.f32 %v495, %v200
  %v544 = vmul.f32 %v496, %v201
  %v545 = vmul.f32 %v497, %v202
  %v546 = vmul.f32 %v498, %v203
  %v547 = vmul.f32 %v499, %v204
  %v548 = vmul.f32 %v500, %v205
  %v549 = vmul.f32 %v501, %v206
  %v550 = vmul.f32 %v502, %v207
  %v551 = vmul.f32 %v503, %v208
  %v552 = vmul.f32 %v504, %v209
  %v553 = vmul.f32 %v505, %v210
  %v554 = vmul.f32 %v506, %v211
  %v555 = vmul.f32 %v507, %v212
  %v556 = vmul.f32 %v508, %v213
  %v557 = vmul.f32 %v509, %v214
  %v558 = vmul.f32 %v510, %v215
  %v559 = vmul.f32 %v511, %v216
  %v560 = vmul.f32 %v512, %v217
  %v561 = vmul.f32 %v513, %v218
  %v562 = vmul.f32 %v514, %v219
  %v563 = vmul.f32 %v515, %v220
  %v564 = vmul.f32 %v516, %v221
  %v565 = vmul.f32 %v517, %v222
  %v566 = vmul.f32 %v518, %v223
  %v567 = vmul.f32 %v519, %v224
  %v568 = vmul.f32 %v520, %v225
  %v569 = vsel %vm322, %v521, 0.0
  %v570 = vsel %vm322, %v522, 0.0
  %v571 = vadd.f32 %v569, %v570
  %v572 = vsel %vm322, %v523, 0.0
  %v573 = vadd.f32 %v571, %v572
  %v574 = vsel %vm322, %v524, 0.0
  %v575 = vadd.f32 %v573, %v574
  %v576 = vsel %vm322, %v525, 0.0
  %v577 = vadd.f32 %v575, %v576
  %v578 = vsel %vm322, %v526, 0.0
  %v579 = vadd.f32 %v577, %v578
  %v580 = vsel %vm322, %v527, 0.0
  %v581 = vadd.f32 %v579, %v580
  %v582 = vsel %vm322, %v528, 0.0
  %v583 = vadd.f32 %v581, %v582
  %v584 = vsel %vm322, %v529, 0.0
  %v585 = vadd.f32 %v583, %v584
  %v586 = vsel %vm322, %v530, 0.0
  %v587 = vadd.f32 %v585, %v586
  %v588 = vsel %vm322, %v531, 0.0
  %v589 = vadd.f32 %v587, %v588
  %v590 = vsel %vm322, %v532, 0.0
  %v591 = vadd.f32 %v589, %v590
  %v592 = vsel %vm322, %v533, 0.0
  %v593 = vadd.f32 %v591, %v592
  %v594 = vsel %vm322, %v534, 0.0
  %v595 = vadd.f32 %v593, %v594
  %v596 = vsel %vm322, %v535, 0.0
  %v597 = vadd.f32 %v595, %v596
  %v598 = vsel %vm322, %v536, 0.0
  %v599 = vadd.f32 %v597, %v598
  %v600 = vsel %vm322, %v537, 0.0
  %v601 = vadd.f32 %v599, %v600
  %v602 = vsel %vm322, %v538, 0.0
  %v603 = vadd.f32 %v601, %v602
  %v604 = vsel %vm322, %v539, 0.0
  %v605 = vadd.f32 %v603, %v604
  %v606 = vsel %vm322, %v540, 0.0
  %v607 = vadd.f32 %v605, %v606
  %v608 = vsel %vm322, %v541, 0.0
  %v609 = vadd.f32 %v607, %v608
  %v610 = vsel %vm322, %v542, 0.0
  %v611 = vadd.f32 %v609, %v610
  %v612 = vsel %vm322, %v543, 0.0
  %v613 = vadd.f32 %v611, %v612
  %v614 = vsel %vm322, %v544, 0.0
  %v615 = vadd.f32 %v613, %v614
  %v616 = vsel %vm322, %v545, 0.0
  %v617 = vadd.f32 %v615, %v616
  %v618 = vsel %vm322, %v546, 0.0
  %v619 = vadd.f32 %v617, %v618
  %v620 = vsel %vm322, %v547, 0.0
  %v621 = vadd.f32 %v619, %v620
  %v622 = vsel %vm322, %v548, 0.0
  %v623 = vadd.f32 %v621, %v622
  %v624 = vsel %vm322, %v549, 0.0
  %v625 = vadd.f32 %v623, %v624
  %v626 = vsel %vm322, %v550, 0.0
  %v627 = vadd.f32 %v625, %v626
  %v628 = vsel %vm322, %v551, 0.0
  %v629 = vadd.f32 %v627, %v628
  %v630 = vsel %vm322, %v552, 0.0
  %v631 = vadd.f32 %v629, %v630
  %v632 = vsel %vm322, %v553, 0.0
  %v633 = vadd.f32 %v631, %v632
  %v634 = vsel %vm322, %v554, 0.0
  %v635 = vadd.f32 %v633, %v634
  %v636 = vsel %vm322, %v555, 0.0
  %v637 = vadd.f32 %v635, %v636
  %v638 = vsel %vm322, %v556, 0.0
  %v639 = vadd.f32 %v637, %v638
  %v640 = vsel %vm322, %v557, 0.0
  %v641 = vadd.f32 %v639, %v640
  %v642 = vsel %vm322, %v558, 0.0
  %v643 = vadd.f32 %v641, %v642
  %v644 = vsel %vm322, %v559, 0.0
  %v645 = vadd.f32 %v643, %v644
  %v646 = vsel %vm322, %v560, 0.0
  %v647 = vadd.f32 %v645, %v646
  %v648 = vsel %vm322, %v561, 0.0
  %v649 = vadd.f32 %v647, %v648
  %v650 = vsel %vm322, %v562, 0.0
  %v651 = vadd.f32 %v649, %v650
  %v652 = vsel %vm322, %v563, 0.0
  %v653 = vadd.f32 %v651, %v652
  %v654 = vsel %vm322, %v564, 0.0
  %v655 = vadd.f32 %v653, %v654
  %v656 = vsel %vm322, %v565, 0.0
  %v657 = vadd.f32 %v655, %v656
  %v658 = vsel %vm322, %v566, 0.0
  %v659 = vadd.f32 %v657, %v658
  %v660 = vsel %vm322, %v567, 0.0
  %v661 = vadd.f32 %v659, %v660
  %v662 = vsel %vm322, %v568, 0.0
  %v663 = vadd.f32 %v661, %v662
  %v664 = vrot.slane %v663, 4
  %v665 = vadd.f32 %v663, %v664
  %v666 = vrot.slane %v665, 2
  %v667 = vadd.f32 %v665, %v666
  %v668 = vrot.slane %v667, 1
  %v669 = vadd.f32 %v667, %v668
  %v670 = vmul.f32 %v669, 0.0033333334
  %v671 = vadd.f32 %v670, 1e-05
  %v672 = vrsqrt.pop %v671
  %v673 = vmul.f32 %v425, %v672
  %v674 = vmul.f32 %v426, %v672
  %v675 = vmul.f32 %v427, %v672
  %v676 = vmul.f32 %v428, %v672
  %v677 = vmul.f32 %v429, %v672
  %v678 = vmul.f32 %v430, %v672
  %v679 = vmul.f32 %v431, %v672
  %v680 = vmul.f32 %v432, %v672
  %v681 = vmul.f32 %v433, %v672
  %v682 = vmul.f32 %v434, %v672
  %v683 = vmul.f32 %v435, %v672
  %v684 = vmul.f32 %v436, %v672
  %v685 = vmul.f32 %v437, %v672
  %v686 = vmul.f32 %v438, %v672
  %v687 = vmul.f32 %v439, %v672
  %v688 = vmul.f32 %v440, %v672
  %v689 = vmul.f32 %v441, %v672
  %v690 = vmul.f32 %v442, %v672
  %v691 = vmul.f32 %v443, %v672
  %v692 = vmul.f32 %v444, %v672
  %v693 = vmul.f32 %v445, %v672
  %v694 = vmul.f32 %v446, %v672
  %v695 = vmul.f32 %v447, %v672
  %v696 = vmul.f32 %v448, %v672
  %v697 = vmul.f32 %v449, %v672
  %v698 = vmul.f32 %v450, %v672
  %v699 = vmul.f32 %v451, %v672
  %v700 = vmul.f32 %v452, %v672
  %v701 = vmul.f32 %v453, %v672
  %v702 = vmul.f32 %v454, %v672
  %v703 = vmul.f32 %v455, %v672
  %v704 = vmul.f32 %v456, %v672
  %v705 = vmul.f32 %v457, %v672
  %v706 = vmul.f32 %v458, %v672
  %v707 = vmul.f32 %v459, %v672
  %v708 = vmul.f32 %v460, %v672
  %v709 = vmul.f32 %v461, %v672
  %v710 = vmul.f32 %v462, %v672
  %v711 = vmul.f32 %v463, %v672
  %v712 = vmul.f32 %v464, %v672
  %v713 = vmul.f32 %v465, %v672
  %v714 = vmul.f32 %v466, %v672
  %v715 = vmul.f32 %v467, %v672
  %v716 = vmul.f32 %v468, %v672
  %v717 = vmul.f32 %v469, %v672
  %v718 = vmul.f32 %v470, %v672
  %v719 = vmul.f32 %v471, %v672
  %v720 = vmul.f32 %v472, %v672
  %v721 = vld [vmem:[%s1] sm:$0x1]
  %v723 = vlaneseq
  %v724 = vshrl.u32 %v723, 7
  %v725 = vsub.s32 0, %v724
  %v726 = vrot.slane %v721, %v725
  %v728 = vmul.f32 %v673, %v726
  %v729 = vmul.f32 %v674, %v726
  %v730 = vmul.f32 %v675, %v726
  %v731 = vmul.f32 %v676, %v726
  %v732 = vmul.f32 %v677, %v726
  %v733 = vmul.f32 %v678, %v726
  %v734 = vmul.f32 %v679, %v726
  %v735 = vmul.f32 %v680, %v726
  %v736 = vmul.f32 %v681, %v726
  %v737 = vmul.f32 %v682, %v726
  %v738 = vmul.f32 %v683, %v726
  %v739 = vmul.f32 %v684, %v726
  %v740 = vmul.f32 %v685, %v726
  %v741 = vmul.f32 %v686, %v726
  %v742 = vmul.f32 %v687, %v726
  %v743 = vmul.f32 %v688, %v726
  %v744 = vmul.f32 %v689, %v726
  %v745 = vmul.f32 %v690, %v726
  %v746 = vmul.f32 %v691, %v726
  %v747 = vmul.f32 %v692, %v726
  %v748 = vmul.f32 %v693, %v726
  %v749 = vmul.f32 %v694, %v726
  %v750 = vmul.f32 %v695, %v726
  %v751 = vmul.f32 %v696, %v726
  %v752 = vmul.f32 %v697, %v726
  %v753 = vmul.f32 %v698, %v726
  %v754 = vmul.f32 %v699, %v726
  %v755 = vmul.f32 %v700, %v726
  %v756 = vmul.f32 %v701, %v726
  %v757 = vmul.f32 %v702, %v726
  %v758 = vmul.f32 %v703, %v726
  %v759 = vmul.f32 %v704, %v726
  %v760 = vmul.f32 %v705, %v726
  %v761 = vmul.f32 %v706, %v726
  %v762 = vmul.f32 %v707, %v726
  %v763 = vmul.f32 %v708, %v726
  %v764 = vmul.f32 %v709, %v726
  %v765 = vmul.f32 %v710, %v726
  %v766 = vmul.f32 %v711, %v726
  %v767 = vmul.f32 %v712, %v726
  %v768 = vmul.f32 %v713, %v726
  %v769 = vmul.f32 %v714, %v726
  %v770 = vmul.f32 %v715, %v726
  %v771 = vmul.f32 %v716, %v726
  %v772 = vmul.f32 %v717, %v726
  %v773 = vmul.f32 %v718, %v726
  %v774 = vmul.f32 %v719, %v726
  %v775 = vmul.f32 %v720, %v726
  %v776 = vld [vmem:[%s2] sm:$0x1]
  %v778 = vlaneseq
  %v779 = vshrl.u32 %v778, 7
  %v780 = vsub.s32 0, %v779
  %v781 = vrot.slane %v776, %v780
  %v783 = vadd.f32 %v728, %v781
  %v784 = vadd.f32 %v729, %v781
  %v785 = vadd.f32 %v730, %v781
  %v786 = vadd.f32 %v731, %v781
  %v787 = vadd.f32 %v732, %v781
  %v788 = vadd.f32 %v733, %v781
  %v789 = vadd.f32 %v734, %v781
  %v790 = vadd.f32 %v735, %v781
  %v791 = vadd.f32 %v736, %v781
  %v792 = vadd.f32 %v737, %v781
  %v793 = vadd.f32 %v738, %v781
  %v794 = vadd.f32 %v739, %v781
  %v795 = vadd.f32 %v740, %v781
  %v796 = vadd.f32 %v741, %v781
  %v797 = vadd.f32 %v742, %v781
  %v798 = vadd.f32 %v743, %v781
  %v799 = vadd.f32 %v744, %v781
  %v800 = vadd.f32 %v745, %v781
  %v801 = vadd.f32 %v746, %v781
  %v802 = vadd.f32 %v747, %v781
  %v803 = vadd.f32 %v748, %v781
  %v804 = vadd.f32 %v749, %v781
  %v805 = vadd.f32 %v750, %v781
  %v806 = vadd.f32 %v751, %v781
  %v807 = vadd.f32 %v752, %v781
  %v808 = vadd.f32 %v753, %v781
  %v809 = vadd.f32 %v754, %v781
  %v810 = vadd.f32 %v755, %v781
  %v811 = vadd.f32 %v756, %v781
  %v812 = vadd.f32 %v757, %v781
  %v813 = vadd.f32 %v758, %v781
  %v814 = vadd.f32 %v759, %v781
  %v815 = vadd.f32 %v760, %v781
  %v816 = vadd.f32 %v761, %v781
  %v817 = vadd.f32 %v762, %v781
  %v818 = vadd.f32 %v763, %v781
  %v819 = vadd.f32 %v764, %v781
  %v820 = vadd.f32 %v765, %v781
  %v821 = vadd.f32 %v766, %v781
  %v822 = vadd.f32 %v767, %v781
  %v823 = vadd.f32 %v768, %v781
  %v824 = vadd.f32 %v769, %v781
  %v825 = vadd.f32 %v770, %v781
  %v826 = vadd.f32 %v771, %v781
  %v827 = vadd.f32 %v772, %v781
  %v828 = vadd.f32 %v773, %v781
  %v829 = vadd.f32 %v774, %v781
  %v830 = vadd.f32 %v775, %v781
  %v831 = vpack.c.bf16 %v784, %v783
  %v832 = vpack.c.bf16 %v786, %v785
  %v833 = vpack.c.bf16 %v788, %v787
  %v834 = vpack.c.bf16 %v790, %v789
  %v835 = vpack.c.bf16 %v792, %v791
  %v836 = vpack.c.bf16 %v794, %v793
  %v837 = vpack.c.bf16 %v796, %v795
  %v838 = vpack.c.bf16 %v798, %v797
  %v839 = vpack.c.bf16 %v800, %v799
  %v840 = vpack.c.bf16 %v802, %v801
  %v841 = vpack.c.bf16 %v804, %v803
  %v842 = vpack.c.bf16 %v806, %v805
  %v843 = vpack.c.bf16 %v808, %v807
  %v844 = vpack.c.bf16 %v810, %v809
  %v845 = vpack.c.bf16 %v812, %v811
  %v846 = vpack.c.bf16 %v814, %v813
  %v847 = vpack.c.bf16 %v816, %v815
  %v848 = vpack.c.bf16 %v818, %v817
  %v849 = vpack.c.bf16 %v820, %v819
  %v850 = vpack.c.bf16 %v822, %v821
  %v851 = vpack.c.bf16 %v824, %v823
  %v852 = vpack.c.bf16 %v826, %v825
  %v853 = vpack.c.bf16 %v828, %v827
  %v854 = vpack.c.bf16 %v830, %v829
  %v855 = vld [vmem:[%s3] sm:$0xf]
  %v856 = vld [vmem:[%s3 + $0x4] sm:$0xf]
  %v857 = vld [vmem:[%s3 + $0x8] sm:$0xf]
  %v858 = vld [vmem:[%s3 + $0xc] sm:$0xf]
  %v859 = vld [vmem:[%s4] sm:$0x1]
  %v861 = vlaneseq
  %v862 = vshrl.u32 %v861, 7
  %v863 = vsub.s32 0, %v862
  %v864 = vrot.slane %v859, %v863
  %v870 = vunpack.c.l.b16 %v855
  %v871 = vunpack.c.l.b16 %v856
  %v872 = vunpack.c.l.b16 %v857
  %v873 = vunpack.c.l.b16 %v858
  %v874 = vpack.c.b16 %v871, %v870
  %v875 = vpack.c.b16 %v873, %v872
  %v879 = vsel %vm322, %v831, 0
  %v882 = vsel %vm322, %v832, 0
  %v885 = vsel %vm322, %v833, 0
  %v888 = vsel %vm322, %v834, 0
  %v891 = vsel %vm322, %v835, 0
  %v894 = vsel %vm322, %v836, 0
  %v897 = vsel %vm322, %v837, 0
  %v900 = vsel %vm322, %v838, 0
  %v903 = vsel %vm322, %v839, 0
  %v906 = vsel %vm322, %v840, 0
  %v909 = vsel %vm322, %v841, 0
  %v912 = vsel %vm322, %v842, 0
  %v915 = vsel %vm322, %v843, 0
  %v918 = vsel %vm322, %v844, 0
  %v921 = vsel %vm322, %v845, 0
  %v924 = vsel %vm322, %v846, 0
  %v927 = vsel %vm322, %v847, 0
  %v930 = vsel %vm322, %v848, 0
  %v933 = vsel %vm322, %v849, 0
  %v936 = vsel %vm322, %v850, 0
  %v939 = vsel %vm322, %v851, 0
  %v942 = vsel %vm322, %v852, 0
  %v945 = vsel %vm322, %v853, 0
  %v948 = vsel %vm322, %v854, 0
  %950 = vmatprep.subr.bf16.mxu0 0
  %951 = vmatpush1.bf16.msra.mxu0 %v874
  %952 = vmatprep.subr.bf16.mxu0 0
  %953 = vmatpush1.bf16.msra.mxu0 %v875
  %954 = vmatprep.subr.bf16.mxu0 0
  %955 = vmatpush1.bf16.msra.mxu0 0
  %956 = vmatprep.subr.bf16.mxu0 0
  %957 = vmatpush1.bf16.msra.mxu0 0
  %958 = vmatprep.subr.bf16.mxu0 0
  %959 = vmatpush1.bf16.msra.mxu0 0
  %960 = vmatprep.subr.bf16.mxu0 0
  %961 = vmatpush1.bf16.msra.mxu0 0
  %962 = vmatprep.subr.bf16.mxu0 0
  %963 = vmatpush1.bf16.msra.mxu0 0
  %964 = vmatprep.subr.bf16.mxu0 0
  %965 = vmatpush1.bf16.msra.mxu0 0
  %966 = vmatprep.subr.bf16.mxu0 0
  %967 = vmatpush1.bf16.msra.mxu0 0
  %968 = vmatprep.subr.bf16.mxu0 0
  %969 = vmatpush1.bf16.msra.mxu0 0
  %970 = vmatprep.subr.bf16.mxu0 0
  %971 = vmatpush1.bf16.msra.mxu0 0
  %972 = vmatprep.subr.bf16.mxu0 0
  %973 = vmatpush1.bf16.msra.mxu0 0
  %974 = vmatprep.subr.bf16.mxu0 0
  %975 = vmatpush1.bf16.msra.mxu0 0
  %976 = vmatprep.subr.bf16.mxu0 0
  %977 = vmatpush1.bf16.msra.mxu0 0
  %978 = vmatprep.subr.bf16.mxu0 0
  %979 = vmatpush1.bf16.msra.mxu0 0
  %980 = vmatprep.subr.bf16.mxu0 0
  %981 = vmatpush1.bf16.msra.mxu0 0
  %982 = vmatprep.mubr.bf16.mxu0 0
  %983 = vmatmul.mubr.bf16.gmra.mrb[0].mxu0 %v879
  %v984 = vpop.f32.mrb[0].mxu0
  %v985 = vadd.f32 %v864, %v984
  %v986 = vpop.f32.mrb[0].mxu0
  %v987 = vpop.f32.mrb[0].mxu0
  %v988 = vadd.f32 %v864, %v987
  %v989 = vpop.f32.mrb[0].mxu0
  %990 = vmatprep.mubr.bf16.mxu0 0
  %991 = vmatmul.mubr.bf16.gmra.mrb[0].mxu0 %v882
  %v992 = vpop.f32.mrb[0].mxu0
  %v993 = vadd.f32 %v864, %v992
  %v994 = vpop.f32.mrb[0].mxu0
  %v995 = vpop.f32.mrb[0].mxu0
  %v996 = vadd.f32 %v864, %v995
  %v997 = vpop.f32.mrb[0].mxu0
  %998 = vmatprep.mubr.bf16.mxu0 0
  %999 = vmatmul.mubr.bf16.gmra.mrb[0].mxu0 %v885
  %v1000 = vpop.f32.mrb[0].mxu0
  %v1001 = vadd.f32 %v864, %v1000
  %v1002 = vpop.f32.mrb[0].mxu0
  %v1003 = vpop.f32.mrb[0].mxu0
  %v1004 = vadd.f32 %v864, %v1003
  %v1005 = vpop.f32.mrb[0].mxu0
  %1006 = vmatprep.mubr.bf16.mxu0 0
  %1007 = vmatmul.mubr.bf16.gmra.mrb[0].mxu0 %v888
  %v1008 = vpop.f32.mrb[0].mxu0
  %v1009 = vadd.f32 %v864, %v1008
  %v1010 = vpop.f32.mrb[0].mxu0
  %v1011 = vpop.f32.mrb[0].mxu0
  %v1012 = vadd.f32 %v864, %v1011
  %v1013 = vpop.f32.mrb[0].mxu0
  %1014 = vmatprep.mubr.bf16.mxu0 0
  %1015 = vmatmul.mubr.bf16.gmra.mrb[0].mxu0 %v891
  %v1016 = vpop.f32.mrb[0].mxu0
  %v1017 = vadd.f32 %v864, %v1016
  %v1018 = vpop.f32.mrb[0].mxu0
  %v1019 = vpop.f32.mrb[0].mxu0
  %v1020 = vadd.f32 %v864, %v1019
  %v1021 = vpop.f32.mrb[0].mxu0
  %1022 = vmatprep.mubr.bf16.mxu0 0
  %1023 = vmatmul.mubr.bf16.gmra.mrb[0].mxu0 %v894
  %v1024 = vpop.f32.mrb[0].mxu0
  %v1025 = vadd.f32 %v864, %v1024
  %v1026 = vpop.f32.mrb[0].mxu0
  %v1027 = vpop.f32.mrb[0].mxu0
  %v1028 = vadd.f32 %v864, %v1027
  %v1029 = vpop.f32.mrb[0].mxu0
  %1030 = vmatprep.mubr.bf16.mxu0 0
  %1031 = vmatmul.mubr.bf16.gmra.mrb[0].mxu0 %v897
  %v1032 = vpop.f32.mrb[0].mxu0
  %v1033 = vadd.f32 %v864, %v1032
  %v1034 = vpop.f32.mrb[0].mxu0
  %v1035 = vpop.f32.mrb[0].mxu0
  %v1036 = vadd.f32 %v864, %v1035
  %v1037 = vpop.f32.mrb[0].mxu0
  %1038 = vmatprep.mubr.bf16.mxu0 0
  %1039 = vmatmul.mubr.bf16.gmra.mrb[0].mxu0 %v900
  %v1040 = vpop.f32.mrb[0].mxu0
  %v1041 = vadd.f32 %v864, %v1040
  %v1042 = vpop.f32.mrb[0].mxu0
  %v1043 = vpop.f32.mrb[0].mxu0
  %v1044 = vadd.f32 %v864, %v1043
  %v1045 = vpop.f32.mrb[0].mxu0
  %1046 = vmatprep.mubr.bf16.mxu0 0
  %1047 = vmatmul.mubr.bf16.gmra.mrb[0].mxu0 %v903
  %v1048 = vpop.f32.mrb[0].mxu0
  %v1049 = vadd.f32 %v864, %v1048
  %v1050 = vpop.f32.mrb[0].mxu0
  %v1051 = vpop.f32.mrb[0].mxu0
  %v1052 = vadd.f32 %v864, %v1051
  %v1053 = vpop.f32.mrb[0].mxu0
  %1054 = vmatprep.mubr.bf16.mxu0 0
  %1055 = vmatmul.mubr.bf16.gmra.mrb[0].mxu0 %v906
  %v1056 = vpop.f32.mrb[0].mxu0
  %v1057 = vadd.f32 %v864, %v1056
  %v1058 = vpop.f32.mrb[0].mxu0
  %v1059 = vpop.f32.mrb[0].mxu0
  %v1060 = vadd.f32 %v864, %v1059
  %v1061 = vpop.f32.mrb[0].mxu0
  %1062 = vmatprep.mubr.bf16.mxu0 0
  %1063 = vmatmul.mubr.bf16.gmra.mrb[0].mxu0 %v909
  %v1064 = vpop.f32.mrb[0].mxu0
  %v1065 = vadd.f32 %v864, %v1064
  %v1066 = vpop.f32.mrb[0].mxu0
  %v1067 = vpop.f32.mrb[0].mxu0
  %v1068 = vadd.f32 %v864, %v1067
  %v1069 = vpop.f32.mrb[0].mxu0
  %1070 = vmatprep.mubr.bf16.mxu0 0
  %1071 = vmatmul.mubr.bf16.gmra.mrb[0].mxu0 %v912
  %v1072 = vpop.f32.mrb[0].mxu0
  %v1073 = vadd.f32 %v864, %v1072
  %v1074 = vpop.f32.mrb[0].mxu0
  %v1075 = vpop.f32.mrb[0].mxu0
  %v1076 = vadd.f32 %v864, %v1075
  %v1077 = vpop.f32.mrb[0].mxu0
  %1078 = vmatprep.mubr.bf16.mxu0 0
  %1079 = vmatmul.mubr.bf16.gmra.mrb[0].mxu0 %v915
  %v1080 = vpop.f32.mrb[0].mxu0
  %v1081 = vadd.f32 %v864, %v1080
  %v1082 = vpop.f32.mrb[0].mxu0
  %v1083 = vpop.f32.mrb[0].mxu0
  %v1084 = vadd.f32 %v864, %v1083
  %v1085 = vpop.f32.mrb[0].mxu0
  %1086 = vmatprep.mubr.bf16.mxu0 0
  %1087 = vmatmul.mubr.bf16.gmra.mrb[0].mxu0 %v918
  %v1088 = vpop.f32.mrb[0].mxu0
  %v1089 = vadd.f32 %v864, %v1088
  %v1090 = vpop.f32.mrb[0].mxu0
  %v1091 = vpop.f32.mrb[0].mxu0
  %v1092 = vadd.f32 %v864, %v1091
  %v1093 = vpop.f32.mrb[0].mxu0
  %1094 = vmatprep.mubr.bf16.mxu0 0
  %1095 = vmatmul.mubr.bf16.gmra.mrb[0].mxu0 %v921
  %v1096 = vpop.f32.mrb[0].mxu0
  %v1097 = vadd.f32 %v864, %v1096
  %v1098 = vpop.f32.mrb[0].mxu0
  %v1099 = vpop.f32.mrb[0].mxu0
  %v1100 = vadd.f32 %v864, %v1099
  %v1101 = vpop.f32.mrb[0].mxu0
  %1102 = vmatprep.mubr.bf16.mxu0 0
  %1103 = vmatmul.mubr.bf16.gmra.mrb[0].mxu0 %v924
  %v1104 = vpop.f32.mrb[0].mxu0
  %v1105 = vadd.f32 %v864, %v1104
  %v1106 = vpop.f32.mrb[0].mxu0
  %v1107 = vpop.f32.mrb[0].mxu0
  %v1108 = vadd.f32 %v864, %v1107
  %v1109 = vpop.f32.mrb[0].mxu0
  %1110 = vmatprep.mubr.bf16.mxu0 0
  %1111 = vmatmul.mubr.bf16.gmra.mrb[0].mxu0 %v927
  %v1112 = vpop.f32.mrb[0].mxu0
  %v1113 = vadd.f32 %v864, %v1112
  %v1114 = vpop.f32.mrb[0].mxu0
  %v1115 = vpop.f32.mrb[0].mxu0
  %v1116 = vadd.f32 %v864, %v1115
  %v1117 = vpop.f32.mrb[0].mxu0
  %1118 = vmatprep.mubr.bf16.mxu0 0
  %1119 = vmatmul.mubr.bf16.gmra.mrb[0].mxu0 %v930
  %v1120 = vpop.f32.mrb[0].mxu0
  %v1121 = vadd.f32 %v864, %v1120
  %v1122 = vpop.f32.mrb[0].mxu0
  %v1123 = vpop.f32.mrb[0].mxu0
  %v1124 = vadd.f32 %v864, %v1123
  %v1125 = vpop.f32.mrb[0].mxu0
  %1126 = vmatprep.mubr.bf16.mxu0 0
  %1127 = vmatmul.mubr.bf16.gmra.mrb[0].mxu0 %v933
  %v1128 = vpop.f32.mrb[0].mxu0
  %v1129 = vadd.f32 %v864, %v1128
  %v1130 = vpop.f32.mrb[0].mxu0
  %v1131 = vpop.f32.mrb[0].mxu0
  %v1132 = vadd.f32 %v864, %v1131
  %v1133 = vpop.f32.mrb[0].mxu0
  %1134 = vmatprep.mubr.bf16.mxu0 0
  %1135 = vmatmul.mubr.bf16.gmra.mrb[0].mxu0 %v936
  %v1136 = vpop.f32.mrb[0].mxu0
  %v1137 = vadd.f32 %v864, %v1136
  %v1138 = vpop.f32.mrb[0].mxu0
  %v1139 = vpop.f32.mrb[0].mxu0
  %v1140 = vadd.f32 %v864, %v1139
  %v1141 = vpop.f32.mrb[0].mxu0
  %1142 = vmatprep.mubr.bf16.mxu0 0
  %1143 = vmatmul.mubr.bf16.gmra.mrb[0].mxu0 %v939
  %v1144 = vpop.f32.mrb[0].mxu0
  %v1145 = vadd.f32 %v864, %v1144
  %v1146 = vpop.f32.mrb[0].mxu0
  %v1147 = vpop.f32.mrb[0].mxu0
  %v1148 = vadd.f32 %v864, %v1147
  %v1149 = vpop.f32.mrb[0].mxu0
  %1150 = vmatprep.mubr.bf16.mxu0 0
  %1151 = vmatmul.mubr.bf16.gmra.mrb[0].mxu0 %v942
  %v1152 = vpop.f32.mrb[0].mxu0
  %v1153 = vadd.f32 %v864, %v1152
  %v1154 = vpop.f32.mrb[0].mxu0
  %v1155 = vpop.f32.mrb[0].mxu0
  %v1156 = vadd.f32 %v864, %v1155
  %v1157 = vpop.f32.mrb[0].mxu0
  %1158 = vmatprep.mubr.bf16.mxu0 0
  %1159 = vmatmul.mubr.bf16.gmra.mrb[0].mxu0 %v945
  %v1160 = vpop.f32.mrb[0].mxu0
  %v1161 = vadd.f32 %v864, %v1160
  %v1162 = vpop.f32.mrb[0].mxu0
  %v1163 = vpop.f32.mrb[0].mxu0
  %v1164 = vadd.f32 %v864, %v1163
  %v1165 = vpop.f32.mrb[0].mxu0
  %1166 = vmatprep.mubr.bf16.mxu0 0
  %1167 = vmatmul.mubr.bf16.gmra.mrb[0].mxu0 %v948
  %v1168 = vpop.f32.mrb[0].mxu0
  %v1169 = vadd.f32 %v864, %v1168
  %v1170 = vpop.f32.mrb[0].mxu0
  %v1171 = vpop.f32.mrb[0].mxu0
  %v1172 = vadd.f32 %v864, %v1171
  %v1173 = vpop.f32.mrb[0].mxu0
  %1174 = vdwg.mxu0
  %v1175 = vmax.f32 %v985, 0.0
  %v1176 = vmax.f32 %v988, 0.0
  %v1177 = vmax.f32 %v993, 0.0
  %v1178 = vmax.f32 %v996, 0.0
  %v1179 = vmax.f32 %v1001, 0.0
  %v1180 = vmax.f32 %v1004, 0.0
  %v1181 = vmax.f32 %v1009, 0.0
  %v1182 = vmax.f32 %v1012, 0.0
  %v1183 = vmax.f32 %v1017, 0.0
  %v1184 = vmax.f32 %v1020, 0.0
  %v1185 = vmax.f32 %v1025, 0.0
  %v1186 = vmax.f32 %v1028, 0.0
  %v1187 = vmax.f32 %v1033, 0.0
  %v1188 = vmax.f32 %v1036, 0.0
  %v1189 = vmax.f32 %v1041, 0.0
  %v1190 = vmax.f32 %v1044, 0.0
  %v1191 = vmax.f32 %v1049, 0.0
  %v1192 = vmax.f32 %v1052, 0.0
  %v1193 = vmax.f32 %v1057, 0.0
  %v1194 = vmax.f32 %v1060, 0.0
  %v1195 = vmax.f32 %v1065, 0.0
  %v1196 = vmax.f32 %v1068, 0.0
  %v1197 = vmax.f32 %v1073, 0.0
  %v1198 = vmax.f32 %v1076, 0.0
  %v1199 = vmax.f32 %v1081, 0.0
  %v1200 = vmax.f32 %v1084, 0.0
  %v1201 = vmax.f32 %v1089, 0.0
  %v1202 = vmax.f32 %v1092, 0.0
  %v1203 = vmax.f32 %v1097, 0.0
  %v1204 = vmax.f32 %v1100, 0.0
  %v1205 = vmax.f32 %v1105, 0.0
  %v1206 = vmax.f32 %v1108, 0.0
  %v1207 = vmax.f32 %v1113, 0.0
  %v1208 = vmax.f32 %v1116, 0.0
  %v1209 = vmax.f32 %v1121, 0.0
  %v1210 = vmax.f32 %v1124, 0.0
  %v1211 = vmax.f32 %v1129, 0.0
  %v1212 = vmax.f32 %v1132, 0.0
  %v1213 = vmax.f32 %v1137, 0.0
  %v1214 = vmax.f32 %v1140, 0.0
  %v1215 = vmax.f32 %v1145, 0.0
  %v1216 = vmax.f32 %v1148, 0.0
  %v1217 = vmax.f32 %v1153, 0.0
  %v1218 = vmax.f32 %v1156, 0.0
  %v1219 = vmax.f32 %v1161, 0.0
  %v1220 = vmax.f32 %v1164, 0.0
  %v1221 = vmax.f32 %v1169, 0.0
  %v1222 = vmax.f32 %v1172, 0.0
  %v1223 = vpack.c.bf16 %v1176, %v1175
  %v1224 = vpack.c.bf16 %v1178, %v1177
  %v1225 = vpack.c.bf16 %v1180, %v1179
  %v1226 = vpack.c.bf16 %v1182, %v1181
  %v1227 = vpack.c.bf16 %v1184, %v1183
  %v1228 = vpack.c.bf16 %v1186, %v1185
  %v1229 = vpack.c.bf16 %v1188, %v1187
  %v1230 = vpack.c.bf16 %v1190, %v1189
  %v1231 = vpack.c.bf16 %v1192, %v1191
  %v1232 = vpack.c.bf16 %v1194, %v1193
  %v1233 = vpack.c.bf16 %v1196, %v1195
  %v1234 = vpack.c.bf16 %v1198, %v1197
  %v1235 = vpack.c.bf16 %v1200, %v1199
  %v1236 = vpack.c.bf16 %v1202, %v1201
  %v1237 = vpack.c.bf16 %v1204, %v1203
  %v1238 = vpack.c.bf16 %v1206, %v1205
  %v1239 = vpack.c.bf16 %v1208, %v1207
  %v1240 = vpack.c.bf16 %v1210, %v1209
  %v1241 = vpack.c.bf16 %v1212, %v1211
  %v1242 = vpack.c.bf16 %v1214, %v1213
  %v1243 = vpack.c.bf16 %v1216, %v1215
  %v1244 = vpack.c.bf16 %v1218, %v1217
  %v1245 = vpack.c.bf16 %v1220, %v1219
  %v1246 = vpack.c.bf16 %v1222, %v1221
  %v1247 = vld [vmem:[%s5] sm:$0xf]
  %v1248 = vld [vmem:[%s5 + $0x4] sm:$0xf]
  %v1249 = vld [vmem:[%s5 + $0x8] sm:$0xf]
  %v1250 = vld [vmem:[%s5 + $0xc] sm:$0xf]
  %v1251 = vld [vmem:[%s5 + $0x10] sm:$0xf]
  %v1252 = vld [vmem:[%s5 + $0x14] sm:$0xf]
  %v1253 = vld [vmem:[%s5 + $0x18] sm:$0xf]
  %v1254 = vld [vmem:[%s5 + $0x1c] sm:$0xf]
  %v1255 = vld [vmem:[%s6] sm:$0x1]
  %v1257 = vlaneseq
  %v1258 = vshrl.u32 %v1257, 7
  %v1259 = vsub.s32 0, %v1258
  %v1260 = vrot.slane %v1255, %v1259
  %v1270 = vunpack.c.l.b16 %v1247
  %v1271 = vunpack.c.l.b16 %v1248
  %v1272 = vunpack.c.l.b16 %v1249
  %v1273 = vunpack.c.l.b16 %v1250
  %v1274 = vunpack.c.l.b16 %v1251
  %v1275 = vunpack.c.l.b16 %v1252
  %v1276 = vunpack.c.l.b16 %v1253
  %v1277 = vunpack.c.l.b16 %v1254
  %v1278 = vpack.c.b16 %v1271, %v1270
  %v1279 = vpack.c.b16 %v1273, %v1272
  %v1280 = vpack.c.b16 %v1275, %v1274
  %v1281 = vpack.c.b16 %v1277, %v1276
  %vm1286 = vcmask 523264
  %v1288 = vsel %vm1286, %v1223, 0
  %v1291 = vsel %vm1286, %v1224, 0
  %v1294 = vsel %vm1286, %v1225, 0
  %v1297 = vsel %vm1286, %v1226, 0
  %v1300 = vsel %vm1286, %v1227, 0
  %v1303 = vsel %vm1286, %v1228, 0
  %v1306 = vsel %vm1286, %v1229, 0
  %v1309 = vsel %vm1286, %v1230, 0
  %v1312 = vsel %vm1286, %v1231, 0
  %v1315 = vsel %vm1286, %v1232, 0
  %v1318 = vsel %vm1286, %v1233, 0
  %v1321 = vsel %vm1286, %v1234, 0
  %v1324 = vsel %vm1286, %v1235, 0
  %v1327 = vsel %vm1286, %v1236, 0
  %v1330 = vsel %vm1286, %v1237, 0
  %v1333 = vsel %vm1286, %v1238, 0
  %v1336 = vsel %vm1286, %v1239, 0
  %v1339 = vsel %vm1286, %v1240, 0
  %v1342 = vsel %vm1286, %v1241, 0
  %v1345 = vsel %vm1286, %v1242, 0
  %v1348 = vsel %vm1286, %v1243, 0
  %v1351 = vsel %vm1286, %v1244, 0
  %v1354 = vsel %vm1286, %v1245, 0
  %v1357 = vsel %vm1286, %v1246, 0
  %1359 = vmatprep.subr.bf16.mxu0 0
  %1360 = vmatpush1.bf16.msra.mxu0 %v1278
  %1361 = vmatprep.subr.bf16.mxu0 0
  %1362 = vmatpush1.bf16.msra.mxu0 %v1279
  %1363 = vmatprep.subr.bf16.mxu0 0
  %1364 = vmatpush1.bf16.msra.mxu0 %v1280
  %1365 = vmatprep.subr.bf16.mxu0 0
  %1366 = vmatpush1.bf16.msra.mxu0 %v1281
  %1367 = vmatprep.subr.bf16.mxu0 0
  %1368 = vmatpush1.bf16.msra.mxu0 0
  %1369 = vmatprep.subr.bf16.mxu0 0
  %1370 = vmatpush1.bf16.msra.mxu0 0
  %1371 = vmatprep.subr.bf16.mxu0 0
  %1372 = vmatpush1.bf16.msra.mxu0 0
  %1373 = vmatprep.subr.bf16.mxu0 0
  %1374 = vmatpush1.bf16.msra.mxu0 0
  %1375 = vmatprep.subr.bf16.mxu0 0
  %1376 = vmatpush1.bf16.msra.mxu0 0
  %1377 = vmatprep.subr.bf16.mxu0 0
  %1378 = vmatpush1.bf16.msra.mxu0 0
  %1379 = vmatprep.subr.bf16.mxu0 0
  %1380 = vmatpush1.bf16.msra.mxu0 0
  %1381 = vmatprep.subr.bf16.mxu0 0
  %1382 = vmatpush1.bf16.msra.mxu0 0
  %1383 = vmatprep.subr.bf16.mxu0 0
  %1384 = vmatpush1.bf16.msra.mxu0 0
  %1385 = vmatprep.subr.bf16.mxu0 0
  %1386 = vmatpush1.bf16.msra.mxu0 0
  %1387 = vmatprep.subr.bf16.mxu0 0
  %1388 = vmatpush1.bf16.msra.mxu0 0
  %1389 = vmatprep.subr.bf16.mxu0 0
  %1390 = vmatpush1.bf16.msra.mxu0 0
  %1391 = vmatprep.mubr.bf16.mxu0 0
  %1392 = vmatmul.mubr.bf16.gmra.mrb[0].mxu0 %v1288
  %v1393 = vpop.f32.mrb[0].mxu0
  %v1394 = vadd.f32 %v1260, %v1393
  %v1395 = vpop.f32.mrb[0].mxu0
  %v1396 = vpop.f32.mrb[0].mxu0
  %v1397 = vadd.f32 %v1260, %v1396
  %v1398 = vpop.f32.mrb[0].mxu0
  %1399 = vmatprep.mubr.bf16.mxu0 0
  %1400 = vmatmul.mubr.bf16.gmra.mrb[0].mxu0 %v1291
  %v1401 = vpop.f32.mrb[0].mxu0
  %v1402 = vadd.f32 %v1260, %v1401
  %v1403 = vpop.f32.mrb[0].mxu0
  %v1404 = vpop.f32.mrb[0].mxu0
  %v1405 = vadd.f32 %v1260, %v1404
  %v1406 = vpop.f32.mrb[0].mxu0
  %1407 = vmatprep.mubr.bf16.mxu0 0
  %1408 = vmatmul.mubr.bf16.gmra.mrb[0].mxu0 %v1294
  %v1409 = vpop.f32.mrb[0].mxu0
  %v1410 = vadd.f32 %v1260, %v1409
  %v1411 = vpop.f32.mrb[0].mxu0
  %v1412 = vpop.f32.mrb[0].mxu0
  %v1413 = vadd.f32 %v1260, %v1412
  %v1414 = vpop.f32.mrb[0].mxu0
  %1415 = vmatprep.mubr.bf16.mxu0 0
  %1416 = vmatmul.mubr.bf16.gmra.mrb[0].mxu0 %v1297
  %v1417 = vpop.f32.mrb[0].mxu0
  %v1418 = vadd.f32 %v1260, %v1417
  %v1419 = vpop.f32.mrb[0].mxu0
  %v1420 = vpop.f32.mrb[0].mxu0
  %v1421 = vadd.f32 %v1260, %v1420
  %v1422 = vpop.f32.mrb[0].mxu0
  %1423 = vmatprep.mubr.bf16.mxu0 0
  %1424 = vmatmul.mubr.bf16.gmra.mrb[0].mxu0 %v1300
  %v1425 = vpop.f32.mrb[0].mxu0
  %v1426 = vadd.f32 %v1260, %v1425
  %v1427 = vpop.f32.mrb[0].mxu0
  %v1428 = vpop.f32.mrb[0].mxu0
  %v1429 = vadd.f32 %v1260, %v1428
  %v1430 = vpop.f32.mrb[0].mxu0
  %1431 = vmatprep.mubr.bf16.mxu0 0
  %1432 = vmatmul.mubr.bf16.gmra.mrb[0].mxu0 %v1303
  %v1433 = vpop.f32.mrb[0].mxu0
  %v1434 = vadd.f32 %v1260, %v1433
  %v1435 = vpop.f32.mrb[0].mxu0
  %v1436 = vpop.f32.mrb[0].mxu0
  %v1437 = vadd.f32 %v1260, %v1436
  %v1438 = vpop.f32.mrb[0].mxu0
  %1439 = vmatprep.mubr.bf16.mxu0 0
  %1440 = vmatmul.mubr.bf16.gmra.mrb[0].mxu0 %v1306
  %v1441 = vpop.f32.mrb[0].mxu0
  %v1442 = vadd.f32 %v1260, %v1441
  %v1443 = vpop.f32.mrb[0].mxu0
  %v1444 = vpop.f32.mrb[0].mxu0
  %v1445 = vadd.f32 %v1260, %v1444
  %v1446 = vpop.f32.mrb[0].mxu0
  %1447 = vmatprep.mubr.bf16.mxu0 0
  %1448 = vmatmul.mubr.bf16.gmra.mrb[0].mxu0 %v1309
  %v1449 = vpop.f32.mrb[0].mxu0
  %v1450 = vadd.f32 %v1260, %v1449
  %v1451 = vpop.f32.mrb[0].mxu0
  %v1452 = vpop.f32.mrb[0].mxu0
  %v1453 = vadd.f32 %v1260, %v1452
  %v1454 = vpop.f32.mrb[0].mxu0
  %1455 = vmatprep.mubr.bf16.mxu0 0
  %1456 = vmatmul.mubr.bf16.gmra.mrb[0].mxu0 %v1312
  %v1457 = vpop.f32.mrb[0].mxu0
  %v1458 = vadd.f32 %v1260, %v1457
  %v1459 = vpop.f32.mrb[0].mxu0
  %v1460 = vpop.f32.mrb[0].mxu0
  %v1461 = vadd.f32 %v1260, %v1460
  %v1462 = vpop.f32.mrb[0].mxu0
  %1463 = vmatprep.mubr.bf16.mxu0 0
  %1464 = vmatmul.mubr.bf16.gmra.mrb[0].mxu0 %v1315
  %v1465 = vpop.f32.mrb[0].mxu0
  %v1466 = vadd.f32 %v1260, %v1465
  %v1467 = vpop.f32.mrb[0].mxu0
  %v1468 = vpop.f32.mrb[0].mxu0
  %v1469 = vadd.f32 %v1260, %v1468
  %v1470 = vpop.f32.mrb[0].mxu0
  %1471 = vmatprep.mubr.bf16.mxu0 0
  %1472 = vmatmul.mubr.bf16.gmra.mrb[0].mxu0 %v1318
  %v1473 = vpop.f32.mrb[0].mxu0
  %v1474 = vadd.f32 %v1260, %v1473
  %v1475 = vpop.f32.mrb[0].mxu0
  %v1476 = vpop.f32.mrb[0].mxu0
  %v1477 = vadd.f32 %v1260, %v1476
  %v1478 = vpop.f32.mrb[0].mxu0
  %1479 = vmatprep.mubr.bf16.mxu0 0
  %1480 = vmatmul.mubr.bf16.gmra.mrb[0].mxu0 %v1321
  %v1481 = vpop.f32.mrb[0].mxu0
  %v1482 = vadd.f32 %v1260, %v1481
  %v1483 = vpop.f32.mrb[0].mxu0
  %v1484 = vpop.f32.mrb[0].mxu0
  %v1485 = vadd.f32 %v1260, %v1484
  %v1486 = vpop.f32.mrb[0].mxu0
  %1487 = vmatprep.mubr.bf16.mxu0 0
  %1488 = vmatmul.mubr.bf16.gmra.mrb[0].mxu0 %v1324
  %v1489 = vpop.f32.mrb[0].mxu0
  %v1490 = vadd.f32 %v1260, %v1489
  %v1491 = vpop.f32.mrb[0].mxu0
  %v1492 = vpop.f32.mrb[0].mxu0
  %v1493 = vadd.f32 %v1260, %v1492
  %v1494 = vpop.f32.mrb[0].mxu0
  %1495 = vmatprep.mubr.bf16.mxu0 0
  %1496 = vmatmul.mubr.bf16.gmra.mrb[0].mxu0 %v1327
  %v1497 = vpop.f32.mrb[0].mxu0
  %v1498 = vadd.f32 %v1260, %v1497
  %v1499 = vpop.f32.mrb[0].mxu0
  %v1500 = vpop.f32.mrb[0].mxu0
  %v1501 = vadd.f32 %v1260, %v1500
  %v1502 = vpop.f32.mrb[0].mxu0
  %1503 = vmatprep.mubr.bf16.mxu0 0
  %1504 = vmatmul.mubr.bf16.gmra.mrb[0].mxu0 %v1330
  %v1505 = vpop.f32.mrb[0].mxu0
  %v1506 = vadd.f32 %v1260, %v1505
  %v1507 = vpop.f32.mrb[0].mxu0
  %v1508 = vpop.f32.mrb[0].mxu0
  %v1509 = vadd.f32 %v1260, %v1508
  %v1510 = vpop.f32.mrb[0].mxu0
  %1511 = vmatprep.mubr.bf16.mxu0 0
  %1512 = vmatmul.mubr.bf16.gmra.mrb[0].mxu0 %v1333
  %v1513 = vpop.f32.mrb[0].mxu0
  %v1514 = vadd.f32 %v1260, %v1513
  %v1515 = vpop.f32.mrb[0].mxu0
  %v1516 = vpop.f32.mrb[0].mxu0
  %v1517 = vadd.f32 %v1260, %v1516
  %v1518 = vpop.f32.mrb[0].mxu0
  %1519 = vmatprep.mubr.bf16.mxu0 0
  %1520 = vmatmul.mubr.bf16.gmra.mrb[0].mxu0 %v1336
  %v1521 = vpop.f32.mrb[0].mxu0
  %v1522 = vadd.f32 %v1260, %v1521
  %v1523 = vpop.f32.mrb[0].mxu0
  %v1524 = vpop.f32.mrb[0].mxu0
  %v1525 = vadd.f32 %v1260, %v1524
  %v1526 = vpop.f32.mrb[0].mxu0
  %1527 = vmatprep.mubr.bf16.mxu0 0
  %1528 = vmatmul.mubr.bf16.gmra.mrb[0].mxu0 %v1339
  %v1529 = vpop.f32.mrb[0].mxu0
  %v1530 = vadd.f32 %v1260, %v1529
  %v1531 = vpop.f32.mrb[0].mxu0
  %v1532 = vpop.f32.mrb[0].mxu0
  %v1533 = vadd.f32 %v1260, %v1532
  %v1534 = vpop.f32.mrb[0].mxu0
  %1535 = vmatprep.mubr.bf16.mxu0 0
  %1536 = vmatmul.mubr.bf16.gmra.mrb[0].mxu0 %v1342
  %v1537 = vpop.f32.mrb[0].mxu0
  %v1538 = vadd.f32 %v1260, %v1537
  %v1539 = vpop.f32.mrb[0].mxu0
  %v1540 = vpop.f32.mrb[0].mxu0
  %v1541 = vadd.f32 %v1260, %v1540
  %v1542 = vpop.f32.mrb[0].mxu0
  %1543 = vmatprep.mubr.bf16.mxu0 0
  %1544 = vmatmul.mubr.bf16.gmra.mrb[0].mxu0 %v1345
  %v1545 = vpop.f32.mrb[0].mxu0
  %v1546 = vadd.f32 %v1260, %v1545
  %v1547 = vpop.f32.mrb[0].mxu0
  %v1548 = vpop.f32.mrb[0].mxu0
  %v1549 = vadd.f32 %v1260, %v1548
  %v1550 = vpop.f32.mrb[0].mxu0
  %1551 = vmatprep.mubr.bf16.mxu0 0
  %1552 = vmatmul.mubr.bf16.gmra.mrb[0].mxu0 %v1348
  %v1553 = vpop.f32.mrb[0].mxu0
  %v1554 = vadd.f32 %v1260, %v1553
  %v1555 = vpop.f32.mrb[0].mxu0
  %v1556 = vpop.f32.mrb[0].mxu0
  %v1557 = vadd.f32 %v1260, %v1556
  %v1558 = vpop.f32.mrb[0].mxu0
  %1559 = vmatprep.mubr.bf16.mxu0 0
  %1560 = vmatmul.mubr.bf16.gmra.mrb[0].mxu0 %v1351
  %v1561 = vpop.f32.mrb[0].mxu0
  %v1562 = vadd.f32 %v1260, %v1561
  %v1563 = vpop.f32.mrb[0].mxu0
  %v1564 = vpop.f32.mrb[0].mxu0
  %v1565 = vadd.f32 %v1260, %v1564
  %v1566 = vpop.f32.mrb[0].mxu0
  %1567 = vmatprep.mubr.bf16.mxu0 0
  %1568 = vmatmul.mubr.bf16.gmra.mrb[0].mxu0 %v1354
  %v1569 = vpop.f32.mrb[0].mxu0
  %v1570 = vadd.f32 %v1260, %v1569
  %v1571 = vpop.f32.mrb[0].mxu0
  %v1572 = vpop.f32.mrb[0].mxu0
  %v1573 = vadd.f32 %v1260, %v1572
  %v1574 = vpop.f32.mrb[0].mxu0
  %1575 = vmatprep.mubr.bf16.mxu0 0
  %1576 = vmatmul.mubr.bf16.gmra.mrb[0].mxu0 %v1357
  %v1577 = vpop.f32.mrb[0].mxu0
  %v1578 = vadd.f32 %v1260, %v1577
  %v1579 = vpop.f32.mrb[0].mxu0
  %v1580 = vpop.f32.mrb[0].mxu0
  %v1581 = vadd.f32 %v1260, %v1580
  %v1582 = vpop.f32.mrb[0].mxu0
  %1583 = vdwg.mxu0
  %v1584 = vmul.f32 %v1394, %v178
  %v1585 = vmul.f32 %v1397, %v179
  %v1586 = vmul.f32 %v1402, %v180
  %v1587 = vmul.f32 %v1405, %v181
  %v1588 = vmul.f32 %v1410, %v182
  %v1589 = vmul.f32 %v1413, %v183
  %v1590 = vmul.f32 %v1418, %v184
  %v1591 = vmul.f32 %v1421, %v185
  %v1592 = vmul.f32 %v1426, %v186
  %v1593 = vmul.f32 %v1429, %v187
  %v1594 = vmul.f32 %v1434, %v188
  %v1595 = vmul.f32 %v1437, %v189
  %v1596 = vmul.f32 %v1442, %v190
  %v1597 = vmul.f32 %v1445, %v191
  %v1598 = vmul.f32 %v1450, %v192
  %v1599 = vmul.f32 %v1453, %v193
  %v1600 = vmul.f32 %v1458, %v194
  %v1601 = vmul.f32 %v1461, %v195
  %v1602 = vmul.f32 %v1466, %v196
  %v1603 = vmul.f32 %v1469, %v197
  %v1604 = vmul.f32 %v1474, %v198
  %v1605 = vmul.f32 %v1477, %v199
  %v1606 = vmul.f32 %v1482, %v200
  %v1607 = vmul.f32 %v1485, %v201
  %v1608 = vmul.f32 %v1490, %v202
  %v1609 = vmul.f32 %v1493, %v203
  %v1610 = vmul.f32 %v1498, %v204
  %v1611 = vmul.f32 %v1501, %v205
  %v1612 = vmul.f32 %v1506, %v206
  %v1613 = vmul.f32 %v1509, %v207
  %v1614 = vmul.f32 %v1514, %v208
  %v1615 = vmul.f32 %v1517, %v209
  %v1616 = vmul.f32 %v1522, %v210
  %v1617 = vmul.f32 %v1525, %v211
  %v1618 = vmul.f32 %v1530, %v212
  %v1619 = vmul.f32 %v1533, %v213
  %v1620 = vmul.f32 %v1538, %v214
  %v1621 = vmul.f32 %v1541, %v215
  %v1622 = vmul.f32 %v1546, %v216
  %v1623 = vmul.f32 %v1549, %v217
  %v1624 = vmul.f32 %v1554, %v218
  %v1625 = vmul.f32 %v1557, %v219
  %v1626 = vmul.f32 %v1562, %v220
  %v1627 = vmul.f32 %v1565, %v221
  %v1628 = vmul.f32 %v1570, %v222
  %v1629 = vmul.f32 %v1573, %v223
  %v1630 = vmul.f32 %v1578, %v224
  %v1631 = vmul.f32 %v1581, %v225
  %v1632 = vsel %vm322, %v1584, 0.0
  %v1633 = vsel %vm322, %v1585, 0.0
  %v1634 = vadd.f32 %v1632, %v1633
  %v1635 = vsel %vm322, %v1586, 0.0
  %v1636 = vadd.f32 %v1634, %v1635
  %v1637 = vsel %vm322, %v1587, 0.0
  %v1638 = vadd.f32 %v1636, %v1637
  %v1639 = vsel %vm322, %v1588, 0.0
  %v1640 = vadd.f32 %v1638, %v1639
  %v1641 = vsel %vm322, %v1589, 0.0
  %v1642 = vadd.f32 %v1640, %v1641
  %v1643 = vsel %vm322, %v1590, 0.0
  %v1644 = vadd.f32 %v1642, %v1643
  %v1645 = vsel %vm322, %v1591, 0.0
  %v1646 = vadd.f32 %v1644, %v1645
  %v1647 = vsel %vm322, %v1592, 0.0
  %v1648 = vadd.f32 %v1646, %v1647
  %v1649 = vsel %vm322, %v1593, 0.0
  %v1650 = vadd.f32 %v1648, %v1649
  %v1651 = vsel %vm322, %v1594, 0.0
  %v1652 = vadd.f32 %v1650, %v1651
  %v1653 = vsel %vm322, %v1595, 0.0
  %v1654 = vadd.f32 %v1652, %v1653
  %v1655 = vsel %vm322, %v1596, 0.0
  %v1656 = vadd.f32 %v1654, %v1655
  %v1657 = vsel %vm322, %v1597, 0.0
  %v1658 = vadd.f32 %v1656, %v1657
  %v1659 = vsel %vm322, %v1598, 0.0
  %v1660 = vadd.f32 %v1658, %v1659
  %v1661 = vsel %vm322, %v1599, 0.0
  %v1662 = vadd.f32 %v1660, %v1661
  %v1663 = vsel %vm322, %v1600, 0.0
  %v1664 = vadd.f32 %v1662, %v1663
  %v1665 = vsel %vm322, %v1601, 0.0
  %v1666 = vadd.f32 %v1664, %v1665
  %v1667 = vsel %vm322, %v1602, 0.0
  %v1668 = vadd.f32 %v1666, %v1667
  %v1669 = vsel %vm322, %v1603, 0.0
  %v1670 = vadd.f32 %v1668, %v1669
  %v1671 = vsel %vm322, %v1604, 0.0
  %v1672 = vadd.f32 %v1670, %v1671
  %v1673 = vsel %vm322, %v1605, 0.0
  %v1674 = vadd.f32 %v1672, %v1673
  %v1675 = vsel %vm322, %v1606, 0.0
  %v1676 = vadd.f32 %v1674, %v1675
  %v1677 = vsel %vm322, %v1607, 0.0
  %v1678 = vadd.f32 %v1676, %v1677
  %v1679 = vsel %vm322, %v1608, 0.0
  %v1680 = vadd.f32 %v1678, %v1679
  %v1681 = vsel %vm322, %v1609, 0.0
  %v1682 = vadd.f32 %v1680, %v1681
  %v1683 = vsel %vm322, %v1610, 0.0
  %v1684 = vadd.f32 %v1682, %v1683
  %v1685 = vsel %vm322, %v1611, 0.0
  %v1686 = vadd.f32 %v1684, %v1685
  %v1687 = vsel %vm322, %v1612, 0.0
  %v1688 = vadd.f32 %v1686, %v1687
  %v1689 = vsel %vm322, %v1613, 0.0
  %v1690 = vadd.f32 %v1688, %v1689
  %v1691 = vsel %vm322, %v1614, 0.0
  %v1692 = vadd.f32 %v1690, %v1691
  %v1693 = vsel %vm322, %v1615, 0.0
  %v1694 = vadd.f32 %v1692, %v1693
  %v1695 = vsel %vm322, %v1616, 0.0
  %v1696 = vadd.f32 %v1694, %v1695
  %v1697 = vsel %vm322, %v1617, 0.0
  %v1698 = vadd.f32 %v1696, %v1697
  %v1699 = vsel %vm322, %v1618, 0.0
  %v1700 = vadd.f32 %v1698, %v1699
  %v1701 = vsel %vm322, %v1619, 0.0
  %v1702 = vadd.f32 %v1700, %v1701
  %v1703 = vsel %vm322, %v1620, 0.0
  %v1704 = vadd.f32 %v1702, %v1703
  %v1705 = vsel %vm322, %v1621, 0.0
  %v1706 = vadd.f32 %v1704, %v1705
  %v1707 = vsel %vm322, %v1622, 0.0
  %v1708 = vadd.f32 %v1706, %v1707
  %v1709 = vsel %vm322, %v1623, 0.0
  %v1710 = vadd.f32 %v1708, %v1709
  %v1711 = vsel %vm322, %v1624, 0.0
  %v1712 = vadd.f32 %v1710, %v1711
  %v1713 = vsel %vm322, %v1625, 0.0
  %v1714 = vadd.f32 %v1712, %v1713
  %v1715 = vsel %vm322, %v1626, 0.0
  %v1716 = vadd.f32 %v1714, %v1715
  %v1717 = vsel %vm322, %v1627, 0.0
  %v1718 = vadd.f32 %v1716, %v1717
  %v1719 = vsel %vm322, %v1628, 0.0
  %v1720 = vadd.f32 %v1718, %v1719
  %v1721 = vsel %vm322, %v1629, 0.0
  %v1722 = vadd.f32 %v1720, %v1721
  %v1723 = vsel %vm322, %v1630, 0.0
  %v1724 = vadd.f32 %v1722, %v1723
  %v1725 = vsel %vm322, %v1631, 0.0
  %v1726 = vadd.f32 %v1724, %v1725
  %v1727 = vrot.slane %v1726, 4
  %v1728 = vadd.f32 %v1726, %v1727
  %v1729 = vrot.slane %v1728, 2
  %v1730 = vadd.f32 %v1728, %v1729
  %v1731 = vrot.slane %v1730, 1
  %v1732 = vadd.f32 %v1730, %v1731
  %v1733 = vmul.f32 %v1732, 0.0033333334
  %v1734 = vsub.f32 %v1394, %v1733
  %v1735 = vsub.f32 %v1397, %v1733
  %v1736 = vsub.f32 %v1402, %v1733
  %v1737 = vsub.f32 %v1405, %v1733
  %v1738 = vsub.f32 %v1410, %v1733
  %v1739 = vsub.f32 %v1413, %v1733
  %v1740 = vsub.f32 %v1418, %v1733
  %v1741 = vsub.f32 %v1421, %v1733
  %v1742 = vsub.f32 %v1426, %v1733
  %v1743 = vsub.f32 %v1429, %v1733
  %v1744 = vsub.f32 %v1434, %v1733
  %v1745 = vsub.f32 %v1437, %v1733
  %v1746 = vsub.f32 %v1442, %v1733
  %v1747 = vsub.f32 %v1445, %v1733
  %v1748 = vsub.f32 %v1450, %v1733
  %v1749 = vsub.f32 %v1453, %v1733
  %v1750 = vsub.f32 %v1458, %v1733
  %v1751 = vsub.f32 %v1461, %v1733
  %v1752 = vsub.f32 %v1466, %v1733
  %v1753 = vsub.f32 %v1469, %v1733
  %v1754 = vsub.f32 %v1474, %v1733
  %v1755 = vsub.f32 %v1477, %v1733
  %v1756 = vsub.f32 %v1482, %v1733
  %v1757 = vsub.f32 %v1485, %v1733
  %v1758 = vsub.f32 %v1490, %v1733
  %v1759 = vsub.f32 %v1493, %v1733
  %v1760 = vsub.f32 %v1498, %v1733
  %v1761 = vsub.f32 %v1501, %v1733
  %v1762 = vsub.f32 %v1506, %v1733
  %v1763 = vsub.f32 %v1509, %v1733
  %v1764 = vsub.f32 %v1514, %v1733
  %v1765 = vsub.f32 %v1517, %v1733
  %v1766 = vsub.f32 %v1522, %v1733
  %v1767 = vsub.f32 %v1525, %v1733
  %v1768 = vsub.f32 %v1530, %v1733
  %v1769 = vsub.f32 %v1533, %v1733
  %v1770 = vsub.f32 %v1538, %v1733
  %v1771 = vsub.f32 %v1541, %v1733
  %v1772 = vsub.f32 %v1546, %v1733
  %v1773 = vsub.f32 %v1549, %v1733
  %v1774 = vsub.f32 %v1554, %v1733
  %v1775 = vsub.f32 %v1557, %v1733
  %v1776 = vsub.f32 %v1562, %v1733
  %v1777 = vsub.f32 %v1565, %v1733
  %v1778 = vsub.f32 %v1570, %v1733
  %v1779 = vsub.f32 %v1573, %v1733
  %v1780 = vsub.f32 %v1578, %v1733
  %v1781 = vsub.f32 %v1581, %v1733
  %v1782 = vmul.f32 %v1734, %v1734
  %v1783 = vmul.f32 %v1735, %v1735
  %v1784 = vmul.f32 %v1736, %v1736
  %v1785 = vmul.f32 %v1737, %v1737
  %v1786 = vmul.f32 %v1738, %v1738
  %v1787 = vmul.f32 %v1739, %v1739
  %v1788 = vmul.f32 %v1740, %v1740
  %v1789 = vmul.f32 %v1741, %v1741
  %v1790 = vmul.f32 %v1742, %v1742
  %v1791 = vmul.f32 %v1743, %v1743
  %v1792 = vmul.f32 %v1744, %v1744
  %v1793 = vmul.f32 %v1745, %v1745
  %v1794 = vmul.f32 %v1746, %v1746
  %v1795 = vmul.f32 %v1747, %v1747
  %v1796 = vmul.f32 %v1748, %v1748
  %v1797 = vmul.f32 %v1749, %v1749
  %v1798 = vmul.f32 %v1750, %v1750
  %v1799 = vmul.f32 %v1751, %v1751
  %v1800 = vmul.f32 %v1752, %v1752
  %v1801 = vmul.f32 %v1753, %v1753
  %v1802 = vmul.f32 %v1754, %v1754
  %v1803 = vmul.f32 %v1755, %v1755
  %v1804 = vmul.f32 %v1756, %v1756
  %v1805 = vmul.f32 %v1757, %v1757
  %v1806 = vmul.f32 %v1758, %v1758
  %v1807 = vmul.f32 %v1759, %v1759
  %v1808 = vmul.f32 %v1760, %v1760
  %v1809 = vmul.f32 %v1761, %v1761
  %v1810 = vmul.f32 %v1762, %v1762
  %v1811 = vmul.f32 %v1763, %v1763
  %v1812 = vmul.f32 %v1764, %v1764
  %v1813 = vmul.f32 %v1765, %v1765
  %v1814 = vmul.f32 %v1766, %v1766
  %v1815 = vmul.f32 %v1767, %v1767
  %v1816 = vmul.f32 %v1768, %v1768
  %v1817 = vmul.f32 %v1769, %v1769
  %v1818 = vmul.f32 %v1770, %v1770
  %v1819 = vmul.f32 %v1771, %v1771
  %v1820 = vmul.f32 %v1772, %v1772
  %v1821 = vmul.f32 %v1773, %v1773
  %v1822 = vmul.f32 %v1774, %v1774
  %v1823 = vmul.f32 %v1775, %v1775
  %v1824 = vmul.f32 %v1776, %v1776
  %v1825 = vmul.f32 %v1777, %v1777
  %v1826 = vmul.f32 %v1778, %v1778
  %v1827 = vmul.f32 %v1779, %v1779
  %v1828 = vmul.f32 %v1780, %v1780
  %v1829 = vmul.f32 %v1781, %v1781
  %v1830 = vmul.f32 %v1782, %v178
  %v1831 = vmul.f32 %v1783, %v179
  %v1832 = vmul.f32 %v1784, %v180
  %v1833 = vmul.f32 %v1785, %v181
  %v1834 = vmul.f32 %v1786, %v182
  %v1835 = vmul.f32 %v1787, %v183
  %v1836 = vmul.f32 %v1788, %v184
  %v1837 = vmul.f32 %v1789, %v185
  %v1838 = vmul.f32 %v1790, %v186
  %v1839 = vmul.f32 %v1791, %v187
  %v1840 = vmul.f32 %v1792, %v188
  %v1841 = vmul.f32 %v1793, %v189
  %v1842 = vmul.f32 %v1794, %v190
  %v1843 = vmul.f32 %v1795, %v191
  %v1844 = vmul.f32 %v1796, %v192
  %v1845 = vmul.f32 %v1797, %v193
  %v1846 = vmul.f32 %v1798, %v194
  %v1847 = vmul.f32 %v1799, %v195
  %v1848 = vmul.f32 %v1800, %v196
  %v1849 = vmul.f32 %v1801, %v197
  %v1850 = vmul.f32 %v1802, %v198
  %v1851 = vmul.f32 %v1803, %v199
  %v1852 = vmul.f32 %v1804, %v200
  %v1853 = vmul.f32 %v1805, %v201
  %v1854 = vmul.f32 %v1806, %v202
  %v1855 = vmul.f32 %v1807, %v203
  %v1856 = vmul.f32 %v1808, %v204
  %v1857 = vmul.f32 %v1809, %v205
  %v1858 = vmul.f32 %v1810, %v206
  %v1859 = vmul.f32 %v1811, %v207
  %v1860 = vmul.f32 %v1812, %v208
  %v1861 = vmul.f32 %v1813, %v209
  %v1862 = vmul.f32 %v1814, %v210
  %v1863 = vmul.f32 %v1815, %v211
  %v1864 = vmul.f32 %v1816, %v212
  %v1865 = vmul.f32 %v1817, %v213
  %v1866 = vmul.f32 %v1818, %v214
  %v1867 = vmul.f32 %v1819, %v215
  %v1868 = vmul.f32 %v1820, %v216
  %v1869 = vmul.f32 %v1821, %v217
  %v1870 = vmul.f32 %v1822, %v218
  %v1871 = vmul.f32 %v1823, %v219
  %v1872 = vmul.f32 %v1824, %v220
  %v1873 = vmul.f32 %v1825, %v221
  %v1874 = vmul.f32 %v1826, %v222
  %v1875 = vmul.f32 %v1827, %v223
  %v1876 = vmul.f32 %v1828, %v224
  %v1877 = vmul.f32 %v1829, %v225
  %v1878 = vsel %vm322, %v1830, 0.0
  %v1879 = vsel %vm322, %v1831, 0.0
  %v1880 = vadd.f32 %v1878, %v1879
  %v1881 = vsel %vm322, %v1832, 0.0
  %v1882 = vadd.f32 %v1880, %v1881
  %v1883 = vsel %vm322, %v1833, 0.0
  %v1884 = vadd.f32 %v1882, %v1883
  %v1885 = vsel %vm322, %v1834, 0.0
  %v1886 = vadd.f32 %v1884, %v1885
  %v1887 = vsel %vm322, %v1835, 0.0
  %v1888 = vadd.f32 %v1886, %v1887
  %v1889 = vsel %vm322, %v1836, 0.0
  %v1890 = vadd.f32 %v1888, %v1889
  %v1891 = vsel %vm322, %v1837, 0.0
  %v1892 = vadd.f32 %v1890, %v1891
  %v1893 = vsel %vm322, %v1838, 0.0
  %v1894 = vadd.f32 %v1892, %v1893
  %v1895 = vsel %vm322, %v1839, 0.0
  %v1896 = vadd.f32 %v1894, %v1895
  %v1897 = vsel %vm322, %v1840, 0.0
  %v1898 = vadd.f32 %v1896, %v1897
  %v1899 = vsel %vm322, %v1841, 0.0
  %v1900 = vadd.f32 %v1898, %v1899
  %v1901 = vsel %vm322, %v1842, 0.0
  %v1902 = vadd.f32 %v1900, %v1901
  %v1903 = vsel %vm322, %v1843, 0.0
  %v1904 = vadd.f32 %v1902, %v1903
  %v1905 = vsel %vm322, %v1844, 0.0
  %v1906 = vadd.f32 %v1904, %v1905
  %v1907 = vsel %vm322, %v1845, 0.0
  %v1908 = vadd.f32 %v1906, %v1907
  %v1909 = vsel %vm322, %v1846, 0.0
  %v1910 = vadd.f32 %v1908, %v1909
  %v1911 = vsel %vm322, %v1847, 0.0
  %v1912 = vadd.f32 %v1910, %v1911
  %v1913 = vsel %vm322, %v1848, 0.0
  %v1914 = vadd.f32 %v1912, %v1913
  %v1915 = vsel %vm322, %v1849, 0.0
  %v1916 = vadd.f32 %v1914, %v1915
  %v1917 = vsel %vm322, %v1850, 0.0
  %v1918 = vadd.f32 %v1916, %v1917
  %v1919 = vsel %vm322, %v1851, 0.0
  %v1920 = vadd.f32 %v1918, %v1919
  %v1921 = vsel %vm322, %v1852, 0.0
  %v1922 = vadd.f32 %v1920, %v1921
  %v1923 = vsel %vm322, %v1853, 0.0
  %v1924 = vadd.f32 %v1922, %v1923
  %v1925 = vsel %vm322, %v1854, 0.0
  %v1926 = vadd.f32 %v1924, %v1925
  %v1927 = vsel %vm322, %v1855, 0.0
  %v1928 = vadd.f32 %v1926, %v1927
  %v1929 = vsel %vm322, %v1856, 0.0
  %v1930 = vadd.f32 %v1928, %v1929
  %v1931 = vsel %vm322, %v1857, 0.0
  %v1932 = vadd.f32 %v1930, %v1931
  %v1933 = vsel %vm322, %v1858, 0.0
  %v1934 = vadd.f32 %v1932, %v1933
  %v1935 = vsel %vm322, %v1859, 0.0
  %v1936 = vadd.f32 %v1934, %v1935
  %v1937 = vsel %vm322, %v1860, 0.0
  %v1938 = vadd.f32 %v1936, %v1937
  %v1939 = vsel %vm322, %v1861, 0.0
  %v1940 = vadd.f32 %v1938, %v1939
  %v1941 = vsel %vm322, %v1862, 0.0
  %v1942 = vadd.f32 %v1940, %v1941
  %v1943 = vsel %vm322, %v1863, 0.0
  %v1944 = vadd.f32 %v1942, %v1943
  %v1945 = vsel %vm322, %v1864, 0.0
  %v1946 = vadd.f32 %v1944, %v1945
  %v1947 = vsel %vm322, %v1865, 0.0
  %v1948 = vadd.f32 %v1946, %v1947
  %v1949 = vsel %vm322, %v1866, 0.0
  %v1950 = vadd.f32 %v1948, %v1949
  %v1951 = vsel %vm322, %v1867, 0.0
  %v1952 = vadd.f32 %v1950, %v1951
  %v1953 = vsel %vm322, %v1868, 0.0
  %v1954 = vadd.f32 %v1952, %v1953
  %v1955 = vsel %vm322, %v1869, 0.0
  %v1956 = vadd.f32 %v1954, %v1955
  %v1957 = vsel %vm322, %v1870, 0.0
  %v1958 = vadd.f32 %v1956, %v1957
  %v1959 = vsel %vm322, %v1871, 0.0
  %v1960 = vadd.f32 %v1958, %v1959
  %v1961 = vsel %vm322, %v1872, 0.0
  %v1962 = vadd.f32 %v1960, %v1961
  %v1963 = vsel %vm322, %v1873, 0.0
  %v1964 = vadd.f32 %v1962, %v1963
  %v1965 = vsel %vm322, %v1874, 0.0
  %v1966 = vadd.f32 %v1964, %v1965
  %v1967 = vsel %vm322, %v1875, 0.0
  %v1968 = vadd.f32 %v1966, %v1967
  %v1969 = vsel %vm322, %v1876, 0.0
  %v1970 = vadd.f32 %v1968, %v1969
  %v1971 = vsel %vm322, %v1877, 0.0
  %v1972 = vadd.f32 %v1970, %v1971
  %v1973 = vrot.slane %v1972, 4
  %v1974 = vadd.f32 %v1972, %v1973
  %v1975 = vrot.slane %v1974, 2
  %v1976 = vadd.f32 %v1974, %v1975
  %v1977 = vrot.slane %v1976, 1
  %v1978 = vadd.f32 %v1976, %v1977
  %v1979 = vmul.f32 %v1978, 0.0033333334
  %v1980 = vadd.f32 %v1979, 1e-05
  %v1981 = vrsqrt.pop %v1980
  %v1982 = vmul.f32 %v1734, %v1981
  %v1983 = vmul.f32 %v1735, %v1981
  %v1984 = vmul.f32 %v1736, %v1981
  %v1985 = vmul.f32 %v1737, %v1981
  %v1986 = vmul.f32 %v1738, %v1981
  %v1987 = vmul.f32 %v1739, %v1981
  %v1988 = vmul.f32 %v1740, %v1981
  %v1989 = vmul.f32 %v1741, %v1981
  %v1990 = vmul.f32 %v1742, %v1981
  %v1991 = vmul.f32 %v1743, %v1981
  %v1992 = vmul.f32 %v1744, %v1981
  %v1993 = vmul.f32 %v1745, %v1981
  %v1994 = vmul.f32 %v1746, %v1981
  %v1995 = vmul.f32 %v1747, %v1981
  %v1996 = vmul.f32 %v1748, %v1981
  %v1997 = vmul.f32 %v1749, %v1981
  %v1998 = vmul.f32 %v1750, %v1981
  %v1999 = vmul.f32 %v1751, %v1981
  %v2000 = vmul.f32 %v1752, %v1981
  %v2001 = vmul.f32 %v1753, %v1981
  %v2002 = vmul.f32 %v1754, %v1981
  %v2003 = vmul.f32 %v1755, %v1981
  %v2004 = vmul.f32 %v1756, %v1981
  %v2005 = vmul.f32 %v1757, %v1981
  %v2006 = vmul.f32 %v1758, %v1981
  %v2007 = vmul.f32 %v1759, %v1981
  %v2008 = vmul.f32 %v1760, %v1981
  %v2009 = vmul.f32 %v1761, %v1981
  %v2010 = vmul.f32 %v1762, %v1981
  %v2011 = vmul.f32 %v1763, %v1981
  %v2012 = vmul.f32 %v1764, %v1981
  %v2013 = vmul.f32 %v1765, %v1981
  %v2014 = vmul.f32 %v1766, %v1981
  %v2015 = vmul.f32 %v1767, %v1981
  %v2016 = vmul.f32 %v1768, %v1981
  %v2017 = vmul.f32 %v1769, %v1981
  %v2018 = vmul.f32 %v1770, %v1981
  %v2019 = vmul.f32 %v1771, %v1981
  %v2020 = vmul.f32 %v1772, %v1981
  %v2021 = vmul.f32 %v1773, %v1981
  %v2022 = vmul.f32 %v1774, %v1981
  %v2023 = vmul.f32 %v1775, %v1981
  %v2024 = vmul.f32 %v1776, %v1981
  %v2025 = vmul.f32 %v1777, %v1981
  %v2026 = vmul.f32 %v1778, %v1981
  %v2027 = vmul.f32 %v1779, %v1981
  %v2028 = vmul.f32 %v1780, %v1981
  %v2029 = vmul.f32 %v1781, %v1981
  %v2030 = vld [vmem:[%s7] sm:$0x1]
  %v2032 = vlaneseq
  %v2033 = vshrl.u32 %v2032, 7
  %v2034 = vsub.s32 0, %v2033
  %v2035 = vrot.slane %v2030, %v2034
  %v2037 = vmul.f32 %v1982, %v2035
  %v2038 = vmul.f32 %v1983, %v2035
  %v2039 = vmul.f32 %v1984, %v2035
  %v2040 = vmul.f32 %v1985, %v2035
  %v2041 = vmul.f32 %v1986, %v2035
  %v2042 = vmul.f32 %v1987, %v2035
  %v2043 = vmul.f32 %v1988, %v2035
  %v2044 = vmul.f32 %v1989, %v2035
  %v2045 = vmul.f32 %v1990, %v2035
  %v2046 = vmul.f32 %v1991, %v2035
  %v2047 = vmul.f32 %v1992, %v2035
  %v2048 = vmul.f32 %v1993, %v2035
  %v2049 = vmul.f32 %v1994, %v2035
  %v2050 = vmul.f32 %v1995, %v2035
  %v2051 = vmul.f32 %v1996, %v2035
  %v2052 = vmul.f32 %v1997, %v2035
  %v2053 = vmul.f32 %v1998, %v2035
  %v2054 = vmul.f32 %v1999, %v2035
  %v2055 = vmul.f32 %v2000, %v2035
  %v2056 = vmul.f32 %v2001, %v2035
  %v2057 = vmul.f32 %v2002, %v2035
  %v2058 = vmul.f32 %v2003, %v2035
  %v2059 = vmul.f32 %v2004, %v2035
  %v2060 = vmul.f32 %v2005, %v2035
  %v2061 = vmul.f32 %v2006, %v2035
  %v2062 = vmul.f32 %v2007, %v2035
  %v2063 = vmul.f32 %v2008, %v2035
  %v2064 = vmul.f32 %v2009, %v2035
  %v2065 = vmul.f32 %v2010, %v2035
  %v2066 = vmul.f32 %v2011, %v2035
  %v2067 = vmul.f32 %v2012, %v2035
  %v2068 = vmul.f32 %v2013, %v2035
  %v2069 = vmul.f32 %v2014, %v2035
  %v2070 = vmul.f32 %v2015, %v2035
  %v2071 = vmul.f32 %v2016, %v2035
  %v2072 = vmul.f32 %v2017, %v2035
  %v2073 = vmul.f32 %v2018, %v2035
  %v2074 = vmul.f32 %v2019, %v2035
  %v2075 = vmul.f32 %v2020, %v2035
  %v2076 = vmul.f32 %v2021, %v2035
  %v2077 = vmul.f32 %v2022, %v2035
  %v2078 = vmul.f32 %v2023, %v2035
  %v2079 = vmul.f32 %v2024, %v2035
  %v2080 = vmul.f32 %v2025, %v2035
  %v2081 = vmul.f32 %v2026, %v2035
  %v2082 = vmul.f32 %v2027, %v2035
  %v2083 = vmul.f32 %v2028, %v2035
  %v2084 = vmul.f32 %v2029, %v2035
  %v2085 = vld [vmem:[%s8] sm:$0x1]
  %v2087 = vlaneseq
  %v2088 = vshrl.u32 %v2087, 7
  %v2089 = vsub.s32 0, %v2088
  %v2090 = vrot.slane %v2085, %v2089
  %v2092 = vadd.f32 %v2037, %v2090
  %v2093 = vadd.f32 %v2038, %v2090
  %v2094 = vadd.f32 %v2039, %v2090
  %v2095 = vadd.f32 %v2040, %v2090
  %v2096 = vadd.f32 %v2041, %v2090
  %v2097 = vadd.f32 %v2042, %v2090
  %v2098 = vadd.f32 %v2043, %v2090
  %v2099 = vadd.f32 %v2044, %v2090
  %v2100 = vadd.f32 %v2045, %v2090
  %v2101 = vadd.f32 %v2046, %v2090
  %v2102 = vadd.f32 %v2047, %v2090
  %v2103 = vadd.f32 %v2048, %v2090
  %v2104 = vadd.f32 %v2049, %v2090
  %v2105 = vadd.f32 %v2050, %v2090
  %v2106 = vadd.f32 %v2051, %v2090
  %v2107 = vadd.f32 %v2052, %v2090
  %v2108 = vadd.f32 %v2053, %v2090
  %v2109 = vadd.f32 %v2054, %v2090
  %v2110 = vadd.f32 %v2055, %v2090
  %v2111 = vadd.f32 %v2056, %v2090
  %v2112 = vadd.f32 %v2057, %v2090
  %v2113 = vadd.f32 %v2058, %v2090
  %v2114 = vadd.f32 %v2059, %v2090
  %v2115 = vadd.f32 %v2060, %v2090
  %v2116 = vadd.f32 %v2061, %v2090
  %v2117 = vadd.f32 %v2062, %v2090
  %v2118 = vadd.f32 %v2063, %v2090
  %v2119 = vadd.f32 %v2064, %v2090
  %v2120 = vadd.f32 %v2065, %v2090
  %v2121 = vadd.f32 %v2066, %v2090
  %v2122 = vadd.f32 %v2067, %v2090
  %v2123 = vadd.f32 %v2068, %v2090
  %v2124 = vadd.f32 %v2069, %v2090
  %v2125 = vadd.f32 %v2070, %v2090
  %v2126 = vadd.f32 %v2071, %v2090
  %v2127 = vadd.f32 %v2072, %v2090
  %v2128 = vadd.f32 %v2073, %v2090
  %v2129 = vadd.f32 %v2074, %v2090
  %v2130 = vadd.f32 %v2075, %v2090
  %v2131 = vadd.f32 %v2076, %v2090
  %v2132 = vadd.f32 %v2077, %v2090
  %v2133 = vadd.f32 %v2078, %v2090
  %v2134 = vadd.f32 %v2079, %v2090
  %v2135 = vadd.f32 %v2080, %v2090
  %v2136 = vadd.f32 %v2081, %v2090
  %v2137 = vadd.f32 %v2082, %v2090
  %v2138 = vadd.f32 %v2083, %v2090
  %v2139 = vadd.f32 %v2084, %v2090
  %2140 = vst.msk [vmem:[%s9] sm:$0xff] %vm322, %v2092
  %2141 = vst.msk [vmem:[%s9 + $0x8] sm:$0xff] %vm322, %v2093
  %2142 = vst.msk [vmem:[%s9 + $0x10] sm:$0xff] %vm322, %v2094
  %2143 = vst.msk [vmem:[%s9 + $0x18] sm:$0xff] %vm322, %v2095
  %2144 = vst.msk [vmem:[%s9 + $0x20] sm:$0xff] %vm322, %v2096
  %2145 = vst.msk [vmem:[%s9 + $0x28] sm:$0xff] %vm322, %v2097
  %2146 = vst.msk [vmem:[%s9 + $0x30] sm:$0xff] %vm322, %v2098
  %2147 = vst.msk [vmem:[%s9 + $0x38] sm:$0xff] %vm322, %v2099
  %2148 = vst.msk [vmem:[%s9 + $0x40] sm:$0xff] %vm322, %v2100
  %2149 = vst.msk [vmem:[%s9 + $0x48] sm:$0xff] %vm322, %v2101
  %2150 = vst.msk [vmem:[%s9 + $0x50] sm:$0xff] %vm322, %v2102
  %2151 = vst.msk [vmem:[%s9 + $0x58] sm:$0xff] %vm322, %v2103
  %2152 = vst.msk [vmem:[%s9 + $0x60] sm:$0xff] %vm322, %v2104
  %2153 = vst.msk [vmem:[%s9 + $0x68] sm:$0xff] %vm322, %v2105
  %2154 = vst.msk [vmem:[%s9 + $0x70] sm:$0xff] %vm322, %v2106
  %2155 = vst.msk [vmem:[%s9 + $0x78] sm:$0xff] %vm322, %v2107
  %2156 = vst.msk [vmem:[%s9 + $0x80] sm:$0xff] %vm322, %v2108
  %2157 = vst.msk [vmem:[%s9 + $0x88] sm:$0xff] %vm322, %v2109
  %2158 = vst.msk [vmem:[%s9 + $0x90] sm:$0xff] %vm322, %v2110
  %2159 = vst.msk [vmem:[%s9 + $0x98] sm:$0xff] %vm322, %v2111
  %2160 = vst.msk [vmem:[%s9 + $0xa0] sm:$0xff] %vm322, %v2112
  %2161 = vst.msk [vmem:[%s9 + $0xa8] sm:$0xff] %vm322, %v2113
  %2162 = vst.msk [vmem:[%s9 + $0xb0] sm:$0xff] %vm322, %v2114
  %2163 = vst.msk [vmem:[%s9 + $0xb8] sm:$0xff] %vm322, %v2115
  %2164 = vst.msk [vmem:[%s9 + $0xc0] sm:$0xff] %vm322, %v2116
  %2165 = vst.msk [vmem:[%s9 + $0xc8] sm:$0xff] %vm322, %v2117
  %2166 = vst.msk [vmem:[%s9 + $0xd0] sm:$0xff] %vm322, %v2118
  %2167 = vst.msk [vmem:[%s9 + $0xd8] sm:$0xff] %vm322, %v2119
  %2168 = vst.msk [vmem:[%s9 + $0xe0] sm:$0xff] %vm322, %v2120
  %2169 = vst.msk [vmem:[%s9 + $0xe8] sm:$0xff] %vm322, %v2121
  %2170 = vst.msk [vmem:[%s9 + $0xf0] sm:$0xff] %vm322, %v2122
  %2171 = vst.msk [vmem:[%s9 + $0xf8] sm:$0xff] %vm322, %v2123
  %2172 = vst.msk [vmem:[%s9 + $0x100] sm:$0xff] %vm322, %v2124
  %2173 = vst.msk [vmem:[%s9 + $0x108] sm:$0xff] %vm322, %v2125
  %2174 = vst.msk [vmem:[%s9 + $0x110] sm:$0xff] %vm322, %v2126
  %2175 = vst.msk [vmem:[%s9 + $0x118] sm:$0xff] %vm322, %v2127
  %2176 = vst.msk [vmem:[%s9 + $0x120] sm:$0xff] %vm322, %v2128
  %2177 = vst.msk [vmem:[%s9 + $0x128] sm:$0xff] %vm322, %v2129
  %2178 = vst.msk [vmem:[%s9 + $0x130] sm:$0xff] %vm322, %v2130
  %2179 = vst.msk [vmem:[%s9 + $0x138] sm:$0xff] %vm322, %v2131
  %2180 = vst.msk [vmem:[%s9 + $0x140] sm:$0xff] %vm322, %v2132
  %2181 = vst.msk [vmem:[%s9 + $0x148] sm:$0xff] %vm322, %v2133
  %2182 = vst.msk [vmem:[%s9 + $0x150] sm:$0xff] %vm322, %v2134
  %2183 = vst.msk [vmem:[%s9 + $0x158] sm:$0xff] %vm322, %v2135
  %2184 = vst.msk [vmem:[%s9 + $0x160] sm:$0xff] %vm322, %v2136
  %2185 = vst.msk [vmem:[%s9 + $0x168] sm:$0xff] %vm322, %v2137
  %2186 = vst.msk [vmem:[%s9 + $0x170] sm:$0xff] %vm322, %v2138
  %2187 = vst.msk [vmem:[%s9 + $0x178] sm:$0xff] %vm322, %v2139
  // Predicated region
  $region38: #{graph_transformer_layer.5} parent=0 // pred_check
    _
  $region39: #{graph_transformer_layer.5} parent=0 // pred_check_branch
    %2189 = sbr.rel (0) target = $region41
  $region40: #{graph_transformer_layer.5} parent=0 // pred_region
    _
  $region41: #{graph_transformer_layer.5} parent=0 // pred_fallthru
    _
  // Predicated region
  $region42: #{graph_transformer_layer.5} parent=0 // pred_check
    _
  $region43: #{graph_transformer_layer.5} parent=0 // pred_check_branch
    %2191 = sbr.rel (0) target = $region45
  $region44: #{graph_transformer_layer.5} parent=0 // pred_region
    _
  $region45: #{graph_transformer_layer.5} parent=0 // pred_fallthru
    _

// kernel: graph_transformer_layer.4
$region0: #{graph_transformer_layer.4}
  #allocation0 [shape = 'u32[]', space=smem, size = 0x4, offset = 0x4, fixed_abs, tag = 'smem constant byte address 0x4 - core index']
  #allocation1 [shape = 'u32[144,128]{1,0:T(1,128)}', space=vmem, size = 0x12000, scoped, tag = 'internal scratch']
  #allocation2 [shape = 'f32[128,32]{1,0:T(8,128)}', space=vmem, size = 0x10000, scoped, tag = 'scratch operand']
  #allocation3 [shape = 'f32[128,1]{1,0:T(8,128)}', space=vmem, size = 0x10000, scoped, tag = 'scratch operand']
  %s0 = inlined_call_operand.vmem [shape: bf16[384,32], index: 0, kind: input, shape index: {}]
  %s1 = inlined_call_operand.vmem [shape: bf16[32,384], index: 1, kind: input, shape index: {}]
  %s2 = inlined_call_operand.vmem [shape: bf16[384,32], index: 2, kind: input, shape index: {}]
  %s3 = inlined_call_operand.vmem [shape: f32[384,3], index: 3, kind: input, shape index: {}]
  %s4 = inlined_call_operand.vmem [shape: f32[3,384], index: 4, kind: input, shape index: {}]
  %s5 = inlined_call_operand.vmem [shape: f32[384,1], index: 5, kind: input, shape index: {}]
  %s6 = inlined_call_operand.vmem [shape: bf16[32,32], index: 6, kind: input, shape index: {}]
  %s7 = inlined_call_operand.vmem [shape: f32[1,32], index: 7, kind: input, shape index: {}]
  %s8 = inlined_call_operand.vmem [shape: f32[384,32], index: 8, kind: output, shape index: {}]
  %s9 = sld [smem:[#allocation0]]
  $region114: #{graph_transformer_layer.4} parent=0
    _
  %s11 = ssub.s32 1, %s9
  %s12 = scalar_select 0, %s11, %s9
  $region1: #{graph_transformer_layer.4} parent=0
    #allocation4 [shape = 'u8[16384]{0}', space=vmem, size = 0x4000, scoped, tag = 'input window, operand 1']
    loop: start=0, step=1, limit=11
    $region2: #{graph_transformer_layer.4} parent=1 // loop_pre_header
      _
    $region3: #{graph_transformer_layer.4} parent=1 // loop_header
      %s14 = sphi 0, %s18
      %p15 = scmp.ge.s32.totalorder %s14, 11
      %s21 = sphi 0, %s33
      %s22 = sphi 0, %s29
      %s23 = sphi 0, %s21
      %s24 = sphi 0, %s22
      %s25 = sphi 0, %s23
      %s26 = sphi 0, %s24
      %s36 = sphi 0, %s38
      %s39 = sphi 0, %s36
      %s40 = sphi 0, %s39
      %s56 = sphi 0, %s40
      %s62 = sphi 0, %s64
      %s65 = sphi 0, %s62
      %s66 = sphi 0, %s65
      %s82 = sphi 0, %s66
      %s88 = sphi 0, %s90
      %s91 = sphi 0, %s88
      %s92 = sphi 0, %s91
      %s108 = sphi 0, %s92
      %s114 = sphi 0, %s116
      %s117 = sphi 0, %s114
      %s118 = sphi 0, %s117
      %s134 = sphi 0, %s118
      %s140 = sphi 0, %s142
      %s143 = sphi 0, %s140
      %s144 = sphi 0, %s143
      %s160 = sphi 0, %s144
      %s166 = sphi 0, %s168
      %s169 = sphi 0, %s166
      %s170 = sphi 0, %s169
      %s186 = sphi 0, %s170
      %s190 = sphi 0, %s190
      %s192 = sphi 0, %s190
      %s193 = sphi 0, %s192
      %s207 = sphi 0, %s193
      %s211 = sphi 0, %s211
      %s213 = sphi 0, %s211
      %s214 = sphi 0, %s213
      %s228 = sphi 0, %s214
      %s234 = sphi 0, %s236
      %s237 = sphi 0, %s234
      %s238 = sphi 0, %s237
      %s254 = sphi 0, %s238
    $region4: #{graph_transformer_layer.4} parent=1 // loop_header_branch
      %17 = sbr.rel (%p15) target = $region8
    $region5: #{graph_transformer_layer.4} parent=1 // loop_body
      %s19 = ssub.s32 %s14, 1
      %s20 = ssub.s32 %s14, 2
      %s27 = sadd.s32 1, %s22
      %p28 = scmp.ge.s32.totalorder %s27, 3
      %s29 = scalar_select %p28, 0, %s27
      %s30 = sadd.s32 1, %s21
      %s31 = scalar_select %p28, %s30, %s21
      %p32 = scmp.ge.s32.totalorder %s31, 3
      %s33 = scalar_select %p32, 0, %s31
      %s34 = ssub.s32 %s21, %s33
      %p35 = scmp.eq.s32.totalorder %s34, 0
      %s37 = sadd.s32 %s36, 1
      %s38 = scalar_select %p35, %s36, %s37
      %p41 = pneg %p35
      %p42 = scmp.eq.s32.totalorder %s14, 8
      %p43 = por %p41, %p42
      %p44 = scmp.ne.s32.totalorder %s36, %s39
      %p45 = scmp.eq.s32.totalorder %s14, 0
      %p46 = por %p44, %p45
      %p47 = scmp.ne.s32.totalorder %s36, %s39
      %p48 = scmp.eq.s32.totalorder %s19, 8
      %p49 = por %p47, %p48
      %p50 = scmp.ne.s32.totalorder %s39, %s40
      %p51 = scmp.eq.s32.totalorder %s19, 0
      %p52 = por %p50, %p51
      %p53 = scmp.ne.s32.totalorder %s39, %s40
      %p54 = scmp.eq.s32.totalorder %s20, 8
      %p55 = por %p53, %p54
      %p57 = scmp.ne.s32.totalorder %s40, %s56
      %p58 = scmp.eq.s32.totalorder %s20, 0
      %p59 = por %p57, %p58
      %s60 = ssub.s32 %s22, %s29
      %p61 = scmp.eq.s32.totalorder %s60, 0
      %s63 = sadd.s32 %s62, 1
      %s64 = scalar_select %p61, %s62, %s63
      %p67 = pneg %p61
      %p68 = scmp.eq.s32.totalorder %s14, 8
      %p69 = por %p67, %p68
      %p70 = scmp.ne.s32.totalorder %s62, %s65
      %p71 = scmp.eq.s32.totalorder %s14, 0
      %p72 = por %p70, %p71
      %p73 = scmp.ne.s32.totalorder %s62, %s65
      %p74 = scmp.eq.s32.totalorder %s19, 8
      %p75 = por %p73, %p74
      %p76 = scmp.ne.s32.totalorder %s65, %s66
      %p77 = scmp.eq.s32.totalorder %s19, 0
      %p78 = por %p76, %p77
      %p79 = scmp.ne.s32.totalorder %s65, %s66
      %p80 = scmp.eq.s32.totalorder %s20, 8
      %p81 = por %p79, %p80
      %p83 = scmp.ne.s32.totalorder %s66, %s82
      %p84 = scmp.eq.s32.totalorder %s20, 0
      %p85 = por %p83, %p84
      %s86 = ssub.s32 %s22, %s29
      %p87 = scmp.eq.s32.totalorder %s86, 0
      %s89 = sadd.s32 %s88, 1
      %s90 = scalar_select %p87, %s88, %s89
      %p93 = pneg %p87
      %p94 = scmp.eq.s32.totalorder %s14, 8
      %p95 = por %p93, %p94
      %p96 = scmp.ne.s32.totalorder %s88, %s91
      %p97 = scmp.eq.s32.totalorder %s14, 0
      %p98 = por %p96, %p97
      %p99 = scmp.ne.s32.totalorder %s88, %s91
      %p100 = scmp.eq.s32.totalorder %s19, 8
      %p101 = por %p99, %p100
      %p102 = scmp.ne.s32.totalorder %s91, %s92
      %p103 = scmp.eq.s32.totalorder %s19, 0
      %p104 = por %p102, %p103
      %p105 = scmp.ne.s32.totalorder %s91, %s92
      %p106 = scmp.eq.s32.totalorder %s20, 8
      %p107 = por %p105, %p106
      %p109 = scmp.ne.s32.totalorder %s92, %s108
      %p110 = scmp.eq.s32.totalorder %s20, 0
      %p111 = por %p109, %p110
      %s112 = ssub.s32 %s21, %s33
      %p113 = scmp.eq.s32.totalorder %s112, 0
      %s115 = sadd.s32 %s114, 1
      %s116 = scalar_select %p113, %s114, %s115
      %p119 = pneg %p113
      %p120 = scmp.eq.s32.totalorder %s14, 8
      %p121 = por %p119, %p120
      %p122 = scmp.ne.s32.totalorder %s114, %s117
      %p123 = scmp.eq.s32.totalorder %s14, 0
      %p124 = por %p122, %p123
      %p125 = scmp.ne.s32.totalorder %s114, %s117
      %p126 = scmp.eq.s32.totalorder %s19, 8
      %p127 = por %p125, %p126
      %p128 = scmp.ne.s32.totalorder %s117, %s118
      %p129 = scmp.eq.s32.totalorder %s19, 0
      %p130 = por %p128, %p129
      %p131 = scmp.ne.s32.totalorder %s117, %s118
      %p132 = scmp.eq.s32.totalorder %s20, 8
      %p133 = por %p131, %p132
      %p135 = scmp.ne.s32.totalorder %s118, %s134
      %p136 = scmp.eq.s32.totalorder %s20, 0
      %p137 = por %p135, %p136
      %s138 = ssub.s32 %s22, %s29
      %p139 = scmp.eq.s32.totalorder %s138, 0
      %s141 = sadd.s32 %s140, 1
      %s142 = scalar_select %p139, %s140, %s141
      %p145 = pneg %p139
      %p146 = scmp.eq.s32.totalorder %s14, 8
      %p147 = por %p145, %p146
      %p148 = scmp.ne.s32.totalorder %s140, %s143
      %p149 = scmp.eq.s32.totalorder %s14, 0
      %p150 = por %p148, %p149
      %p151 = scmp.ne.s32.totalorder %s140, %s143
      %p152 = scmp.eq.s32.totalorder %s19, 8
      %p153 = por %p151, %p152
      %p154 = scmp.ne.s32.totalorder %s143, %s144
      %p155 = scmp.eq.s32.totalorder %s19, 0
      %p156 = por %p154, %p155
      %p157 = scmp.ne.s32.totalorder %s143, %s144
      %p158 = scmp.eq.s32.totalorder %s20, 8
      %p159 = por %p157, %p158
      %p161 = scmp.ne.s32.totalorder %s144, %s160
      %p162 = scmp.eq.s32.totalorder %s20, 0
      %p163 = por %p161, %p162
      %s164 = ssub.s32 %s21, %s33
      %p165 = scmp.eq.s32.totalorder %s164, 0
      %s167 = sadd.s32 %s166, 1
      %s168 = scalar_select %p165, %s166, %s167
      %p171 = pneg %p165
      %p172 = scmp.eq.s32.totalorder %s14, 8
      %p173 = por %p171, %p172
      %p174 = scmp.ne.s32.totalorder %s166, %s169
      %p175 = scmp.eq.s32.totalorder %s14, 0
      %p176 = por %p174, %p175
      %p177 = scmp.ne.s32.totalorder %s166, %s169
      %p178 = scmp.eq.s32.totalorder %s19, 8
      %p179 = por %p177, %p178
      %p180 = scmp.ne.s32.totalorder %s169, %s170
      %p181 = scmp.eq.s32.totalorder %s19, 0
      %p182 = por %p180, %p181
      %p183 = scmp.ne.s32.totalorder %s169, %s170
      %p184 = scmp.eq.s32.totalorder %s20, 8
      %p185 = por %p183, %p184
      %p187 = scmp.ne.s32.totalorder %s170, %s186
      %p188 = scmp.eq.s32.totalorder %s20, 0
      %p189 = por %p187, %p188
      %s191 = sadd.s32 %s190, 1
      %p194 = scmp.eq.s32.totalorder %s14, 8
      %p195 = scmp.ne.s32.totalorder %s190, %s192
      %p196 = scmp.eq.s32.totalorder %s14, 0
      %p197 = por %p195, %p196
      %p198 = scmp.ne.s32.totalorder %s190, %s192
      %p199 = scmp.eq.s32.totalorder %s19, 8
      %p200 = por %p198, %p199
      %p201 = scmp.ne.s32.totalorder %s192, %s193
      %p202 = scmp.eq.s32.totalorder %s19, 0
      %p203 = por %p201, %p202
      %p204 = scmp.ne.s32.totalorder %s192, %s193
      %p205 = scmp.eq.s32.totalorder %s20, 8
      %p206 = por %p204, %p205
      %p208 = scmp.ne.s32.totalorder %s193, %s207
      %p209 = scmp.eq.s32.totalorder %s20, 0
      %p210 = por %p208, %p209
      %s212 = sadd.s32 %s211, 1
      %p215 = scmp.eq.s32.totalorder %s14, 8
      %p216 = scmp.ne.s32.totalorder %s211, %s213
      %p217 = scmp.eq.s32.totalorder %s14, 0
      %p218 = por %p216, %p217
      %p219 = scmp.ne.s32.totalorder %s211, %s213
      %p220 = scmp.eq.s32.totalorder %s19, 8
      %p221 = por %p219, %p220
      %p222 = scmp.ne.s32.totalorder %s213, %s214
      %p223 = scmp.eq.s32.totalorder %s19, 0
      %p224 = por %p222, %p223
      %p225 = scmp.ne.s32.totalorder %s213, %s214
      %p226 = scmp.eq.s32.totalorder %s20, 8
      %p227 = por %p225, %p226
      %p229 = scmp.ne.s32.totalorder %s214, %s228
      %p230 = scmp.eq.s32.totalorder %s20, 0
      %p231 = por %p229, %p230
      %s232 = ssub.s32 %s21, %s33
      %p233 = scmp.eq.s32.totalorder %s232, 0
      %s235 = sadd.s32 %s234, 1
      %s236 = scalar_select %p233, %s234, %s235
      %p239 = pneg %p233
      %p240 = scmp.eq.s32.totalorder %s14, 8
      %p241 = por %p239, %p240
      %p242 = scmp.ne.s32.totalorder %s234, %s237
      %p243 = scmp.eq.s32.totalorder %s14, 0
      %p244 = por %p242, %p243
      %p245 = scmp.ne.s32.totalorder %s234, %s237
      %p246 = scmp.eq.s32.totalorder %s19, 8
      %p247 = por %p245, %p246
      %p248 = scmp.ne.s32.totalorder %s237, %s238
      %p249 = scmp.eq.s32.totalorder %s19, 0
      %p250 = por %p248, %p249
      %p251 = scmp.ne.s32.totalorder %s237, %s238
      %p252 = scmp.eq.s32.totalorder %s20, 8
      %p253 = por %p251, %p252
      %p255 = scmp.ne.s32.totalorder %s238, %s254
      %p256 = scmp.eq.s32.totalorder %s20, 0
      %p257 = por %p255, %p256
      %p258 = scmp.le.s32.totalorder 1, %s14
      %p259 = scmp.lt.s32.totalorder %s14, 10
      %p260 = pnand %p258, %p259
      %p261 = pneg %p260
      // Predicated region
      $region9: #{graph_transformer_layer.4} parent=5 // pred_check
        _
      $region10: #{graph_transformer_layer.4} parent=5 // pred_check_branch
        %263 = sbr.rel (%p260) target = $region12
      $region11: #{graph_transformer_layer.4} parent=5 // pred_region
        %s264 = ssub.s32 %s14, 1
        // Predicated region
        $region13: #{graph_transformer_layer.4} parent=11 // pred_check
          %p265 = pneg %p203
        $region14: #{graph_transformer_layer.4} parent=11 // pred_check_branch
          %267 = sbr.rel (%p265) target = $region16
        $region15: #{graph_transformer_layer.4} parent=11 // pred_region
          _
        $region16: #{graph_transformer_layer.4} parent=11 // pred_fallthru
          _
        // Predicated region
        $region17: #{graph_transformer_layer.4} parent=11 // pred_check
          %p268 = pneg %p224
        $region18: #{graph_transformer_layer.4} parent=11 // pred_check_branch
          %270 = sbr.rel (%p268) target = $region20
        $region19: #{graph_transformer_layer.4} parent=11 // pred_region
          _
        $region20: #{graph_transformer_layer.4} parent=11 // pred_fallthru
          _
      $region12: #{graph_transformer_layer.4} parent=5 // pred_fallthru
        _
      %p271 = scmp.lt.s32.totalorder %s14, 9
      // Predicated region
      $region21: #{graph_transformer_layer.4} parent=5 // pred_check
        %p272 = pneg %p271
      $region22: #{graph_transformer_layer.4} parent=5 // pred_check_branch
        %274 = sbr.rel (%p272) target = $region24
      $region23: #{graph_transformer_layer.4} parent=5 // pred_region
        // Predicated region
        $region25: #{graph_transformer_layer.4} parent=23 // pred_check
          %p275 = pneg %p46
        $region26: #{graph_transformer_layer.4} parent=23 // pred_check_branch
          %277 = sbr.rel (%p275) target = $region28
        $region27: #{graph_transformer_layer.4} parent=23 // pred_region
          %s278 = smul.u32 16, %s21
          %p279 = scmp.lt.s32.totalorder %s278, 47
          %s280 = scalar_select %p279, %s278, 47
          %s281 = smul.addr %s280, 4
          %s282 = scalar_lea.vmem %s0, %s281
          %s283 = smul.u32 16, %s21
        $region28: #{graph_transformer_layer.4} parent=23 // pred_fallthru
          _
        // Predicated region
        $region29: #{graph_transformer_layer.4} parent=23 // pred_check
          %p284 = pneg %p72
        $region30: #{graph_transformer_layer.4} parent=23 // pred_check_branch
          %286 = sbr.rel (%p284) target = $region32
        $region31: #{graph_transformer_layer.4} parent=23 // pred_region
          %s287 = sand.u32 %s62, 1
          %s288 = sand.u32 %s62, 1
          %s289 = smul.addr %s288, 16
          %s290 = scalar_lea.vmem [#allocation4], %s289
          %s291 = smul.addr %s22, 4
          %s292 = scalar_lea.vmem %s1, %s291
          // Predicated region
          $region33: #{graph_transformer_layer.4} parent=31 // pred_check
            _
          $region34: #{graph_transformer_layer.4} parent=31 // pred_check_branch
            %294 = sbr.rel (0) target = $region36
          $region35: #{graph_transformer_layer.4} parent=31 // pred_region
            // Predicated region
            $region37: #{graph_transformer_layer.4} parent=35 // pred_check
              _
            $region38: #{graph_transformer_layer.4} parent=35 // pred_check_branch
              %296 = sbr.rel target = $region40
            $region39: #{graph_transformer_layer.4} parent=35 // pred_region
              // Predicated region
              $region52: #{graph_transformer_layer.4} parent=39 // pred_check
                _
              $region53: #{graph_transformer_layer.4} parent=39 // pred_check_branch
                %317 = sbr.rel (0) target = $region55
              $region54: #{graph_transformer_layer.4} parent=39 // pred_region
                loop: start=0, step=1, limit=1
                $region56: #{graph_transformer_layer.4} parent=54 // loop_pre_header
                  _
                $region57: #{graph_transformer_layer.4} parent=54 // loop_header
                  %s319 = sphi 0, %s323
                  %p320 = scmp.ge.s32.totalorder %s319, 1
                  %s324 = sphi %s292, %s292
                  %s325 = sphi %s290, %s290
                $region58: #{graph_transformer_layer.4} parent=54 // loop_header_branch
                  %322 = sbr.rel (%p320) target = $region62
                $region59: #{graph_transformer_layer.4} parent=54 // loop_body
                  _
                $region60: #{graph_transformer_layer.4} parent=54 // loop_footer
                  %s323 = sadd.s32 1, %s319
                $region61: #{graph_transformer_layer.4} parent=54 // loop_footer_branch
                  %318 = sbr.rel target = $region57
                $region62: #{graph_transformer_layer.4} parent=54 // loop_exit
                  _
                loop: start=0, step=1, limit=1
                $region63: #{graph_transformer_layer.4} parent=54 // loop_pre_header
                  _
                $region64: #{graph_transformer_layer.4} parent=54 // loop_header
                  %s328 = sphi 0, %s332
                  %p329 = scmp.ge.s32.totalorder %s328, 1
                  %s333 = sphi %s292, %s292
                  %s334 = sphi %s290, %s290
                $region65: #{graph_transformer_layer.4} parent=54 // loop_header_branch
                  %331 = sbr.rel (%p329) target = $region69
                $region66: #{graph_transformer_layer.4} parent=54 // loop_body
                  %v335 = vld [vmem:[%s333] sm:$0xf]
                  %336 = vst [vmem:[%s334] sm:$0xf] %v335
                  %v337 = vld [vmem:[%s333 + $0xc] sm:$0xf]
                  %338 = vst [vmem:[%s334 + $0x4] sm:$0xf] %v337
                  %v339 = vld [vmem:[%s333 + $0x18] sm:$0xf]
                  %340 = vst [vmem:[%s334 + $0x8] sm:$0xf] %v339
                  %v341 = vld [vmem:[%s333 + $0x24] sm:$0xf]
                  %342 = vst [vmem:[%s334 + $0xc] sm:$0xf] %v341
                $region67: #{graph_transformer_layer.4} parent=54 // loop_footer
                  %s332 = sadd.s32 1, %s328
                $region68: #{graph_transformer_layer.4} parent=54 // loop_footer_branch
                  %327 = sbr.rel target = $region64
                $region69: #{graph_transformer_layer.4} parent=54 // loop_exit
                  _
              $region55: #{graph_transformer_layer.4} parent=39 // pred_fallthru
                _
            $region40: #{graph_transformer_layer.4} parent=35 // pred_fallthru
              _
            // Predicated region
            $region41: #{graph_transformer_layer.4} parent=35 // pred_check
              _
            $region42: #{graph_transformer_layer.4} parent=35 // pred_check_branch
              %298 = sbr.rel (0) target = $region44
            $region43: #{graph_transformer_layer.4} parent=35 // pred_region
              loop: start=0, step=1, limit=1
              $region45: #{graph_transformer_layer.4} parent=43 // loop_pre_header
                _
              $region46: #{graph_transformer_layer.4} parent=43 // loop_header
                %s301 = sphi 0, %s305
                %p302 = scmp.ge.s32.totalorder %s301, 1
                %s306 = sphi %s292, %s292
                %s307 = sphi %s290, %s290
              $region47: #{graph_transformer_layer.4} parent=43 // loop_header_branch
                %304 = sbr.rel (%p302) target = $region51
              $region48: #{graph_transformer_layer.4} parent=43 // loop_body
                %v308 = vld [vmem:[%s306] sm:$0xf]
                %309 = vst [vmem:[%s307] sm:$0xf] %v308
                %v310 = vld [vmem:[%s306 + $0xc] sm:$0xf]
                %311 = vst [vmem:[%s307 + $0x4] sm:$0xf] %v310
                %v312 = vld [vmem:[%s306 + $0x18] sm:$0xf]
                %313 = vst [vmem:[%s307 + $0x8] sm:$0xf] %v312
                %v314 = vld [vmem:[%s306 + $0x24] sm:$0xf]
                %315 = vst [vmem:[%s307 + $0xc] sm:$0xf] %v314
              $region49: #{graph_transformer_layer.4} parent=43 // loop_footer
                %s305 = sadd.s32 1, %s301
              $region50: #{graph_transformer_layer.4} parent=43 // loop_footer_branch
                %300 = sbr.rel target = $region46
              $region51: #{graph_transformer_layer.4} parent=43 // loop_exit
                _
            $region44: #{graph_transformer_layer.4} parent=35 // pred_fallthru
              _
          $region36: #{graph_transformer_layer.4} parent=31 // pred_fallthru
            _
          %343 = vnop
        $region32: #{graph_transformer_layer.4} parent=23 // pred_fallthru
          _
        // Predicated region
        $region70: #{graph_transformer_layer.4} parent=23 // pred_check
          %p344 = pneg %p98
        $region71: #{graph_transformer_layer.4} parent=23 // pred_check_branch
          %346 = sbr.rel (%p344) target = $region73
        $region72: #{graph_transformer_layer.4} parent=23 // pred_region
          %s347 = smul.u32 16, %s22
          %p348 = scmp.lt.s32.totalorder %s347, 47
          %s349 = scalar_select %p348, %s347, 47
          %s350 = smul.addr %s349, 4
          %s351 = scalar_lea.vmem %s2, %s350
          %s352 = smul.u32 16, %s22
        $region73: #{graph_transformer_layer.4} parent=23 // pred_fallthru
          _
        // Predicated region
        $region74: #{graph_transformer_layer.4} parent=23 // pred_check
          %p353 = pneg %p124
        $region75: #{graph_transformer_layer.4} parent=23 // pred_check_branch
          %355 = sbr.rel (%p353) target = $region77
        $region76: #{graph_transformer_layer.4} parent=23 // pred_region
          %s356 = smul.u32 16, %s21
          %p357 = scmp.lt.s32.totalorder %s356, 47
          %s358 = scalar_select %p357, %s356, 47
          %s359 = smul.addr %s358, 8
          %s360 = scalar_lea.vmem %s3, %s359
          %s361 = smul.u32 16, %s21
        $region77: #{graph_transformer_layer.4} parent=23 // pred_fallthru
          _
        // Predicated region
        $region78: #{graph_transformer_layer.4} parent=23 // pred_check
          %p362 = pneg %p150
        $region79: #{graph_transformer_layer.4} parent=23 // pred_check_branch
          %364 = sbr.rel (%p362) target = $region81
        $region80: #{graph_transformer_layer.4} parent=23 // pred_region
          %p365 = scmp.lt.s32.totalorder %s22, 2
          %s366 = scalar_select %p365, %s22, 2
          %s367 = smul.addr %s366, 4
          %s368 = scalar_lea.vmem %s4, %s367
        $region81: #{graph_transformer_layer.4} parent=23 // pred_fallthru
          _
        // Predicated region
        $region82: #{graph_transformer_layer.4} parent=23 // pred_check
          %p369 = pneg %p176
        $region83: #{graph_transformer_layer.4} parent=23 // pred_check_branch
          %371 = sbr.rel (%p369) target = $region85
        $region84: #{graph_transformer_layer.4} parent=23 // pred_region
          %s372 = smul.u32 16, %s21
          %p373 = scmp.lt.s32.totalorder %s372, 47
          %s374 = scalar_select %p373, %s372, 47
          %s375 = smul.addr %s374, 8
          %s376 = scalar_lea.vmem %s5, %s375
          %s377 = smul.u32 16, %s21
        $region85: #{graph_transformer_layer.4} parent=23 // pred_fallthru
          _
      $region24: #{graph_transformer_layer.4} parent=5 // pred_fallthru
        _
      %p378 = scmp.le.s32.totalorder 1, %s14
      %p379 = scmp.lt.s32.totalorder %s14, 10
      %p380 = pnand %p378, %p379
      %p381 = pneg %p380
      // Predicated region
      $region86: #{graph_transformer_layer.4} parent=5 // pred_check
        _
      $region87: #{graph_transformer_layer.4} parent=5 // pred_check_branch
        %383 = sbr.rel (%p380) target = $region89
      $region88: #{graph_transformer_layer.4} parent=5 // pred_region
        %s384 = ssub.s32 %s14, 1
        %s385 = sand.u32 %s65, 1
        %s386 = sand.u32 %s65, 1
        %s387 = smul.addr %s386, 16
        %s388 = scalar_lea.vmem [#allocation4], %s387
        // Predicated region
        $region90: #{graph_transformer_layer.4} parent=88 // pred_check
          %p389 = pneg %p78
        $region91: #{graph_transformer_layer.4} parent=88 // pred_check_branch
          %391 = sbr.rel (%p389) target = $region93
        $region92: #{graph_transformer_layer.4} parent=88 // pred_region
          _
        $region93: #{graph_transformer_layer.4} parent=88 // pred_fallthru
          _
        %s392 = smul.u32 16, %s23
        %p393 = scmp.lt.s32.totalorder %s392, 47
        %s394 = scalar_select %p393, %s392, 47
        %s395 = smul.addr %s394, 4
        %s396 = scalar_lea.vmem %s0, %s395
        %p397 = pneg %p52
        %p398 = pneg %p49
        %s399 = sand.u32 %s65, 1
        %s400 = sand.u32 %s65, 1
        %s401 = smul.addr %s400, 16
        %s402 = scalar_lea.vmem [#allocation4], %s401
        %p403 = pneg %p78
        %p404 = pneg %p75
        %s405 = smul.u32 16, %s24
        %p406 = scmp.lt.s32.totalorder %s405, 47
        %s407 = scalar_select %p406, %s405, 47
        %s408 = smul.addr %s407, 4
        %s409 = scalar_lea.vmem %s2, %s408
        %p410 = pneg %p104
        %p411 = pneg %p101
        %s412 = smul.u32 16, %s23
        %p413 = scmp.lt.s32.totalorder %s412, 47
        %s414 = scalar_select %p413, %s412, 47
        %s415 = smul.addr %s414, 8
        %s416 = scalar_lea.vmem %s3, %s415
        %p417 = pneg %p130
        %p418 = pneg %p127
        %p419 = scmp.lt.s32.totalorder %s24, 2
        %s420 = scalar_select %p419, %s24, 2
        %s421 = smul.addr %s420, 4
        %s422 = scalar_lea.vmem %s4, %s421
        %p423 = pneg %p156
        %p424 = pneg %p153
        %s425 = smul.u32 16, %s23
        %p426 = scmp.lt.s32.totalorder %s425, 47
        %s427 = scalar_select %p426, %s425, 47
        %s428 = smul.addr %s427, 8
        %s429 = scalar_lea.vmem %s5, %s428
        %p430 = pneg %p182
        %p431 = pneg %p179
        %p432 = pneg %p203
        %p433 = pneg %p200
        %p434 = pneg %p224
        %p435 = pneg %p221
        %p436 = pneg %p250
        %p437 = pneg %p247
        %s438 = smul.u32 16, %s23
        %p439 = scmp.lt.s32.totalorder %s438, 47
        %s440 = scalar_select %p439, %s438, 47
        %s441 = smul.addr %s440, 8
        %s442 = scalar_lea.vmem %s8, %s441
        %s443 = smul.u32 16, %s23
        %p444 = scmp.lt.s32.totalorder %s443, 47
        %s445 = scalar_select %p444, %s443, 47
        %s446 = smul.addr %s445, 4
        %s447 = scalar_lea.vmem %s0, %s446
        %s448 = smul.u32 16, %s23
        %s449 = smul.u32 16, %s24
        %p450 = scmp.lt.s32.totalorder %s449, 47
        %s451 = scalar_select %p450, %s449, 47
        %s452 = smul.addr %s451, 4
        %s453 = scalar_lea.vmem %s2, %s452
        %s454 = smul.u32 16, %s24
        %s455 = smul.u32 16, %s23
        %p456 = scmp.lt.s32.totalorder %s455, 47
        %s457 = scalar_select %p456, %s455, 47
        %s458 = smul.addr %s457, 8
        %s459 = scalar_lea.vmem %s3, %s458
        %s460 = smul.u32 16, %s23
        %p461 = scmp.lt.s32.totalorder %s24, 2
        %s462 = scalar_select %p461, %s24, 2
        %s463 = smul.addr %s462, 4
        %s464 = scalar_lea.vmem %s4, %s463
        %s465 = smul.u32 16, %s23
        %p466 = scmp.lt.s32.totalorder %s465, 47
        %s467 = scalar_select %p466, %s465, 47
        %s468 = smul.addr %s467, 8
        %s469 = scalar_lea.vmem %s5, %s468
        %s470 = smul.u32 16, %s23
        %s471 = smul.u32 16, %s23
        %p472 = scmp.lt.s32.totalorder %s471, 47
        %s473 = scalar_select %p472, %s471, 47
        %s474 = smul.addr %s473, 8
        %s475 = scalar_lea.vmem %s8, %s474
        %s476 = smul.u32 16, %s23
        %p478 = scmp.eq.s32.totalorder %s24, 0
        // Predicated region
        $region94: #{graph_transformer_layer.4} parent=88 // pred_check
          %p479 = pneg %p478
        $region95: #{graph_transformer_layer.4} parent=88 // pred_check_branch
          %481 = sbr.rel (%p479) target = $region97
        $region96: #{graph_transformer_layer.4} parent=88 // pred_region
          %vm482 = vcmask 261120
          %483 = vst.msk [vmem:[#allocation2] sm:$0xff] %vm482, 0.0
          %484 = vst.msk [vmem:[#allocation2 + $0x8] sm:$0xff] %vm482, 0.0
          %485 = vst.msk [vmem:[#allocation2 + $0x10] sm:$0xff] %vm482, 0.0
          %486 = vst.msk [vmem:[#allocation2 + $0x18] sm:$0xff] %vm482, 0.0
          %487 = vst.msk [vmem:[#allocation2 + $0x20] sm:$0xff] %vm482, 0.0
          %488 = vst.msk [vmem:[#allocation2 + $0x28] sm:$0xff] %vm482, 0.0
          %489 = vst.msk [vmem:[#allocation2 + $0x30] sm:$0xff] %vm482, 0.0
          %490 = vst.msk [vmem:[#allocation2 + $0x38] sm:$0xff] %vm482, 0.0
          %491 = vst.msk [vmem:[#allocation2 + $0x40] sm:$0xff] %vm482, 0.0
          %492 = vst.msk [vmem:[#allocation2 + $0x48] sm:$0xff] %vm482, 0.0
          %493 = vst.msk [vmem:[#allocation2 + $0x50] sm:$0xff] %vm482, 0.0
          %494 = vst.msk [vmem:[#allocation2 + $0x58] sm:$0xff] %vm482, 0.0
          %495 = vst.msk [vmem:[#allocation2 + $0x60] sm:$0xff] %vm482, 0.0
          %496 = vst.msk [vmem:[#allocation2 + $0x68] sm:$0xff] %vm482, 0.0
          %497 = vst.msk [vmem:[#allocation2 + $0x70] sm:$0xff] %vm482, 0.0
          %498 = vst.msk [vmem:[#allocation2 + $0x78] sm:$0xff] %vm482, 0.0
          %vm499 = vcmask 7168
          %500 = vst.msk [vmem:[#allocation3] sm:$0xff] %vm499, 0.0
          %501 = vst.msk [vmem:[#allocation3 + $0x8] sm:$0xff] %vm499, 0.0
          %502 = vst.msk [vmem:[#allocation3 + $0x10] sm:$0xff] %vm499, 0.0
          %503 = vst.msk [vmem:[#allocation3 + $0x18] sm:$0xff] %vm499, 0.0
          %504 = vst.msk [vmem:[#allocation3 + $0x20] sm:$0xff] %vm499, 0.0
          %505 = vst.msk [vmem:[#allocation3 + $0x28] sm:$0xff] %vm499, 0.0
          %506 = vst.msk [vmem:[#allocation3 + $0x30] sm:$0xff] %vm499, 0.0
          %507 = vst.msk [vmem:[#allocation3 + $0x38] sm:$0xff] %vm499, 0.0
          %508 = vst.msk [vmem:[#allocation3 + $0x40] sm:$0xff] %vm499, 0.0
          %509 = vst.msk [vmem:[#allocation3 + $0x48] sm:$0xff] %vm499, 0.0
          %510 = vst.msk [vmem:[#allocation3 + $0x50] sm:$0xff] %vm499, 0.0
          %511 = vst.msk [vmem:[#allocation3 + $0x58] sm:$0xff] %vm499, 0.0
          %512 = vst.msk [vmem:[#allocation3 + $0x60] sm:$0xff] %vm499, 0.0
          %513 = vst.msk [vmem:[#allocation3 + $0x68] sm:$0xff] %vm499, 0.0
          %514 = vst.msk [vmem:[#allocation3 + $0x70] sm:$0xff] %vm499, 0.0
          %515 = vst.msk [vmem:[#allocation3 + $0x78] sm:$0xff] %vm499, 0.0
        $region97: #{graph_transformer_layer.4} parent=88 // pred_fallthru
          _
        %v516 = vld [vmem:[%s447] sm:$0xf]
        %v517 = vld [vmem:[%s447 + $0x4] sm:$0xf]
        %v518 = vld [vmem:[%s447 + $0x8] sm:$0xf]
        %v519 = vld [vmem:[%s447 + $0xc] sm:$0xf]
        %v520 = vld [vmem:[%s447 + $0x10] sm:$0xf]
        %v521 = vld [vmem:[%s447 + $0x14] sm:$0xf]
        %v522 = vld [vmem:[%s447 + $0x18] sm:$0xf]
        %v523 = vld [vmem:[%s447 + $0x1c] sm:$0xf]
        %v524 = vld [vmem:[%s447 + $0x20] sm:$0xf]
        %v525 = vld [vmem:[%s447 + $0x24] sm:$0xf]
        %v526 = vld [vmem:[%s447 + $0x28] sm:$0xf]
        %v527 = vld [vmem:[%s447 + $0x2c] sm:$0xf]
        %v528 = vld [vmem:[%s447 + $0x30] sm:$0xf]
        %v529 = vld [vmem:[%s447 + $0x34] sm:$0xf]
        %v530 = vld [vmem:[%s447 + $0x38] sm:$0xf]
        %v531 = vld [vmem:[%s447 + $0x3c] sm:$0xf]
        %v532 = vld [vmem:[%s388] sm:$0xf]
        %v533 = vld [vmem:[%s388 + $0x4] sm:$0xf]
        %v534 = vld [vmem:[%s388 + $0x8] sm:$0xf]
        %v535 = vld [vmem:[%s388 + $0xc] sm:$0xf]
        %v552 = vunpack.c.l.b16 %v516
        %v553 = vunpack.c.l.b16 %v517
        %v554 = vunpack.c.l.b16 %v518
        %v555 = vunpack.c.l.b16 %v519
        %v556 = vunpack.c.l.b16 %v520
        %v557 = vunpack.c.l.b16 %v521
        %v558 = vunpack.c.l.b16 %v522
        %v559 = vunpack.c.l.b16 %v523
        %v560 = vunpack.c.l.b16 %v524
        %v561 = vunpack.c.l.b16 %v525
        %v562 = vunpack.c.l.b16 %v526
        %v563 = vunpack.c.l.b16 %v527
        %v564 = vunpack.c.l.b16 %v528
        %v565 = vunpack.c.l.b16 %v529
        %v566 = vunpack.c.l.b16 %v530
        %v567 = vunpack.c.l.b16 %v531
        %v568 = vpack.c.b16 %v553, %v552
        %v569 = vpack.c.b16 %v555, %v554
        %v570 = vpack.c.b16 %v557, %v556
        %v571 = vpack.c.b16 %v559, %v558
        %v572 = vpack.c.b16 %v561, %v560
        %v573 = vpack.c.b16 %v563, %v562
        %v574 = vpack.c.b16 %v565, %v564
        %v575 = vpack.c.b16 %v567, %v566
        %v580 = vunpack.c.l.b16 %v532
        %v581 = vunpack.c.l.b16 %v533
        %v582 = vunpack.c.l.b16 %v534
        %v583 = vunpack.c.l.b16 %v535
        %v584 = vpack.c.b16 %v581, %v580
        %v585 = vpack.c.b16 %v583, %v582
        %vm588 = vcmask 261120
        %v590 = vsel %vm588, %v568, 0
        %v593 = vsel %vm588, %v569, 0
        %v596 = vsel %vm588, %v570, 0
        %v599 = vsel %vm588, %v571, 0
        %v602 = vsel %vm588, %v572, 0
        %v605 = vsel %vm588, %v573, 0
        %v608 = vsel %vm588, %v574, 0
        %v611 = vsel %vm588, %v575, 0
        %613 = vmatprep.subr.bf16.mxu0 0
        %614 = vmatpush1.bf16.msra.mxu0 %v584
        %615 = vmatprep.subr.bf16.mxu0 0
        %616 = vmatpush1.bf16.msra.mxu0 %v585
        %617 = vmatprep.subr.bf16.mxu0 0
        %618 = vmatpush1.bf16.msra.mxu0 0
        %619 = vmatprep.subr.bf16.mxu0 0
        %620 = vmatpush1.bf16.msra.mxu0 0
        %621 = vmatprep.subr.bf16.mxu0 0
        %622 = vmatpush1.bf16.msra.mxu0 0
        %623 = vmatprep.subr.bf16.mxu0 0
        %624 = vmatpush1.bf16.msra.mxu0 0
        %625 = vmatprep.subr.bf16.mxu0 0
        %626 = vmatpush1.bf16.msra.mxu0 0
        %627 = vmatprep.subr.bf16.mxu0 0
        %628 = vmatpush1.bf16.msra.mxu0 0
        %629 = vmatprep.subr.bf16.mxu0 0
        %630 = vmatpush1.bf16.msra.mxu0 0
        %631 = vmatprep.subr.bf16.mxu0 0
        %632 = vmatpush1.bf16.msra.mxu0 0
        %633 = vmatprep.subr.bf16.mxu0 0
        %634 = vmatpush1.bf16.msra.mxu0 0
        %635 = vmatprep.subr.bf16.mxu0 0
        %636 = vmatpush1.bf16.msra.mxu0 0
        %637 = vmatprep.subr.bf16.mxu0 0
        %638 = vmatpush1.bf16.msra.mxu0 0
        %639 = vmatprep.subr.bf16.mxu0 0
        %640 = vmatpush1.bf16.msra.mxu0 0
        %641 = vmatprep.subr.bf16.mxu0 0
        %642 = vmatpush1.bf16.msra.mxu0 0
        %643 = vmatprep.subr.bf16.mxu0 0
        %644 = vmatpush1.bf16.msra.mxu0 0
        %645 = vmatprep.mubr.bf16.mxu0 0
        %646 = vmatmul.mubr.bf16.gmra.mrb[0].mxu0 %v590
        %v647 = vpop.f32.mrb[0].mxu0
        %v648 = vadd.f32 0.0, %v647
        %v649 = vpop.f32.mrb[0].mxu0
        %v650 = vpop.f32.mrb[0].mxu0
        %v651 = vadd.f32 0.0, %v650
        %v652 = vpop.f32.mrb[0].mxu0
        %653 = vmatprep.mubr.bf16.mxu0 0
        %654 = vmatmul.mubr.bf16.gmra.mrb[0].mxu0 %v593
        %v655 = vpop.f32.mrb[0].mxu0
        %v656 = vadd.f32 0.0, %v655
        %v657 = vpop.f32.mrb[0].mxu0
        %v658 = vpop.f32.mrb[0].mxu0
        %v659 = vadd.f32 0.0, %v658
        %v660 = vpop.f32.mrb[0].mxu0
        %661 = vmatprep.mubr.bf16.mxu0 0
        %662 = vmatmul.mubr.bf16.gmra.mrb[0].mxu0 %v596
        %v663 = vpop.f32.mrb[0].mxu0
        %v664 = vadd.f32 0.0, %v663
        %v665 = vpop.f32.mrb[0].mxu0
        %v666 = vpop.f32.mrb[0].mxu0
        %v667 = vadd.f32 0.0, %v666
        %v668 = vpop.f32.mrb[0].mxu0
        %669 = vmatprep.mubr.bf16.mxu0 0
        %670 = vmatmul.mubr.bf16.gmra.mrb[0].mxu0 %v599
        %v671 = vpop.f32.mrb[0].mxu0
        %v672 = vadd.f32 0.0, %v671
        %v673 = vpop.f32.mrb[0].mxu0
        %v674 = vpop.f32.mrb[0].mxu0
        %v675 = vadd.f32 0.0, %v674
        %v676 = vpop.f32.mrb[0].mxu0
        %677 = vmatprep.mubr.bf16.mxu0 0
        %678 = vmatmul.mubr.bf16.gmra.mrb[0].mxu0 %v602
        %v679 = vpop.f32.mrb[0].mxu0
        %v680 = vadd.f32 0.0, %v679
        %v681 = vpop.f32.mrb[0].mxu0
        %v682 = vpop.f32.mrb[0].mxu0
        %v683 = vadd.f32 0.0, %v682
        %v684 = vpop.f32.mrb[0].mxu0
        %685 = vmatprep.mubr.bf16.mxu0 0
        %686 = vmatmul.mubr.bf16.gmra.mrb[0].mxu0 %v605
        %v687 = vpop.f32.mrb[0].mxu0
        %v688 = vadd.f32 0.0, %v687
        %v689 = vpop.f32.mrb[0].mxu0
        %v690 = vpop.f32.mrb[0].mxu0
        %v691 = vadd.f32 0.0, %v690
        %v692 = vpop.f32.mrb[0].mxu0
        %693 = vmatprep.mubr.bf16.mxu0 0
        %694 = vmatmul.mubr.bf16.gmra.mrb[0].mxu0 %v608
        %v695 = vpop.f32.mrb[0].mxu0
        %v696 = vadd.f32 0.0, %v695
        %v697 = vpop.f32.mrb[0].mxu0
        %v698 = vpop.f32.mrb[0].mxu0
        %v699 = vadd.f32 0.0, %v698
        %v700 = vpop.f32.mrb[0].mxu0
        %701 = vmatprep.mubr.bf16.mxu0 0
        %702 = vmatmul.mubr.bf16.gmra.mrb[0].mxu0 %v611
        %v703 = vpop.f32.mrb[0].mxu0
        %v704 = vadd.f32 0.0, %v703
        %v705 = vpop.f32.mrb[0].mxu0
        %v706 = vpop.f32.mrb[0].mxu0
        %v707 = vadd.f32 0.0, %v706
        %v708 = vpop.f32.mrb[0].mxu0
        %709 = vdwg.mxu0
        %v710 = vmul.f32 %v648, 0.17677669
        %v711 = vmul.f32 %v651, 0.17677669
        %v712 = vmul.f32 %v656, 0.17677669
        %v713 = vmul.f32 %v659, 0.17677669
        %v714 = vmul.f32 %v664, 0.17677669
        %v715 = vmul.f32 %v667, 0.17677669
        %v716 = vmul.f32 %v672, 0.17677669
        %v717 = vmul.f32 %v675, 0.17677669
        %v718 = vmul.f32 %v680, 0.17677669
        %v719 = vmul.f32 %v683, 0.17677669
        %v720 = vmul.f32 %v688, 0.17677669
        %v721 = vmul.f32 %v691, 0.17677669
        %v722 = vmul.f32 %v696, 0.17677669
        %v723 = vmul.f32 %v699, 0.17677669
        %v724 = vmul.f32 %v704, 0.17677669
        %v725 = vmul.f32 %v707, 0.17677669
        %v726 = vmax.f32 %v710, -5.0
        %v727 = vmax.f32 %v711, -5.0
        %v728 = vmax.f32 %v712, -5.0
        %v729 = vmax.f32 %v713, -5.0
        %v730 = vmax.f32 %v714, -5.0
        %v731 = vmax.f32 %v715, -5.0
        %v732 = vmax.f32 %v716, -5.0
        %v733 = vmax.f32 %v717, -5.0
        %v734 = vmax.f32 %v718, -5.0
        %v735 = vmax.f32 %v719, -5.0
        %v736 = vmax.f32 %v720, -5.0
        %v737 = vmax.f32 %v721, -5.0
        %v738 = vmax.f32 %v722, -5.0
        %v739 = vmax.f32 %v723, -5.0
        %v740 = vmax.f32 %v724, -5.0
        %v741 = vmax.f32 %v725, -5.0
        %v742 = vmin.f32 %v726, 5.0
        %v743 = vmin.f32 %v727, 5.0
        %v744 = vmin.f32 %v728, 5.0
        %v745 = vmin.f32 %v729, 5.0
        %v746 = vmin.f32 %v730, 5.0
        %v747 = vmin.f32 %v731, 5.0
        %v748 = vmin.f32 %v732, 5.0
        %v749 = vmin.f32 %v733, 5.0
        %v750 = vmin.f32 %v734, 5.0
        %v751 = vmin.f32 %v735, 5.0
        %v752 = vmin.f32 %v736, 5.0
        %v753 = vmin.f32 %v737, 5.0
        %v754 = vmin.f32 %v738, 5.0
        %v755 = vmin.f32 %v739, 5.0
        %v756 = vmin.f32 %v740, 5.0
        %v757 = vmin.f32 %v741, 5.0
        %v758 = vmul.f32 %v742, 1.442695
        %v759 = vpow.pop %v758
        %v760 = vmul.f32 %v743, 1.442695
        %v761 = vpow.pop %v760
        %v762 = vmul.f32 %v744, 1.442695
        %v763 = vpow.pop %v762
        %v764 = vmul.f32 %v745, 1.442695
        %v765 = vpow.pop %v764
        %v766 = vmul.f32 %v746, 1.442695
        %v767 = vpow.pop %v766
        %v768 = vmul.f32 %v747, 1.442695
        %v769 = vpow.pop %v768
        %v770 = vmul.f32 %v748, 1.442695
        %v771 = vpow.pop %v770
        %v772 = vmul.f32 %v749, 1.442695
        %v773 = vpow.pop %v772
        %v774 = vmul.f32 %v750, 1.442695
        %v775 = vpow.pop %v774
        %v776 = vmul.f32 %v751, 1.442695
        %v777 = vpow.pop %v776
        %v778 = vmul.f32 %v752, 1.442695
        %v779 = vpow.pop %v778
        %v780 = vmul.f32 %v753, 1.442695
        %v781 = vpow.pop %v780
        %v782 = vmul.f32 %v754, 1.442695
        %v783 = vpow.pop %v782
        %v784 = vmul.f32 %v755, 1.442695
        %v785 = vpow.pop %v784
        %v786 = vmul.f32 %v756, 1.442695
        %v787 = vpow.pop %v786
        %v788 = vmul.f32 %v757, 1.442695
        %v789 = vpow.pop %v788
        %v790 = vld [vmem:[%s459] sm:$0xff]
        %v791 = vld [vmem:[%s459 + $0x8] sm:$0xff]
        %v792 = vld [vmem:[%s459 + $0x10] sm:$0xff]
        %v793 = vld [vmem:[%s459 + $0x18] sm:$0xff]
        %v794 = vld [vmem:[%s459 + $0x20] sm:$0xff]
        %v795 = vld [vmem:[%s459 + $0x28] sm:$0xff]
        %v796 = vld [vmem:[%s459 + $0x30] sm:$0xff]
        %v797 = vld [vmem:[%s459 + $0x38] sm:$0xff]
        %v798 = vld [vmem:[%s459 + $0x40] sm:$0xff]
        %v799 = vld [vmem:[%s459 + $0x48] sm:$0xff]
        %v800 = vld [vmem:[%s459 + $0x50] sm:$0xff]
        %v801 = vld [vmem:[%s459 + $0x58] sm:$0xff]
        %v802 = vld [vmem:[%s459 + $0x60] sm:$0xff]
        %v803 = vld [vmem:[%s459 + $0x68] sm:$0xff]
        %v804 = vld [vmem:[%s459 + $0x70] sm:$0xff]
        %v805 = vld [vmem:[%s459 + $0x78] sm:$0xff]
        %v806 = vld [vmem:[%s464] sm:$0x7]
        %808 = vset.pattern.permute.xlu0 0
        %809 = vperm.xlu0 %808, %v790
        %v810 = vpop.permute.xlu0 %809
        %813 = vset.pattern.permute.xlu0 0
        %814 = vperm.xlu0 %813, %v791
        %v815 = vpop.permute.xlu0 %814
        %818 = vset.pattern.permute.xlu0 0
        %819 = vperm.xlu0 %818, %v792
        %v820 = vpop.permute.xlu0 %819
        %823 = vset.pattern.permute.xlu0 0
        %824 = vperm.xlu0 %823, %v793
        %v825 = vpop.permute.xlu0 %824
        %828 = vset.pattern.permute.xlu0 0
        %829 = vperm.xlu0 %828, %v794
        %v830 = vpop.permute.xlu0 %829
        %833 = vset.pattern.permute.xlu0 0
        %834 = vperm.xlu0 %833, %v795
        %v835 = vpop.permute.xlu0 %834
        %838 = vset.pattern.permute.xlu0 0
        %839 = vperm.xlu0 %838, %v796
        %v840 = vpop.permute.xlu0 %839
        %843 = vset.pattern.permute.xlu0 0
        %844 = vperm.xlu0 %843, %v797
        %v845 = vpop.permute.xlu0 %844
        %848 = vset.pattern.permute.xlu0 0
        %849 = vperm.xlu0 %848, %v798
        %v850 = vpop.permute.xlu0 %849
        %853 = vset.pattern.permute.xlu0 0
        %854 = vperm.xlu0 %853, %v799
        %v855 = vpop.permute.xlu0 %854
        %858 = vset.pattern.permute.xlu0 0
        %859 = vperm.xlu0 %858, %v800
        %v860 = vpop.permute.xlu0 %859
        %863 = vset.pattern.permute.xlu0 0
        %864 = vperm.xlu0 %863, %v801
        %v865 = vpop.permute.xlu0 %864
        %868 = vset.pattern.permute.xlu0 0
        %869 = vperm.xlu0 %868, %v802
        %v870 = vpop.permute.xlu0 %869
        %873 = vset.pattern.permute.xlu0 0
        %874 = vperm.xlu0 %873, %v803
        %v875 = vpop.permute.xlu0 %874
        %878 = vset.pattern.permute.xlu0 0
        %879 = vperm.xlu0 %878, %v804
        %v880 = vpop.permute.xlu0 %879
        %883 = vset.pattern.permute.xlu0 0
        %884 = vperm.xlu0 %883, %v805
        %v885 = vpop.permute.xlu0 %884
        %v887 = vlaneseq
        %v888 = vshrl.u32 %v887, 7
        %v889 = vsub.s32 0, %v888
        %v890 = vrot.slane %v806, %v889
        %v891 = vsub.f32 %v810, %v890
        %v892 = vsub.f32 %v815, %v890
        %v893 = vsub.f32 %v820, %v890
        %v894 = vsub.f32 %v825, %v890
        %v895 = vsub.f32 %v830, %v890
        %v896 = vsub.f32 %v835, %v890
        %v897 = vsub.f32 %v840, %v890
        %v898 = vsub.f32 %v845, %v890
        %v899 = vsub.f32 %v850, %v890
        %v900 = vsub.f32 %v855, %v890
        %v901 = vsub.f32 %v860, %v890
        %v902 = vsub.f32 %v865, %v890
        %v903 = vsub.f32 %v870, %v890
        %v904 = vsub.f32 %v875, %v890
        %v905 = vsub.f32 %v880, %v890
        %v906 = vsub.f32 %v885, %v890
        %v907 = vmul.f32 %v891, %v891
        %v908 = vmul.f32 %v892, %v892
        %v909 = vmul.f32 %v893, %v893
        %v910 = vmul.f32 %v894, %v894
        %v911 = vmul.f32 %v895, %v895
        %v912 = vmul.f32 %v896, %v896
        %v913 = vmul.f32 %v897, %v897
        %v914 = vmul.f32 %v898, %v898
        %v915 = vmul.f32 %v899, %v899
        %v916 = vmul.f32 %v900, %v900
        %v917 = vmul.f32 %v901, %v901
        %v918 = vmul.f32 %v902, %v902
        %v919 = vmul.f32 %v903, %v903
        %v920 = vmul.f32 %v904, %v904
        %v921 = vmul.f32 %v905, %v905
        %v922 = vmul.f32 %v906, %v906
        %923 = vset.pattern.permute.xlu0 1
        %924 = vperm.xlu0 %923, %v790
        %v925 = vpop.permute.xlu0 %924
        %927 = vset.pattern.permute.xlu0 1
        %928 = vperm.xlu0 %927, %v791
        %v929 = vpop.permute.xlu0 %928
        %931 = vset.pattern.permute.xlu0 1
        %932 = vperm.xlu0 %931, %v792
        %v933 = vpop.permute.xlu0 %932
        %935 = vset.pattern.permute.xlu0 1
        %936 = vperm.xlu0 %935, %v793
        %v937 = vpop.permute.xlu0 %936
        %939 = vset.pattern.permute.xlu0 1
        %940 = vperm.xlu0 %939, %v794
        %v941 = vpop.permute.xlu0 %940
        %943 = vset.pattern.permute.xlu0 1
        %944 = vperm.xlu0 %943, %v795
        %v945 = vpop.permute.xlu0 %944
        %947 = vset.pattern.permute.xlu0 1
        %948 = vperm.xlu0 %947, %v796
        %v949 = vpop.permute.xlu0 %948
        %951 = vset.pattern.permute.xlu0 1
        %952 = vperm.xlu0 %951, %v797
        %v953 = vpop.permute.xlu0 %952
        %955 = vset.pattern.permute.xlu0 1
        %956 = vperm.xlu0 %955, %v798
        %v957 = vpop.permute.xlu0 %956
        %959 = vset.pattern.permute.xlu0 1
        %960 = vperm.xlu0 %959, %v799
        %v961 = vpop.permute.xlu0 %960
        %963 = vset.pattern.permute.xlu0 1
        %964 = vperm.xlu0 %963, %v800
        %v965 = vpop.permute.xlu0 %964
        %967 = vset.pattern.permute.xlu0 1
        %968 = vperm.xlu0 %967, %v801
        %v969 = vpop.permute.xlu0 %968
        %971 = vset.pattern.permute.xlu0 1
        %972 = vperm.xlu0 %971, %v802
        %v973 = vpop.permute.xlu0 %972
        %975 = vset.pattern.permute.xlu0 1
        %976 = vperm.xlu0 %975, %v803
        %v977 = vpop.permute.xlu0 %976
        %979 = vset.pattern.permute.xlu0 1
        %980 = vperm.xlu0 %979, %v804
        %v981 = vpop.permute.xlu0 %980
        %983 = vset.pattern.permute.xlu0 1
        %984 = vperm.xlu0 %983, %v805
        %v985 = vpop.permute.xlu0 %984
        %v987 = vlaneseq
        %v988 = vshrl.u32 %v987, 7
        %v989 = vsub.s32 1, %v988
        %v990 = vrot.slane %v806, %v989
        %v991 = vsub.f32 %v925, %v990
        %v992 = vsub.f32 %v929, %v990
        %v993 = vsub.f32 %v933, %v990
        %v994 = vsub.f32 %v937, %v990
        %v995 = vsub.f32 %v941, %v990
        %v996 = vsub.f32 %v945, %v990
        %v997 = vsub.f32 %v949, %v990
        %v998 = vsub.f32 %v953, %v990
        %v999 = vsub.f32 %v957, %v990
        %v1000 = vsub.f32 %v961, %v990
        %v1001 = vsub.f32 %v965, %v990
        %v1002 = vsub.f32 %v969, %v990
        %v1003 = vsub.f32 %v973, %v990
        %v1004 = vsub.f32 %v977, %v990
        %v1005 = vsub.f32 %v981, %v990
        %v1006 = vsub.f32 %v985, %v990
        %v1007 = vmul.f32 %v991, %v991
        %v1008 = vmul.f32 %v992, %v992
        %v1009 = vmul.f32 %v993, %v993
        %v1010 = vmul.f32 %v994, %v994
        %v1011 = vmul.f32 %v995, %v995
        %v1012 = vmul.f32 %v996, %v996
        %v1013 = vmul.f32 %v997, %v997
        %v1014 = vmul.f32 %v998, %v998
        %v1015 = vmul.f32 %v999, %v999
        %v1016 = vmul.f32 %v1000, %v1000
        %v1017 = vmul.f32 %v1001, %v1001
        %v1018 = vmul.f32 %v1002, %v1002
        %v1019 = vmul.f32 %v1003, %v1003
        %v1020 = vmul.f32 %v1004, %v1004
        %v1021 = vmul.f32 %v1005, %v1005
        %v1022 = vmul.f32 %v1006, %v1006
        %v1023 = vadd.f32 %v907, %v1007
        %v1024 = vadd.f32 %v908, %v1008
        %v1025 = vadd.f32 %v909, %v1009
        %v1026 = vadd.f32 %v910, %v1010
        %v1027 = vadd.f32 %v911, %v1011
        %v1028 = vadd.f32 %v912, %v1012
        %v1029 = vadd.f32 %v913, %v1013
        %v1030 = vadd.f32 %v914, %v1014
        %v1031 = vadd.f32 %v915, %v1015
        %v1032 = vadd.f32 %v916, %v1016
        %v1033 = vadd.f32 %v917, %v1017
        %v1034 = vadd.f32 %v918, %v1018
        %v1035 = vadd.f32 %v919, %v1019
        %v1036 = vadd.f32 %v920, %v1020
        %v1037 = vadd.f32 %v921, %v1021
        %v1038 = vadd.f32 %v922, %v1022
        %1039 = vset.pattern.permute.xlu0 2
        %1040 = vperm.xlu0 %1039, %v790
        %v1041 = vpop.permute.xlu0 %1040
        %1043 = vset.pattern.permute.xlu0 2
        %1044 = vperm.xlu0 %1043, %v791
        %v1045 = vpop.permute.xlu0 %1044
        %1047 = vset.pattern.permute.xlu0 2
        %1048 = vperm.xlu0 %1047, %v792
        %v1049 = vpop.permute.xlu0 %1048
        %1051 = vset.pattern.permute.xlu0 2
        %1052 = vperm.xlu0 %1051, %v793
        %v1053 = vpop.permute.xlu0 %1052
        %1055 = vset.pattern.permute.xlu0 2
        %1056 = vperm.xlu0 %1055, %v794
        %v1057 = vpop.permute.xlu0 %1056
        %1059 = vset.pattern.permute.xlu0 2
        %1060 = vperm.xlu0 %1059, %v795
        %v1061 = vpop.permute.xlu0 %1060
        %1063 = vset.pattern.permute.xlu0 2
        %1064 = vperm.xlu0 %1063, %v796
        %v1065 = vpop.permute.xlu0 %1064
        %1067 = vset.pattern.permute.xlu0 2
        %1068 = vperm.xlu0 %1067, %v797
        %v1069 = vpop.permute.xlu0 %1068
        %1071 = vset.pattern.permute.xlu0 2
        %1072 = vperm.xlu0 %1071, %v798
        %v1073 = vpop.permute.xlu0 %1072
        %1075 = vset.pattern.permute.xlu0 2
        %1076 = vperm.xlu0 %1075, %v799
        %v1077 = vpop.permute.xlu0 %1076
        %1079 = vset.pattern.permute.xlu0 2
        %1080 = vperm.xlu0 %1079, %v800
        %v1081 = vpop.permute.xlu0 %1080
        %1083 = vset.pattern.permute.xlu0 2
        %1084 = vperm.xlu0 %1083, %v801
        %v1085 = vpop.permute.xlu0 %1084
        %1087 = vset.pattern.permute.xlu0 2
        %1088 = vperm.xlu0 %1087, %v802
        %v1089 = vpop.permute.xlu0 %1088
        %1091 = vset.pattern.permute.xlu0 2
        %1092 = vperm.xlu0 %1091, %v803
        %v1093 = vpop.permute.xlu0 %1092
        %1095 = vset.pattern.permute.xlu0 2
        %1096 = vperm.xlu0 %1095, %v804
        %v1097 = vpop.permute.xlu0 %1096
        %1099 = vset.pattern.permute.xlu0 2
        %1100 = vperm.xlu0 %1099, %v805
        %v1101 = vpop.permute.xlu0 %1100
        %v1103 = vlaneseq
        %v1104 = vshrl.u32 %v1103, 7
        %v1105 = vsub.s32 2, %v1104
        %v1106 = vrot.slane %v806, %v1105
        %v1107 = vsub.f32 %v1041, %v1106
        %v1108 = vsub.f32 %v1045, %v1106
        %v1109 = vsub.f32 %v1049, %v1106
        %v1110 = vsub.f32 %v1053, %v1106
        %v1111 = vsub.f32 %v1057, %v1106
        %v1112 = vsub.f32 %v1061, %v1106
        %v1113 = vsub.f32 %v1065, %v1106
        %v1114 = vsub.f32 %v1069, %v1106
        %v1115 = vsub.f32 %v1073, %v1106
        %v1116 = vsub.f32 %v1077, %v1106
        %v1117 = vsub.f32 %v1081, %v1106
        %v1118 = vsub.f32 %v1085, %v1106
        %v1119 = vsub.f32 %v1089, %v1106
        %v1120 = vsub.f32 %v1093, %v1106
        %v1121 = vsub.f32 %v1097, %v1106
        %v1122 = vsub.f32 %v1101, %v1106
        %v1123 = vmul.f32 %v1107, %v1107
        %v1124 = vmul.f32 %v1108, %v1108
        %v1125 = vmul.f32 %v1109, %v1109
        %v1126 = vmul.f32 %v1110, %v1110
        %v1127 = vmul.f32 %v1111, %v1111
        %v1128 = vmul.f32 %v1112, %v1112
        %v1129 = vmul.f32 %v1113, %v1113
        %v1130 = vmul.f32 %v1114, %v1114
        %v1131 = vmul.f32 %v1115, %v1115
        %v1132 = vmul.f32 %v1116, %v1116
        %v1133 = vmul.f32 %v1117, %v1117
        %v1134 = vmul.f32 %v1118, %v1118
        %v1135 = vmul.f32 %v1119, %v1119
        %v1136 = vmul.f32 %v1120, %v1120
        %v1137 = vmul.f32 %v1121, %v1121
        %v1138 = vmul.f32 %v1122, %v1122
        %v1139 = vadd.f32 %v1023, %v1123
        %v1140 = vadd.f32 %v1024, %v1124
        %v1141 = vadd.f32 %v1025, %v1125
        %v1142 = vadd.f32 %v1026, %v1126
        %v1143 = vadd.f32 %v1027, %v1127
        %v1144 = vadd.f32 %v1028, %v1128
        %v1145 = vadd.f32 %v1029, %v1129
        %v1146 = vadd.f32 %v1030, %v1130
        %v1147 = vadd.f32 %v1031, %v1131
        %v1148 = vadd.f32 %v1032, %v1132
        %v1149 = vadd.f32 %v1033, %v1133
        %v1150 = vadd.f32 %v1034, %v1134
        %v1151 = vadd.f32 %v1035, %v1135
        %v1152 = vadd.f32 %v1036, %v1136
        %v1153 = vadd.f32 %v1037, %v1137
        %v1154 = vadd.f32 %v1038, %v1138
        %v1155 = vadd.f32 %v1139, 1e-06
        %v1156 = vadd.f32 %v1140, 1e-06
        %v1157 = vadd.f32 %v1141, 1e-06
        %v1158 = vadd.f32 %v1142, 1e-06
        %v1159 = vadd.f32 %v1143, 1e-06
        %v1160 = vadd.f32 %v1144, 1e-06
        %v1161 = vadd.f32 %v1145, 1e-06
        %v1162 = vadd.f32 %v1146, 1e-06
        %v1163 = vadd.f32 %v1147, 1e-06
        %v1164 = vadd.f32 %v1148, 1e-06
        %v1165 = vadd.f32 %v1149, 1e-06
        %v1166 = vadd.f32 %v1150, 1e-06
        %v1167 = vadd.f32 %v1151, 1e-06
        %v1168 = vadd.f32 %v1152, 1e-06
        %v1169 = vadd.f32 %v1153, 1e-06
        %v1170 = vadd.f32 %v1154, 1e-06
        %v1171 = vrsqrt.pop %v1155
        %v1172 = vmul.f32 %v1155, %v1171
        %vm1173 = vcmp.eq.f32.partialorder %v1155, inf
        %v1174 = vsel %vm1173, %v1155, %v1172
        %vm1175 = vcmp.eq.f32.partialorder %v1155, 0.0
        %v1176 = vand.u32 %v1155, 2147483648
        %v1177 = vsel %vm1175, %v1176, %v1174
        %v1178 = vrsqrt.pop %v1156
        %v1179 = vmul.f32 %v1156, %v1178
        %vm1180 = vcmp.eq.f32.partialorder %v1156, inf
        %v1181 = vsel %vm1180, %v1156, %v1179
        %vm1182 = vcmp.eq.f32.partialorder %v1156, 0.0
        %v1183 = vand.u32 %v1156, 2147483648
        %v1184 = vsel %vm1182, %v1183, %v1181
        %v1185 = vrsqrt.pop %v1157
        %v1186 = vmul.f32 %v1157, %v1185
        %vm1187 = vcmp.eq.f32.partialorder %v1157, inf
        %v1188 = vsel %vm1187, %v1157, %v1186
        %vm1189 = vcmp.eq.f32.partialorder %v1157, 0.0
        %v1190 = vand.u32 %v1157, 2147483648
        %v1191 = vsel %vm1189, %v1190, %v1188
        %v1192 = vrsqrt.pop %v1158
        %v1193 = vmul.f32 %v1158, %v1192
        %vm1194 = vcmp.eq.f32.partialorder %v1158, inf
        %v1195 = vsel %vm1194, %v1158, %v1193
        %vm1196 = vcmp.eq.f32.partialorder %v1158, 0.0
        %v1197 = vand.u32 %v1158, 2147483648
        %v1198 = vsel %vm1196, %v1197, %v1195
        %v1199 = vrsqrt.pop %v1159
        %v1200 = vmul.f32 %v1159, %v1199
        %vm1201 = vcmp.eq.f32.partialorder %v1159, inf
        %v1202 = vsel %vm1201, %v1159, %v1200
        %vm1203 = vcmp.eq.f32.partialorder %v1159, 0.0
        %v1204 = vand.u32 %v1159, 2147483648
        %v1205 = vsel %vm1203, %v1204, %v1202
        %v1206 = vrsqrt.pop %v1160
        %v1207 = vmul.f32 %v1160, %v1206
        %vm1208 = vcmp.eq.f32.partialorder %v1160, inf
        %v1209 = vsel %vm1208, %v1160, %v1207
        %vm1210 = vcmp.eq.f32.partialorder %v1160, 0.0
        %v1211 = vand.u32 %v1160, 2147483648
        %v1212 = vsel %vm1210, %v1211, %v1209
        %v1213 = vrsqrt.pop %v1161
        %v1214 = vmul.f32 %v1161, %v1213
        %vm1215 = vcmp.eq.f32.partialorder %v1161, inf
        %v1216 = vsel %vm1215, %v1161, %v1214
        %vm1217 = vcmp.eq.f32.partialorder %v1161, 0.0
        %v1218 = vand.u32 %v1161, 2147483648
        %v1219 = vsel %vm1217, %v1218, %v1216
        %v1220 = vrsqrt.pop %v1162
        %v1221 = vmul.f32 %v1162, %v1220
        %vm1222 = vcmp.eq.f32.partialorder %v1162, inf
        %v1223 = vsel %vm1222, %v1162, %v1221
        %vm1224 = vcmp.eq.f32.partialorder %v1162, 0.0
        %v1225 = vand.u32 %v1162, 2147483648
        %v1226 = vsel %vm1224, %v1225, %v1223
        %v1227 = vrsqrt.pop %v1163
        %v1228 = vmul.f32 %v1163, %v1227
        %vm1229 = vcmp.eq.f32.partialorder %v1163, inf
        %v1230 = vsel %vm1229, %v1163, %v1228
        %vm1231 = vcmp.eq.f32.partialorder %v1163, 0.0
        %v1232 = vand.u32 %v1163, 2147483648
        %v1233 = vsel %vm1231, %v1232, %v1230
        %v1234 = vrsqrt.pop %v1164
        %v1235 = vmul.f32 %v1164, %v1234
        %vm1236 = vcmp.eq.f32.partialorder %v1164, inf
        %v1237 = vsel %vm1236, %v1164, %v1235
        %vm1238 = vcmp.eq.f32.partialorder %v1164, 0.0
        %v1239 = vand.u32 %v1164, 2147483648
        %v1240 = vsel %vm1238, %v1239, %v1237
        %v1241 = vrsqrt.pop %v1165
        %v1242 = vmul.f32 %v1165, %v1241
        %vm1243 = vcmp.eq.f32.partialorder %v1165, inf
        %v1244 = vsel %vm1243, %v1165, %v1242
        %vm1245 = vcmp.eq.f32.partialorder %v1165, 0.0
        %v1246 = vand.u32 %v1165, 2147483648
        %v1247 = vsel %vm1245, %v1246, %v1244
        %v1248 = vrsqrt.pop %v1166
        %v1249 = vmul.f32 %v1166, %v1248
        %vm1250 = vcmp.eq.f32.partialorder %v1166, inf
        %v1251 = vsel %vm1250, %v1166, %v1249
        %vm1252 = vcmp.eq.f32.partialorder %v1166, 0.0
        %v1253 = vand.u32 %v1166, 2147483648
        %v1254 = vsel %vm1252, %v1253, %v1251
        %v1255 = vrsqrt.pop %v1167
        %v1256 = vmul.f32 %v1167, %v1255
        %vm1257 = vcmp.eq.f32.partialorder %v1167, inf
        %v1258 = vsel %vm1257, %v1167, %v1256
        %vm1259 = vcmp.eq.f32.partialorder %v1167, 0.0
        %v1260 = vand.u32 %v1167, 2147483648
        %v1261 = vsel %vm1259, %v1260, %v1258
        %v1262 = vrsqrt.pop %v1168
        %v1263 = vmul.f32 %v1168, %v1262
        %vm1264 = vcmp.eq.f32.partialorder %v1168, inf
        %v1265 = vsel %vm1264, %v1168, %v1263
        %vm1266 = vcmp.eq.f32.partialorder %v1168, 0.0
        %v1267 = vand.u32 %v1168, 2147483648
        %v1268 = vsel %vm1266, %v1267, %v1265
        %v1269 = vrsqrt.pop %v1169
        %v1270 = vmul.f32 %v1169, %v1269
        %vm1271 = vcmp.eq.f32.partialorder %v1169, inf
        %v1272 = vsel %vm1271, %v1169, %v1270
        %vm1273 = vcmp.eq.f32.partialorder %v1169, 0.0
        %v1274 = vand.u32 %v1169, 2147483648
        %v1275 = vsel %vm1273, %v1274, %v1272
        %v1276 = vrsqrt.pop %v1170
        %v1277 = vmul.f32 %v1170, %v1276
        %vm1278 = vcmp.eq.f32.partialorder %v1170, inf
        %v1279 = vsel %vm1278, %v1170, %v1277
        %vm1280 = vcmp.eq.f32.partialorder %v1170, 0.0
        %v1281 = vand.u32 %v1170, 2147483648
        %v1282 = vsel %vm1280, %v1281, %v1279
        %v1283 = vmul.f32 %v1177, -0.17677669
        %v1284 = vmul.f32 %v1184, -0.17677669
        %v1285 = vmul.f32 %v1191, -0.17677669
        %v1286 = vmul.f32 %v1198, -0.17677669
        %v1287 = vmul.f32 %v1205, -0.17677669
        %v1288 = vmul.f32 %v1212, -0.17677669
        %v1289 = vmul.f32 %v1219, -0.17677669
        %v1290 = vmul.f32 %v1226, -0.17677669
        %v1291 = vmul.f32 %v1233, -0.17677669
        %v1292 = vmul.f32 %v1240, -0.17677669
        %v1293 = vmul.f32 %v1247, -0.17677669
        %v1294 = vmul.f32 %v1254, -0.17677669
        %v1295 = vmul.f32 %v1261, -0.17677669
        %v1296 = vmul.f32 %v1268, -0.17677669
        %v1297 = vmul.f32 %v1275, -0.17677669
        %v1298 = vmul.f32 %v1282, -0.17677669
        %v1299 = vmax.f32 %v1283, -5.0
        %v1300 = vmax.f32 %v1284, -5.0
        %v1301 = vmax.f32 %v1285, -5.0
        %v1302 = vmax.f32 %v1286, -5.0
        %v1303 = vmax.f32 %v1287, -5.0
        %v1304 = vmax.f32 %v1288, -5.0
        %v1305 = vmax.f32 %v1289, -5.0
        %v1306 = vmax.f32 %v1290, -5.0
        %v1307 = vmax.f32 %v1291, -5.0
        %v1308 = vmax.f32 %v1292, -5.0
        %v1309 = vmax.f32 %v1293, -5.0
        %v1310 = vmax.f32 %v1294, -5.0
        %v1311 = vmax.f32 %v1295, -5.0
        %v1312 = vmax.f32 %v1296, -5.0
        %v1313 = vmax.f32 %v1297, -5.0
        %v1314 = vmax.f32 %v1298, -5.0
        %v1315 = vmul.f32 %v1299, 1.442695
        %v1316 = vpow.pop %v1315
        %v1317 = vmul.f32 %v1300, 1.442695
        %v1318 = vpow.pop %v1317
        %v1319 = vmul.f32 %v1301, 1.442695
        %v1320 = vpow.pop %v1319
        %v1321 = vmul.f32 %v1302, 1.442695
        %v1322 = vpow.pop %v1321
        %v1323 = vmul.f32 %v1303, 1.442695
        %v1324 = vpow.pop %v1323
        %v1325 = vmul.f32 %v1304, 1.442695
        %v1326 = vpow.pop %v1325
        %v1327 = vmul.f32 %v1305, 1.442695
        %v1328 = vpow.pop %v1327
        %v1329 = vmul.f32 %v1306, 1.442695
        %v1330 = vpow.pop %v1329
        %v1331 = vmul.f32 %v1307, 1.442695
        %v1332 = vpow.pop %v1331
        %v1333 = vmul.f32 %v1308, 1.442695
        %v1334 = vpow.pop %v1333
        %v1335 = vmul.f32 %v1309, 1.442695
        %v1336 = vpow.pop %v1335
        %v1337 = vmul.f32 %v1310, 1.442695
        %v1338 = vpow.pop %v1337
        %v1339 = vmul.f32 %v1311, 1.442695
        %v1340 = vpow.pop %v1339
        %v1341 = vmul.f32 %v1312, 1.442695
        %v1342 = vpow.pop %v1341
        %v1343 = vmul.f32 %v1313, 1.442695
        %v1344 = vpow.pop %v1343
        %v1345 = vmul.f32 %v1314, 1.442695
        %v1346 = vpow.pop %v1345
        %v1347 = vld [vmem:[%s469] sm:$0xff]
        %v1348 = vld [vmem:[%s469 + $0x8] sm:$0xff]
        %v1349 = vld [vmem:[%s469 + $0x10] sm:$0xff]
        %v1350 = vld [vmem:[%s469 + $0x18] sm:$0xff]
        %v1351 = vld [vmem:[%s469 + $0x20] sm:$0xff]
        %v1352 = vld [vmem:[%s469 + $0x28] sm:$0xff]
        %v1353 = vld [vmem:[%s469 + $0x30] sm:$0xff]
        %v1354 = vld [vmem:[%s469 + $0x38] sm:$0xff]
        %v1355 = vld [vmem:[%s469 + $0x40] sm:$0xff]
        %v1356 = vld [vmem:[%s469 + $0x48] sm:$0xff]
        %v1357 = vld [vmem:[%s469 + $0x50] sm:$0xff]
        %v1358 = vld [vmem:[%s469 + $0x58] sm:$0xff]
        %v1359 = vld [vmem:[%s469 + $0x60] sm:$0xff]
        %v1360 = vld [vmem:[%s469 + $0x68] sm:$0xff]
        %v1361 = vld [vmem:[%s469 + $0x70] sm:$0xff]
        %v1362 = vld [vmem:[%s469 + $0x78] sm:$0xff]
        %1364 = vset.pattern.permute.xlu0 0
        %1365 = vperm.xlu0 %1364, %v1347
        %v1366 = vpop.permute.xlu0 %1365
        %1369 = vset.pattern.permute.xlu0 0
        %1370 = vperm.xlu0 %1369, %v1348
        %v1371 = vpop.permute.xlu0 %1370
        %1374 = vset.pattern.permute.xlu0 0
        %1375 = vperm.xlu0 %1374, %v1349
        %v1376 = vpop.permute.xlu0 %1375
        %1379 = vset.pattern.permute.xlu0 0
        %1380 = vperm.xlu0 %1379, %v1350
        %v1381 = vpop.permute.xlu0 %1380
        %1384 = vset.pattern.permute.xlu0 0
        %1385 = vperm.xlu0 %1384, %v1351
        %v1386 = vpop.permute.xlu0 %1385
        %1389 = vset.pattern.permute.xlu0 0
        %1390 = vperm.xlu0 %1389, %v1352
        %v1391 = vpop.permute.xlu0 %1390
        %1394 = vset.pattern.permute.xlu0 0
        %1395 = vperm.xlu0 %1394, %v1353
        %v1396 = vpop.permute.xlu0 %1395
        %1399 = vset.pattern.permute.xlu0 0
        %1400 = vperm.xlu0 %1399, %v1354
        %v1401 = vpop.permute.xlu0 %1400
        %1404 = vset.pattern.permute.xlu0 0
        %1405 = vperm.xlu0 %1404, %v1355
        %v1406 = vpop.permute.xlu0 %1405
        %1409 = vset.pattern.permute.xlu0 0
        %1410 = vperm.xlu0 %1409, %v1356
        %v1411 = vpop.permute.xlu0 %1410
        %1414 = vset.pattern.permute.xlu0 0
        %1415 = vperm.xlu0 %1414, %v1357
        %v1416 = vpop.permute.xlu0 %1415
        %1419 = vset.pattern.permute.xlu0 0
        %1420 = vperm.xlu0 %1419, %v1358
        %v1421 = vpop.permute.xlu0 %1420
        %1424 = vset.pattern.permute.xlu0 0
        %1425 = vperm.xlu0 %1424, %v1359
        %v1426 = vpop.permute.xlu0 %1425
        %1429 = vset.pattern.permute.xlu0 0
        %1430 = vperm.xlu0 %1429, %v1360
        %v1431 = vpop.permute.xlu0 %1430
        %1434 = vset.pattern.permute.xlu0 0
        %1435 = vperm.xlu0 %1434, %v1361
        %v1436 = vpop.permute.xlu0 %1435
        %1439 = vset.pattern.permute.xlu0 0
        %1440 = vperm.xlu0 %1439, %v1362
        %v1441 = vpop.permute.xlu0 %1440
        %vm1443 = vcmp.le.f32.partialorder %v1139, %v1366
        %vm1444 = vcmp.le.f32.partialorder %v1140, %v1371
        %vm1445 = vcmp.le.f32.partialorder %v1141, %v1376
        %vm1446 = vcmp.le.f32.partialorder %v1142, %v1381
        %vm1447 = vcmp.le.f32.partialorder %v1143, %v1386
        %vm1448 = vcmp.le.f32.partialorder %v1144, %v1391
        %vm1449 = vcmp.le.f32.partialorder %v1145, %v1396
        %vm1450 = vcmp.le.f32.partialorder %v1146, %v1401
        %vm1451 = vcmp.le.f32.partialorder %v1147, %v1406
        %vm1452 = vcmp.le.f32.partialorder %v1148, %v1411
        %vm1453 = vcmp.le.f32.partialorder %v1149, %v1416
        %vm1454 = vcmp.le.f32.partialorder %v1150, %v1421
        %vm1455 = vcmp.le.f32.partialorder %v1151, %v1426
        %vm1456 = vcmp.le.f32.partialorder %v1152, %v1431
        %vm1457 = vcmp.le.f32.partialorder %v1153, %v1436
        %vm1458 = vcmp.le.f32.partialorder %v1154, %v1441
        %v1459 = vsel %vm1443, %v759, 0.0
        %v1460 = vsel %vm1444, %v761, 0.0
        %v1461 = vsel %vm1445, %v763, 0.0
        %v1462 = vsel %vm1446, %v765, 0.0
        %v1463 = vsel %vm1447, %v767, 0.0
        %v1464 = vsel %vm1448, %v769, 0.0
        %v1465 = vsel %vm1449, %v771, 0.0
        %v1466 = vsel %vm1450, %v773, 0.0
        %v1467 = vsel %vm1451, %v775, 0.0
        %v1468 = vsel %vm1452, %v777, 0.0
        %v1469 = vsel %vm1453, %v779, 0.0
        %v1470 = vsel %vm1454, %v781, 0.0
        %v1471 = vsel %vm1455, %v783, 0.0
        %v1472 = vsel %vm1456, %v785, 0.0
        %v1473 = vsel %vm1457, %v787, 0.0
        %v1474 = vsel %vm1458, %v789, 0.0
        %v1475 = vmul.f32 %v1459, %v1316
        %v1476 = vmul.f32 %v1460, %v1318
        %v1477 = vmul.f32 %v1461, %v1320
        %v1478 = vmul.f32 %v1462, %v1322
        %v1479 = vmul.f32 %v1463, %v1324
        %v1480 = vmul.f32 %v1464, %v1326
        %v1481 = vmul.f32 %v1465, %v1328
        %v1482 = vmul.f32 %v1466, %v1330
        %v1483 = vmul.f32 %v1467, %v1332
        %v1484 = vmul.f32 %v1468, %v1334
        %v1485 = vmul.f32 %v1469, %v1336
        %v1486 = vmul.f32 %v1470, %v1338
        %v1487 = vmul.f32 %v1471, %v1340
        %v1488 = vmul.f32 %v1472, %v1342
        %v1489 = vmul.f32 %v1473, %v1344
        %v1490 = vmul.f32 %v1474, %v1346
        %v1491 = vld [vmem:[#allocation2] sm:$0xff]
        %v1492 = vld [vmem:[#allocation2 + $0x8] sm:$0xff]
        %v1493 = vld [vmem:[#allocation2 + $0x10] sm:$0xff]
        %v1494 = vld [vmem:[#allocation2 + $0x18] sm:$0xff]
        %v1495 = vld [vmem:[#allocation2 + $0x20] sm:$0xff]
        %v1496 = vld [vmem:[#allocation2 + $0x28] sm:$0xff]
        %v1497 = vld [vmem:[#allocation2 + $0x30] sm:$0xff]
        %v1498 = vld [vmem:[#allocation2 + $0x38] sm:$0xff]
        %v1499 = vld [vmem:[#allocation2 + $0x40] sm:$0xff]
        %v1500 = vld [vmem:[#allocation2 + $0x48] sm:$0xff]
        %v1501 = vld [vmem:[#allocation2 + $0x50] sm:$0xff]
        %v1502 = vld [vmem:[#allocation2 + $0x58] sm:$0xff]
        %v1503 = vld [vmem:[#allocation2 + $0x60] sm:$0xff]
        %v1504 = vld [vmem:[#allocation2 + $0x68] sm:$0xff]
        %v1505 = vld [vmem:[#allocation2 + $0x70] sm:$0xff]
        %v1506 = vld [vmem:[#allocation2 + $0x78] sm:$0xff]
        %v1507 = vpack.c.bf16 %v1476, %v1475
        %v1508 = vpack.c.bf16 %v1478, %v1477
        %v1509 = vpack.c.bf16 %v1480, %v1479
        %v1510 = vpack.c.bf16 %v1482, %v1481
        %v1511 = vpack.c.bf16 %v1484, %v1483
        %v1512 = vpack.c.bf16 %v1486, %v1485
        %v1513 = vpack.c.bf16 %v1488, %v1487
        %v1514 = vpack.c.bf16 %v1490, %v1489
        %v1515 = vld [vmem:[%s453] sm:$0xf]
        %v1516 = vld [vmem:[%s453 + $0x4] sm:$0xf]
        %v1517 = vld [vmem:[%s453 + $0x8] sm:$0xf]
        %v1518 = vld [vmem:[%s453 + $0xc] sm:$0xf]
        %v1519 = vld [vmem:[%s453 + $0x10] sm:$0xf]
        %v1520 = vld [vmem:[%s453 + $0x14] sm:$0xf]
        %v1521 = vld [vmem:[%s453 + $0x18] sm:$0xf]
        %v1522 = vld [vmem:[%s453 + $0x1c] sm:$0xf]
        %v1523 = vld [vmem:[%s453 + $0x20] sm:$0xf]
        %v1524 = vld [vmem:[%s453 + $0x24] sm:$0xf]
        %v1525 = vld [vmem:[%s453 + $0x28] sm:$0xf]
        %v1526 = vld [vmem:[%s453 + $0x2c] sm:$0xf]
        %v1527 = vld [vmem:[%s453 + $0x30] sm:$0xf]
        %v1528 = vld [vmem:[%s453 + $0x34] sm:$0xf]
        %v1529 = vld [vmem:[%s453 + $0x38] sm:$0xf]
        %v1530 = vld [vmem:[%s453 + $0x3c] sm:$0xf]
        %v1547 = vunpack.c.l.b16 %v1515
        %v1548 = vunpack.c.l.b16 %v1516
        %v1549 = vunpack.c.l.b16 %v1517
        %v1550 = vunpack.c.l.b16 %v1518
        %v1551 = vunpack.c.l.b16 %v1519
        %v1552 = vunpack.c.l.b16 %v1520
        %v1553 = vunpack.c.l.b16 %v1521
        %v1554 = vunpack.c.l.b16 %v1522
        %v1555 = vunpack.c.l.b16 %v1523
        %v1556 = vunpack.c.l.b16 %v1524
        %v1557 = vunpack.c.l.b16 %v1525
        %v1558 = vunpack.c.l.b16 %v1526
        %v1559 = vunpack.c.l.b16 %v1527
        %v1560 = vunpack.c.l.b16 %v1528
        %v1561 = vunpack.c.l.b16 %v1529
        %v1562 = vunpack.c.l.b16 %v1530
        %v1563 = vpack.c.b16 %v1548, %v1547
        %v1564 = vpack.c.b16 %v1550, %v1549
        %v1565 = vpack.c.b16 %v1552, %v1551
        %v1566 = vpack.c.b16 %v1554, %v1553
        %v1567 = vpack.c.b16 %v1556, %v1555
        %v1568 = vpack.c.b16 %v1558, %v1557
        %v1569 = vpack.c.b16 %v1560, %v1559
        %v1570 = vpack.c.b16 %v1562, %v1561
        %1579 = vmatprep.subr.bf16.mxu0 0
        %1580 = vmatpush1.bf16.msra.mxu0 %v1563
        %1581 = vmatprep.subr.bf16.mxu0 0
        %1582 = vmatpush1.bf16.msra.mxu0 %v1564
        %1583 = vmatprep.subr.bf16.mxu0 0
        %1584 = vmatpush1.bf16.msra.mxu0 %v1565
        %1585 = vmatprep.subr.bf16.mxu0 0
        %1586 = vmatpush1.bf16.msra.mxu0 %v1566
        %1587 = vmatprep.subr.bf16.mxu0 0
        %1588 = vmatpush1.bf16.msra.mxu0 %v1567
        %1589 = vmatprep.subr.bf16.mxu0 0
        %1590 = vmatpush1.bf16.msra.mxu0 %v1568
        %1591 = vmatprep.subr.bf16.mxu0 0
        %1592 = vmatpush1.bf16.msra.mxu0 %v1569
        %1593 = vmatprep.subr.bf16.mxu0 0
        %1594 = vmatpush1.bf16.msra.mxu0 %v1570
        %1595 = vmatprep.subr.bf16.mxu0 0
        %1596 = vmatpush1.bf16.msra.mxu0 0
        %1597 = vmatprep.subr.bf16.mxu0 0
        %1598 = vmatpush1.bf16.msra.mxu0 0
        %1599 = vmatprep.subr.bf16.mxu0 0
        %1600 = vmatpush1.bf16.msra.mxu0 0
        %1601 = vmatprep.subr.bf16.mxu0 0
        %1602 = vmatpush1.bf16.msra.mxu0 0
        %1603 = vmatprep.subr.bf16.mxu0 0
        %1604 = vmatpush1.bf16.msra.mxu0 0
        %1605 = vmatprep.subr.bf16.mxu0 0
        %1606 = vmatpush1.bf16.msra.mxu0 0
        %1607 = vmatprep.subr.bf16.mxu0 0
        %1608 = vmatpush1.bf16.msra.mxu0 0
        %1609 = vmatprep.subr.bf16.mxu0 0
        %1610 = vmatpush1.bf16.msra.mxu0 0
        %1611 = vmatprep.mubr.bf16.mxu0 0
        %1612 = vmatmul.mubr.bf16.gmra.mrb[0].mxu0 %v1507
        %v1613 = vpop.f32.mrb[0].mxu0
        %v1614 = vadd.f32 0.0, %v1613
        %v1615 = vpop.f32.mrb[0].mxu0
        %v1616 = vpop.f32.mrb[0].mxu0
        %v1617 = vadd.f32 0.0, %v1616
        %v1618 = vpop.f32.mrb[0].mxu0
        %1619 = vmatprep.mubr.bf16.mxu0 0
        %1620 = vmatmul.mubr.bf16.gmra.mrb[0].mxu0 %v1508
        %v1621 = vpop.f32.mrb[0].mxu0
        %v1622 = vadd.f32 0.0, %v1621
        %v1623 = vpop.f32.mrb[0].mxu0
        %v1624 = vpop.f32.mrb[0].mxu0
        %v1625 = vadd.f32 0.0, %v1624
        %v1626 = vpop.f32.mrb[0].mxu0
        %1627 = vmatprep.mubr.bf16.mxu0 0
        %1628 = vmatmul.mubr.bf16.gmra.mrb[0].mxu0 %v1509
        %v1629 = vpop.f32.mrb[0].mxu0
        %v1630 = vadd.f32 0.0, %v1629
        %v1631 = vpop.f32.mrb[0].mxu0
        %v1632 = vpop.f32.mrb[0].mxu0
        %v1633 = vadd.f32 0.0, %v1632
        %v1634 = vpop.f32.mrb[0].mxu0
        %1635 = vmatprep.mubr.bf16.mxu0 0
        %1636 = vmatmul.mubr.bf16.gmra.mrb[0].mxu0 %v1510
        %v1637 = vpop.f32.mrb[0].mxu0
        %v1638 = vadd.f32 0.0, %v1637
        %v1639 = vpop.f32.mrb[0].mxu0
        %v1640 = vpop.f32.mrb[0].mxu0
        %v1641 = vadd.f32 0.0, %v1640
        %v1642 = vpop.f32.mrb[0].mxu0
        %1643 = vmatprep.mubr.bf16.mxu0 0
        %1644 = vmatmul.mubr.bf16.gmra.mrb[0].mxu0 %v1511
        %v1645 = vpop.f32.mrb[0].mxu0
        %v1646 = vadd.f32 0.0, %v1645
        %v1647 = vpop.f32.mrb[0].mxu0
        %v1648 = vpop.f32.mrb[0].mxu0
        %v1649 = vadd.f32 0.0, %v1648
        %v1650 = vpop.f32.mrb[0].mxu0
        %1651 = vmatprep.mubr.bf16.mxu0 0
        %1652 = vmatmul.mubr.bf16.gmra.mrb[0].mxu0 %v1512
        %v1653 = vpop.f32.mrb[0].mxu0
        %v1654 = vadd.f32 0.0, %v1653
        %v1655 = vpop.f32.mrb[0].mxu0
        %v1656 = vpop.f32.mrb[0].mxu0
        %v1657 = vadd.f32 0.0, %v1656
        %v1658 = vpop.f32.mrb[0].mxu0
        %1659 = vmatprep.mubr.bf16.mxu0 0
        %1660 = vmatmul.mubr.bf16.gmra.mrb[0].mxu0 %v1513
        %v1661 = vpop.f32.mrb[0].mxu0
        %v1662 = vadd.f32 0.0, %v1661
        %v1663 = vpop.f32.mrb[0].mxu0
        %v1664 = vpop.f32.mrb[0].mxu0
        %v1665 = vadd.f32 0.0, %v1664
        %v1666 = vpop.f32.mrb[0].mxu0
        %1667 = vmatprep.mubr.bf16.mxu0 0
        %1668 = vmatmul.mubr.bf16.gmra.mrb[0].mxu0 %v1514
        %v1669 = vpop.f32.mrb[0].mxu0
        %v1670 = vadd.f32 0.0, %v1669
        %v1671 = vpop.f32.mrb[0].mxu0
        %v1672 = vpop.f32.mrb[0].mxu0
        %v1673 = vadd.f32 0.0, %v1672
        %v1674 = vpop.f32.mrb[0].mxu0
        %1675 = vdwg.mxu0
        %v1676 = vadd.f32 %v1491, %v1614
        %v1677 = vadd.f32 %v1492, %v1617
        %v1678 = vadd.f32 %v1493, %v1622
        %v1679 = vadd.f32 %v1494, %v1625
        %v1680 = vadd.f32 %v1495, %v1630
        %v1681 = vadd.f32 %v1496, %v1633
        %v1682 = vadd.f32 %v1497, %v1638
        %v1683 = vadd.f32 %v1498, %v1641
        %v1684 = vadd.f32 %v1499, %v1646
        %v1685 = vadd.f32 %v1500, %v1649
        %v1686 = vadd.f32 %v1501, %v1654
        %v1687 = vadd.f32 %v1502, %v1657
        %v1688 = vadd.f32 %v1503, %v1662
        %v1689 = vadd.f32 %v1504, %v1665
        %v1690 = vadd.f32 %v1505, %v1670
        %v1691 = vadd.f32 %v1506, %v1673
        %1692 = vst.msk [vmem:[#allocation2] sm:$0xff] %vm588, %v1676
        %1693 = vst.msk [vmem:[#allocation2 + $0x8] sm:$0xff] %vm588, %v1677
        %1694 = vst.msk [vmem:[#allocation2 + $0x10] sm:$0xff] %vm588, %v1678
        %1695 = vst.msk [vmem:[#allocation2 + $0x18] sm:$0xff] %vm588, %v1679
        %1696 = vst.msk [vmem:[#allocation2 + $0x20] sm:$0xff] %vm588, %v1680
        %1697 = vst.msk [vmem:[#allocation2 + $0x28] sm:$0xff] %vm588, %v1681
        %1698 = vst.msk [vmem:[#allocation2 + $0x30] sm:$0xff] %vm588, %v1682
        %1699 = vst.msk [vmem:[#allocation2 + $0x38] sm:$0xff] %vm588, %v1683
        %1700 = vst.msk [vmem:[#allocation2 + $0x40] sm:$0xff] %vm588, %v1684
        %1701 = vst.msk [vmem:[#allocation2 + $0x48] sm:$0xff] %vm588, %v1685
        %1702 = vst.msk [vmem:[#allocation2 + $0x50] sm:$0xff] %vm588, %v1686
        %1703 = vst.msk [vmem:[#allocation2 + $0x58] sm:$0xff] %vm588, %v1687
        %1704 = vst.msk [vmem:[#allocation2 + $0x60] sm:$0xff] %vm588, %v1688
        %1705 = vst.msk [vmem:[#allocation2 + $0x68] sm:$0xff] %vm588, %v1689
        %1706 = vst.msk [vmem:[#allocation2 + $0x70] sm:$0xff] %vm588, %v1690
        %1707 = vst.msk [vmem:[#allocation2 + $0x78] sm:$0xff] %vm588, %v1691
        %v1708 = vld [vmem:[#allocation3] sm:$0xff]
        %v1709 = vld [vmem:[#allocation3 + $0x8] sm:$0xff]
        %v1710 = vld [vmem:[#allocation3 + $0x10] sm:$0xff]
        %v1711 = vld [vmem:[#allocation3 + $0x18] sm:$0xff]
        %v1712 = vld [vmem:[#allocation3 + $0x20] sm:$0xff]
        %v1713 = vld [vmem:[#allocation3 + $0x28] sm:$0xff]
        %v1714 = vld [vmem:[#allocation3 + $0x30] sm:$0xff]
        %v1715 = vld [vmem:[#allocation3 + $0x38] sm:$0xff]
        %v1716 = vld [vmem:[#allocation3 + $0x40] sm:$0xff]
        %v1717 = vld [vmem:[#allocation3 + $0x48] sm:$0xff]
        %v1718 = vld [vmem:[#allocation3 + $0x50] sm:$0xff]
        %v1719 = vld [vmem:[#allocation3 + $0x58] sm:$0xff]
        %v1720 = vld [vmem:[#allocation3 + $0x60] sm:$0xff]
        %v1721 = vld [vmem:[#allocation3 + $0x68] sm:$0xff]
        %v1722 = vld [vmem:[#allocation3 + $0x70] sm:$0xff]
        %v1723 = vld [vmem:[#allocation3 + $0x78] sm:$0xff]
        %1724 = vadd.xlane.f32.xlu0 %v1459
        %v1725 = vpop.xlane.xlu0 %1724
        %1726 = vadd.xlane.f32.xlu0 %v1460
        %v1727 = vpop.xlane.xlu0 %1726
        %1728 = vadd.xlane.f32.xlu0 %v1461
        %v1729 = vpop.xlane.xlu0 %1728
        %1730 = vadd.xlane.f32.xlu0 %v1462
        %v1731 = vpop.xlane.xlu0 %1730
        %1732 = vadd.xlane.f32.xlu0 %v1463
        %v1733 = vpop.xlane.xlu0 %1732
        %1734 = vadd.xlane.f32.xlu0 %v1464
        %v1735 = vpop.xlane.xlu0 %1734
        %1736 = vadd.xlane.f32.xlu0 %v1465
        %v1737 = vpop.xlane.xlu0 %1736
        %1738 = vadd.xlane.f32.xlu0 %v1466
        %v1739 = vpop.xlane.xlu0 %1738
        %1740 = vadd.xlane.f32.xlu0 %v1467
        %v1741 = vpop.xlane.xlu0 %1740
        %1742 = vadd.xlane.f32.xlu0 %v1468
        %v1743 = vpop.xlane.xlu0 %1742
        %1744 = vadd.xlane.f32.xlu0 %v1469
        %v1745 = vpop.xlane.xlu0 %1744
        %1746 = vadd.xlane.f32.xlu0 %v1470
        %v1747 = vpop.xlane.xlu0 %1746
        %1748 = vadd.xlane.f32.xlu0 %v1471
        %v1749 = vpop.xlane.xlu0 %1748
        %1750 = vadd.xlane.f32.xlu0 %v1472
        %v1751 = vpop.xlane.xlu0 %1750
        %1752 = vadd.xlane.f32.xlu0 %v1473
        %v1753 = vpop.xlane.xlu0 %1752
        %1754 = vadd.xlane.f32.xlu0 %v1474
        %v1755 = vpop.xlane.xlu0 %1754
        %v1756 = vadd.f32 %v1708, %v1725
        %v1757 = vadd.f32 %v1709, %v1727
        %v1758 = vadd.f32 %v1710, %v1729
        %v1759 = vadd.f32 %v1711, %v1731
        %v1760 = vadd.f32 %v1712, %v1733
        %v1761 = vadd.f32 %v1713, %v1735
        %v1762 = vadd.f32 %v1714, %v1737
        %v1763 = vadd.f32 %v1715, %v1739
        %v1764 = vadd.f32 %v1716, %v1741
        %v1765 = vadd.f32 %v1717, %v1743
        %v1766 = vadd.f32 %v1718, %v1745
        %v1767 = vadd.f32 %v1719, %v1747
        %v1768 = vadd.f32 %v1720, %v1749
        %v1769 = vadd.f32 %v1721, %v1751
        %v1770 = vadd.f32 %v1722, %v1753
        %v1771 = vadd.f32 %v1723, %v1755
        %vm1772 = vcmask 7168
        %1773 = vst.msk [vmem:[#allocation3] sm:$0xff] %vm1772, %v1756
        %1774 = vst.msk [vmem:[#allocation3 + $0x8] sm:$0xff] %vm1772, %v1757
        %1775 = vst.msk [vmem:[#allocation3 + $0x10] sm:$0xff] %vm1772, %v1758
        %1776 = vst.msk [vmem:[#allocation3 + $0x18] sm:$0xff] %vm1772, %v1759
        %1777 = vst.msk [vmem:[#allocation3 + $0x20] sm:$0xff] %vm1772, %v1760
        %1778 = vst.msk [vmem:[#allocation3 + $0x28] sm:$0xff] %vm1772, %v1761
        %1779 = vst.msk [vmem:[#allocation3 + $0x30] sm:$0xff] %vm1772, %v1762
        %1780 = vst.msk [vmem:[#allocation3 + $0x38] sm:$0xff] %vm1772, %v1763
        %1781 = vst.msk [vmem:[#allocation3 + $0x40] sm:$0xff] %vm1772, %v1764
        %1782 = vst.msk [vmem:[#allocation3 + $0x48] sm:$0xff] %vm1772, %v1765
        %1783 = vst.msk [vmem:[#allocation3 + $0x50] sm:$0xff] %vm1772, %v1766
        %1784 = vst.msk [vmem:[#allocation3 + $0x58] sm:$0xff] %vm1772, %v1767
        %1785 = vst.msk [vmem:[#allocation3 + $0x60] sm:$0xff] %vm1772, %v1768
        %1786 = vst.msk [vmem:[#allocation3 + $0x68] sm:$0xff] %vm1772, %v1769
        %1787 = vst.msk [vmem:[#allocation3 + $0x70] sm:$0xff] %vm1772, %v1770
        %1788 = vst.msk [vmem:[#allocation3 + $0x78] sm:$0xff] %vm1772, %v1771
        %p1789 = scmp.eq.s32.totalorder %s24, 2
        // Predicated region
        $region98: #{graph_transformer_layer.4} parent=88 // pred_check
          %p1790 = pneg %p1789
        $region99: #{graph_transformer_layer.4} parent=88 // pred_check_branch
          %1792 = sbr.rel (%p1790) target = $region101
        $region100: #{graph_transformer_layer.4} parent=88 // pred_region
          %v1793 = vld [vmem:[#allocation3] sm:$0xff]
          %v1794 = vld [vmem:[#allocation3 + $0x8] sm:$0xff]
          %v1795 = vld [vmem:[#allocation3 + $0x10] sm:$0xff]
          %v1796 = vld [vmem:[#allocation3 + $0x18] sm:$0xff]
          %v1797 = vld [vmem:[#allocation3 + $0x20] sm:$0xff]
          %v1798 = vld [vmem:[#allocation3 + $0x28] sm:$0xff]
          %v1799 = vld [vmem:[#allocation3 + $0x30] sm:$0xff]
          %v1800 = vld [vmem:[#allocation3 + $0x38] sm:$0xff]
          %v1801 = vld [vmem:[#allocation3 + $0x40] sm:$0xff]
          %v1802 = vld [vmem:[#allocation3 + $0x48] sm:$0xff]
          %v1803 = vld [vmem:[#allocation3 + $0x50] sm:$0xff]
          %v1804 = vld [vmem:[#allocation3 + $0x58] sm:$0xff]
          %v1805 = vld [vmem:[#allocation3 + $0x60] sm:$0xff]
          %v1806 = vld [vmem:[#allocation3 + $0x68] sm:$0xff]
          %v1807 = vld [vmem:[#allocation3 + $0x70] sm:$0xff]
          %v1808 = vld [vmem:[#allocation3 + $0x78] sm:$0xff]
          %vm1809 = vcmp.gt.f32.partialorder %v1793, 0.0
          %vm1810 = vcmp.gt.f32.partialorder %v1794, 0.0
          %vm1811 = vcmp.gt.f32.partialorder %v1795, 0.0
          %vm1812 = vcmp.gt.f32.partialorder %v1796, 0.0
          %vm1813 = vcmp.gt.f32.partialorder %v1797, 0.0
          %vm1814 = vcmp.gt.f32.partialorder %v1798, 0.0
          %vm1815 = vcmp.gt.f32.partialorder %v1799, 0.0
          %vm1816 = vcmp.gt.f32.partialorder %v1800, 0.0
          %vm1817 = vcmp.gt.f32.partialorder %v1801, 0.0
          %vm1818 = vcmp.gt.f32.partialorder %v1802, 0.0
          %vm1819 = vcmp.gt.f32.partialorder %v1803, 0.0
          %vm1820 = vcmp.gt.f32.partialorder %v1804, 0.0
          %vm1821 = vcmp.gt.f32.partialorder %v1805, 0.0
          %vm1822 = vcmp.gt.f32.partialorder %v1806, 0.0
          %vm1823 = vcmp.gt.f32.partialorder %v1807, 0.0
          %vm1824 = vcmp.gt.f32.partialorder %v1808, 0.0
          %v1825 = vsel %vm1809, %v1793, 1.0
          %v1826 = vsel %vm1810, %v1794, 1.0
          %v1827 = vsel %vm1811, %v1795, 1.0
          %v1828 = vsel %vm1812, %v1796, 1.0
          %v1829 = vsel %vm1813, %v1797, 1.0
          %v1830 = vsel %vm1814, %v1798, 1.0
          %v1831 = vsel %vm1815, %v1799, 1.0
          %v1832 = vsel %vm1816, %v1800, 1.0
          %v1833 = vsel %vm1817, %v1801, 1.0
          %v1834 = vsel %vm1818, %v1802, 1.0
          %v1835 = vsel %vm1819, %v1803, 1.0
          %v1836 = vsel %vm1820, %v1804, 1.0
          %v1837 = vsel %vm1821, %v1805, 1.0
          %v1838 = vsel %vm1822, %v1806, 1.0
          %v1839 = vsel %vm1823, %v1807, 1.0
          %v1840 = vsel %vm1824, %v1808, 1.0
          %v1841 = vld [vmem:[#allocation2] sm:$0xff]
          %v1842 = vld [vmem:[#allocation2 + $0x8] sm:$0xff]
          %v1843 = vld [vmem:[#allocation2 + $0x10] sm:$0xff]
          %v1844 = vld [vmem:[#allocation2 + $0x18] sm:$0xff]
          %v1845 = vld [vmem:[#allocation2 + $0x20] sm:$0xff]
          %v1846 = vld [vmem:[#allocation2 + $0x28] sm:$0xff]
          %v1847 = vld [vmem:[#allocation2 + $0x30] sm:$0xff]
          %v1848 = vld [vmem:[#allocation2 + $0x38] sm:$0xff]
          %v1849 = vld [vmem:[#allocation2 + $0x40] sm:$0xff]
          %v1850 = vld [vmem:[#allocation2 + $0x48] sm:$0xff]
          %v1851 = vld [vmem:[#allocation2 + $0x50] sm:$0xff]
          %v1852 = vld [vmem:[#allocation2 + $0x58] sm:$0xff]
          %v1853 = vld [vmem:[#allocation2 + $0x60] sm:$0xff]
          %v1854 = vld [vmem:[#allocation2 + $0x68] sm:$0xff]
          %v1855 = vld [vmem:[#allocation2 + $0x70] sm:$0xff]
          %v1856 = vld [vmem:[#allocation2 + $0x78] sm:$0xff]
          %1858 = vset.pattern.permute.xlu0 0
          %1859 = vperm.xlu0 %1858, %v1825
          %v1860 = vpop.permute.xlu0 %1859
          %1863 = vset.pattern.permute.xlu0 0
          %1864 = vperm.xlu0 %1863, %v1826
          %v1865 = vpop.permute.xlu0 %1864
          %1868 = vset.pattern.permute.xlu0 0
          %1869 = vperm.xlu0 %1868, %v1827
          %v1870 = vpop.permute.xlu0 %1869
          %1873 = vset.pattern.permute.xlu0 0
          %1874 = vperm.xlu0 %1873, %v1828
          %v1875 = vpop.permute.xlu0 %1874
          %1878 = vset.pattern.permute.xlu0 0
          %1879 = vperm.xlu0 %1878, %v1829
          %v1880 = vpop.permute.xlu0 %1879
          %1883 = vset.pattern.permute.xlu0 0
          %1884 = vperm.xlu0 %1883, %v1830
          %v1885 = vpop.permute.xlu0 %1884
          %1888 = vset.pattern.permute.xlu0 0
          %1889 = vperm.xlu0 %1888, %v1831
          %v1890 = vpop.permute.xlu0 %1889
          %1893 = vset.pattern.permute.xlu0 0
          %1894 = vperm.xlu0 %1893, %v1832
          %v1895 = vpop.permute.xlu0 %1894
          %1898 = vset.pattern.permute.xlu0 0
          %1899 = vperm.xlu0 %1898, %v1833
          %v1900 = vpop.permute.xlu0 %1899
          %1903 = vset.pattern.permute.xlu0 0
          %1904 = vperm.xlu0 %1903, %v1834
          %v1905 = vpop.permute.xlu0 %1904
          %1908 = vset.pattern.permute.xlu0 0
          %1909 = vperm.xlu0 %1908, %v1835
          %v1910 = vpop.permute.xlu0 %1909
          %1913 = vset.pattern.permute.xlu0 0
          %1914 = vperm.xlu0 %1913, %v1836
          %v1915 = vpop.permute.xlu0 %1914
          %1918 = vset.pattern.permute.xlu0 0
          %1919 = vperm.xlu0 %1918, %v1837
          %v1920 = vpop.permute.xlu0 %1919
          %1923 = vset.pattern.permute.xlu0 0
          %1924 = vperm.xlu0 %1923, %v1838
          %v1925 = vpop.permute.xlu0 %1924
          %1928 = vset.pattern.permute.xlu0 0
          %1929 = vperm.xlu0 %1928, %v1839
          %v1930 = vpop.permute.xlu0 %1929
          %1933 = vset.pattern.permute.xlu0 0
          %1934 = vperm.xlu0 %1933, %v1840
          %v1935 = vpop.permute.xlu0 %1934
          %v1937 = vrcp.pop %v1860
          %v1938 = vmul.f32 %v1841, %v1937
          %v1939 = vrcp.pop %v1865
          %v1940 = vmul.f32 %v1842, %v1939
          %v1941 = vrcp.pop %v1870
          %v1942 = vmul.f32 %v1843, %v1941
          %v1943 = vrcp.pop %v1875
          %v1944 = vmul.f32 %v1844, %v1943
          %v1945 = vrcp.pop %v1880
          %v1946 = vmul.f32 %v1845, %v1945
          %v1947 = vrcp.pop %v1885
          %v1948 = vmul.f32 %v1846, %v1947
          %v1949 = vrcp.pop %v1890
          %v1950 = vmul.f32 %v1847, %v1949
          %v1951 = vrcp.pop %v1895
          %v1952 = vmul.f32 %v1848, %v1951
          %v1953 = vrcp.pop %v1900
          %v1954 = vmul.f32 %v1849, %v1953
          %v1955 = vrcp.pop %v1905
          %v1956 = vmul.f32 %v1850, %v1955
          %v1957 = vrcp.pop %v1910
          %v1958 = vmul.f32 %v1851, %v1957
          %v1959 = vrcp.pop %v1915
          %v1960 = vmul.f32 %v1852, %v1959
          %v1961 = vrcp.pop %v1920
          %v1962 = vmul.f32 %v1853, %v1961
          %v1963 = vrcp.pop %v1925
          %v1964 = vmul.f32 %v1854, %v1963
          %v1965 = vrcp.pop %v1930
          %v1966 = vmul.f32 %v1855, %v1965
          %v1967 = vrcp.pop %v1935
          %v1968 = vmul.f32 %v1856, %v1967
          %v1969 = vsel %vm1809, 1, 0
          %v1970 = vsel %vm1810, 1, 0
          %v1971 = vsel %vm1811, 1, 0
          %v1972 = vsel %vm1812, 1, 0
          %v1973 = vsel %vm1813, 1, 0
          %v1974 = vsel %vm1814, 1, 0
          %v1975 = vsel %vm1815, 1, 0
          %v1976 = vsel %vm1816, 1, 0
          %v1977 = vsel %vm1817, 1, 0
          %v1978 = vsel %vm1818, 1, 0
          %v1979 = vsel %vm1819, 1, 0
          %v1980 = vsel %vm1820, 1, 0
          %v1981 = vsel %vm1821, 1, 0
          %v1982 = vsel %vm1822, 1, 0
          %v1983 = vsel %vm1823, 1, 0
          %v1984 = vsel %vm1824, 1, 0
          %1985 = vset.pattern.permute.xlu0 0
          %1986 = vperm.xlu0 %1985, %v1969
          %v1987 = vpop.permute.xlu0 %1986
          %1988 = vset.pattern.permute.xlu0 0
          %1989 = vperm.xlu0 %1988, %v1970
          %v1990 = vpop.permute.xlu0 %1989
          %1991 = vset.pattern.permute.xlu0 0
          %1992 = vperm.xlu0 %1991, %v1971
          %v1993 = vpop.permute.xlu0 %1992
          %1994 = vset.pattern.permute.xlu0 0
          %1995 = vperm.xlu0 %1994, %v1972
          %v1996 = vpop.permute.xlu0 %1995
          %1997 = vset.pattern.permute.xlu0 0
          %1998 = vperm.xlu0 %1997, %v1973
          %v1999 = vpop.permute.xlu0 %1998
          %2000 = vset.pattern.permute.xlu0 0
          %2001 = vperm.xlu0 %2000, %v1974
          %v2002 = vpop.permute.xlu0 %2001
          %2003 = vset.pattern.permute.xlu0 0
          %2004 = vperm.xlu0 %2003, %v1975
          %v2005 = vpop.permute.xlu0 %2004
          %2006 = vset.pattern.permute.xlu0 0
          %2007 = vperm.xlu0 %2006, %v1976
          %v2008 = vpop.permute.xlu0 %2007
          %2009 = vset.pattern.permute.xlu0 0
          %2010 = vperm.xlu0 %2009, %v1977
          %v2011 = vpop.permute.xlu0 %2010
          %2012 = vset.pattern.permute.xlu0 0
          %2013 = vperm.xlu0 %2012, %v1978
          %v2014 = vpop.permute.xlu0 %2013
          %2015 = vset.pattern.permute.xlu0 0
          %2016 = vperm.xlu0 %2015, %v1979
          %v2017 = vpop.permute.xlu0 %2016
          %2018 = vset.pattern.permute.xlu0 0
          %2019 = vperm.xlu0 %2018, %v1980
          %v2020 = vpop.permute.xlu0 %2019
          %2021 = vset.pattern.permute.xlu0 0
          %2022 = vperm.xlu0 %2021, %v1981
          %v2023 = vpop.permute.xlu0 %2022
          %2024 = vset.pattern.permute.xlu0 0
          %2025 = vperm.xlu0 %2024, %v1982
          %v2026 = vpop.permute.xlu0 %2025
          %2027 = vset.pattern.permute.xlu0 0
          %2028 = vperm.xlu0 %2027, %v1983
          %v2029 = vpop.permute.xlu0 %2028
          %2030 = vset.pattern.permute.xlu0 0
          %2031 = vperm.xlu0 %2030, %v1984
          %v2032 = vpop.permute.xlu0 %2031
          %vm2033 = vcmp.eq.s32.totalorder %v1987, 1
          %vm2034 = vcmp.eq.s32.totalorder %v1990, 1
          %vm2035 = vcmp.eq.s32.totalorder %v1993, 1
          %vm2036 = vcmp.eq.s32.totalorder %v1996, 1
          %vm2037 = vcmp.eq.s32.totalorder %v1999, 1
          %vm2038 = vcmp.eq.s32.totalorder %v2002, 1
          %vm2039 = vcmp.eq.s32.totalorder %v2005, 1
          %vm2040 = vcmp.eq.s32.totalorder %v2008, 1
          %vm2041 = vcmp.eq.s32.totalorder %v2011, 1
          %vm2042 = vcmp.eq.s32.totalorder %v2014, 1
          %vm2043 = vcmp.eq.s32.totalorder %v2017, 1
          %vm2044 = vcmp.eq.s32.totalorder %v2020, 1
          %vm2045 = vcmp.eq.s32.totalorder %v2023, 1
          %vm2046 = vcmp.eq.s32.totalorder %v2026, 1
          %vm2047 = vcmp.eq.s32.totalorder %v2029, 1
          %vm2048 = vcmp.eq.s32.totalorder %v2032, 1
          %v2049 = vsel %vm2033, %v1938, %v1841
          %v2050 = vsel %vm2034, %v1940, %v1842
          %v2051 = vsel %vm2035, %v1942, %v1843
          %v2052 = vsel %vm2036, %v1944, %v1844
          %v2053 = vsel %vm2037, %v1946, %v1845
          %v2054 = vsel %vm2038, %v1948, %v1846
          %v2055 = vsel %vm2039, %v1950, %v1847
          %v2056 = vsel %vm2040, %v1952, %v1848
          %v2057 = vsel %vm2041, %v1954, %v1849
          %v2058 = vsel %vm2042, %v1956, %v1850
          %v2059 = vsel %vm2043, %v1958, %v1851
          %v2060 = vsel %vm2044, %v1960, %v1852
          %v2061 = vsel %vm2045, %v1962, %v1853
          %v2062 = vsel %vm2046, %v1964, %v1854
          %v2063 = vsel %vm2047, %v1966, %v1855
          %v2064 = vsel %vm2048, %v1968, %v1856
          %v2065 = vpack.c.bf16 %v2050, %v2049
          %v2066 = vpack.c.bf16 %v2052, %v2051
          %v2067 = vpack.c.bf16 %v2054, %v2053
          %v2068 = vpack.c.bf16 %v2056, %v2055
          %v2069 = vpack.c.bf16 %v2058, %v2057
          %v2070 = vpack.c.bf16 %v2060, %v2059
          %v2071 = vpack.c.bf16 %v2062, %v2061
          %v2072 = vpack.c.bf16 %v2064, %v2063
          %v2073 = vld [vmem:[%s6] sm:$0xf]
          %v2074 = vld [vmem:[%s6 + $0x4] sm:$0xf]
          %v2075 = vld [vmem:[%s6 + $0x8] sm:$0xf]
          %v2076 = vld [vmem:[%s6 + $0xc] sm:$0xf]
          %v2077 = vld [vmem:[%s7] sm:$0x1]
          %v2079 = vlaneseq
          %v2080 = vshrl.u32 %v2079, 7
          %v2081 = vsub.s32 0, %v2080
          %v2082 = vrot.slane %v2077, %v2081
          %v2088 = vunpack.c.l.b16 %v2073
          %v2089 = vunpack.c.l.b16 %v2074
          %v2090 = vunpack.c.l.b16 %v2075
          %v2091 = vunpack.c.l.b16 %v2076
          %v2092 = vpack.c.b16 %v2089, %v2088
          %v2093 = vpack.c.b16 %v2091, %v2090
          %v2097 = vsel %vm588, %v2065, 0
          %v2100 = vsel %vm588, %v2066, 0
          %v2103 = vsel %vm588, %v2067, 0
          %v2106 = vsel %vm588, %v2068, 0
          %v2109 = vsel %vm588, %v2069, 0
          %v2112 = vsel %vm588, %v2070, 0
          %v2115 = vsel %vm588, %v2071, 0
          %v2118 = vsel %vm588, %v2072, 0
          %2120 = vmatprep.subr.bf16.mxu0 0
          %2121 = vmatpush1.bf16.msra.mxu0 %v2092
          %2122 = vmatprep.subr.bf16.mxu0 0
          %2123 = vmatpush1.bf16.msra.mxu0 %v2093
          %2124 = vmatprep.subr.bf16.mxu0 0
          %2125 = vmatpush1.bf16.msra.mxu0 0
          %2126 = vmatprep.subr.bf16.mxu0 0
          %2127 = vmatpush1.bf16.msra.mxu0 0
          %2128 = vmatprep.subr.bf16.mxu0 0
          %2129 = vmatpush1.bf16.msra.mxu0 0
          %2130 = vmatprep.subr.bf16.mxu0 0
          %2131 = vmatpush1.bf16.msra.mxu0 0
          %2132 = vmatprep.subr.bf16.mxu0 0
          %2133 = vmatpush1.bf16.msra.mxu0 0
          %2134 = vmatprep.subr.bf16.mxu0 0
          %2135 = vmatpush1.bf16.msra.mxu0 0
          %2136 = vmatprep.subr.bf16.mxu0 0
          %2137 = vmatpush1.bf16.msra.mxu0 0
          %2138 = vmatprep.subr.bf16.mxu0 0
          %2139 = vmatpush1.bf16.msra.mxu0 0
          %2140 = vmatprep.subr.bf16.mxu0 0
          %2141 = vmatpush1.bf16.msra.mxu0 0
          %2142 = vmatprep.subr.bf16.mxu0 0
          %2143 = vmatpush1.bf16.msra.mxu0 0
          %2144 = vmatprep.subr.bf16.mxu0 0
          %2145 = vmatpush1.bf16.msra.mxu0 0
          %2146 = vmatprep.subr.bf16.mxu0 0
          %2147 = vmatpush1.bf16.msra.mxu0 0
          %2148 = vmatprep.subr.bf16.mxu0 0
          %2149 = vmatpush1.bf16.msra.mxu0 0
          %2150 = vmatprep.subr.bf16.mxu0 0
          %2151 = vmatpush1.bf16.msra.mxu0 0
          %2152 = vmatprep.mubr.bf16.mxu0 0
          %2153 = vmatmul.mubr.bf16.gmra.mrb[0].mxu0 %v2097
          %v2154 = vpop.f32.mrb[0].mxu0
          %v2155 = vadd.f32 %v2082, %v2154
          %v2156 = vpop.f32.mrb[0].mxu0
          %v2157 = vpop.f32.mrb[0].mxu0
          %v2158 = vadd.f32 %v2082, %v2157
          %v2159 = vpop.f32.mrb[0].mxu0
          %2160 = vmatprep.mubr.bf16.mxu0 0
          %2161 = vmatmul.mubr.bf16.gmra.mrb[0].mxu0 %v2100
          %v2162 = vpop.f32.mrb[0].mxu0
          %v2163 = vadd.f32 %v2082, %v2162
          %v2164 = vpop.f32.mrb[0].mxu0
          %v2165 = vpop.f32.mrb[0].mxu0
          %v2166 = vadd.f32 %v2082, %v2165
          %v2167 = vpop.f32.mrb[0].mxu0
          %2168 = vmatprep.mubr.bf16.mxu0 0
          %2169 = vmatmul.mubr.bf16.gmra.mrb[0].mxu0 %v2103
          %v2170 = vpop.f32.mrb[0].mxu0
          %v2171 = vadd.f32 %v2082, %v2170
          %v2172 = vpop.f32.mrb[0].mxu0
          %v2173 = vpop.f32.mrb[0].mxu0
          %v2174 = vadd.f32 %v2082, %v2173
          %v2175 = vpop.f32.mrb[0].mxu0
          %2176 = vmatprep.mubr.bf16.mxu0 0
          %2177 = vmatmul.mubr.bf16.gmra.mrb[0].mxu0 %v2106
          %v2178 = vpop.f32.mrb[0].mxu0
          %v2179 = vadd.f32 %v2082, %v2178
          %v2180 = vpop.f32.mrb[0].mxu0
          %v2181 = vpop.f32.mrb[0].mxu0
          %v2182 = vadd.f32 %v2082, %v2181
          %v2183 = vpop.f32.mrb[0].mxu0
          %2184 = vmatprep.mubr.bf16.mxu0 0
          %2185 = vmatmul.mubr.bf16.gmra.mrb[0].mxu0 %v2109
          %v2186 = vpop.f32.mrb[0].mxu0
          %v2187 = vadd.f32 %v2082, %v2186
          %v2188 = vpop.f32.mrb[0].mxu0
          %v2189 = vpop.f32.mrb[0].mxu0
          %v2190 = vadd.f32 %v2082, %v2189
          %v2191 = vpop.f32.mrb[0].mxu0
          %2192 = vmatprep.mubr.bf16.mxu0 0
          %2193 = vmatmul.mubr.bf16.gmra.mrb[0].mxu0 %v2112
          %v2194 = vpop.f32.mrb[0].mxu0
          %v2195 = vadd.f32 %v2082, %v2194
          %v2196 = vpop.f32.mrb[0].mxu0
          %v2197 = vpop.f32.mrb[0].mxu0
          %v2198 = vadd.f32 %v2082, %v2197
          %v2199 = vpop.f32.mrb[0].mxu0
          %2200 = vmatprep.mubr.bf16.mxu0 0
          %2201 = vmatmul.mubr.bf16.gmra.mrb[0].mxu0 %v2115
          %v2202 = vpop.f32.mrb[0].mxu0
          %v2203 = vadd.f32 %v2082, %v2202
          %v2204 = vpop.f32.mrb[0].mxu0
          %v2205 = vpop.f32.mrb[0].mxu0
          %v2206 = vadd.f32 %v2082, %v2205
          %v2207 = vpop.f32.mrb[0].mxu0
          %2208 = vmatprep.mubr.bf16.mxu0 0
          %2209 = vmatmul.mubr.bf16.gmra.mrb[0].mxu0 %v2118
          %v2210 = vpop.f32.mrb[0].mxu0
          %v2211 = vadd.f32 %v2082, %v2210
          %v2212 = vpop.f32.mrb[0].mxu0
          %v2213 = vpop.f32.mrb[0].mxu0
          %v2214 = vadd.f32 %v2082, %v2213
          %v2215 = vpop.f32.mrb[0].mxu0
          %2216 = vdwg.mxu0
          %2217 = vst.msk [vmem:[%s475] sm:$0xff] %vm588, %v2155
          %2218 = vst.msk [vmem:[%s475 + $0x8] sm:$0xff] %vm588, %v2158
          %2219 = vst.msk [vmem:[%s475 + $0x10] sm:$0xff] %vm588, %v2163
          %2220 = vst.msk [vmem:[%s475 + $0x18] sm:$0xff] %vm588, %v2166
          %2221 = vst.msk [vmem:[%s475 + $0x20] sm:$0xff] %vm588, %v2171
          %2222 = vst.msk [vmem:[%s475 + $0x28] sm:$0xff] %vm588, %v2174
          %2223 = vst.msk [vmem:[%s475 + $0x30] sm:$0xff] %vm588, %v2179
          %2224 = vst.msk [vmem:[%s475 + $0x38] sm:$0xff] %vm588, %v2182
          %2225 = vst.msk [vmem:[%s475 + $0x40] sm:$0xff] %vm588, %v2187
          %2226 = vst.msk [vmem:[%s475 + $0x48] sm:$0xff] %vm588, %v2190
          %2227 = vst.msk [vmem:[%s475 + $0x50] sm:$0xff] %vm588, %v2195
          %2228 = vst.msk [vmem:[%s475 + $0x58] sm:$0xff] %vm588, %v2198
          %2229 = vst.msk [vmem:[%s475 + $0x60] sm:$0xff] %vm588, %v2203
          %2230 = vst.msk [vmem:[%s475 + $0x68] sm:$0xff] %vm588, %v2206
          %2231 = vst.msk [vmem:[%s475 + $0x70] sm:$0xff] %vm588, %v2211
          %2232 = vst.msk [vmem:[%s475 + $0x78] sm:$0xff] %vm588, %v2214
        $region101: #{graph_transformer_layer.4} parent=88 // pred_fallthru
          _
        %s2233 = smul.u32 16, %s23
        %p2234 = scmp.lt.s32.totalorder %s2233, 47
        %s2235 = scalar_select %p2234, %s2233, 47
        %s2236 = smul.addr %s2235, 8
        %s2237 = scalar_lea.vmem %s8, %s2236
        // Predicated region
        $region102: #{graph_transformer_layer.4} parent=88 // pred_check
          %p2238 = pneg %p247
        $region103: #{graph_transformer_layer.4} parent=88 // pred_check_branch
          %2240 = sbr.rel (%p2238) target = $region105
        $region104: #{graph_transformer_layer.4} parent=88 // pred_region
          %s2241 = smul.u32 16, %s23
        $region105: #{graph_transformer_layer.4} parent=88 // pred_fallthru
          _
      $region89: #{graph_transformer_layer.4} parent=5 // pred_fallthru
        _
      %p2242 = scmp.le.s32.totalorder 2, %s14
      // Predicated region
      $region106: #{graph_transformer_layer.4} parent=5 // pred_check
        %p2243 = pneg %p2242
      $region107: #{graph_transformer_layer.4} parent=5 // pred_check_branch
        %2245 = sbr.rel (%p2243) target = $region109
      $region108: #{graph_transformer_layer.4} parent=5 // pred_region
        %s2246 = ssub.s32 %s14, 2
        // Predicated region
        $region110: #{graph_transformer_layer.4} parent=108 // pred_check
          %p2247 = pneg %p253
        $region111: #{graph_transformer_layer.4} parent=108 // pred_check_branch
          %2249 = sbr.rel (%p2247) target = $region113
        $region112: #{graph_transformer_layer.4} parent=108 // pred_region
          %s2250 = smul.u32 16, %s25
          %p2251 = scmp.lt.s32.totalorder %s2250, 47
          %s2252 = scalar_select %p2251, %s2250, 47
          %s2253 = smul.addr %s2252, 8
          %s2254 = scalar_lea.vmem %s8, %s2253
        $region113: #{graph_transformer_layer.4} parent=108 // pred_fallthru
          _
      $region109: #{graph_transformer_layer.4} parent=5 // pred_fallthru
        _
    $region6: #{graph_transformer_layer.4} parent=1 // loop_footer
      %s18 = sadd.s32 1, %s14
    $region7: #{graph_transformer_layer.4} parent=1 // loop_footer_branch
      %13 = sbr.rel target = $region3
    $region8: #{graph_transformer_layer.4} parent=1 // loop_exit
      _

</llo_original>
